<compile_context>
chip_gen: v7x
topology: tpu7x:2x2x1
jax: 0.10.0
libtpu: 0.0.40
codegen_flags: <defaults>
</compile_context>

<pallas_src>
import jax
import jax.numpy as jnp
from jax.experimental import pallas as pl
from jax.experimental.pallas import tpu as pltpu


def _round_up(x, m):
    return ((x + m - 1) // m) * m


# ---------------------------------------------------------------------------
# Fused kernel: 3x3 conv + ReLU + avg-pool(1,1) + Linear + ReLU + Linear
# ---------------------------------------------------------------------------
def _fused_forward_kernel(x_ref, wc_ref, bc_ref, w1_ref, b1_ref, w2_ref, b2_ref,
                          out_ref, hid_ref):
    # x_ref   : (B, Cin, H+2, W+2) VMEM  pre-padded (zero-halo) batch block, W on lanes
    # wc_ref  : (Cf, 9*Cin)        SMEM  conv weights, read as scalars (hoisted)
    # bc_ref  : (Cf,)              SMEM  conv bias
    # w1_ref  : (Cf, HIDP)         VMEM  hidden-layer weight, zero-padded to 128 lanes
    # b1_ref  : (1, HIDP)          VMEM
    # w2_ref  : (HIDP, OUTP)       VMEM  output-layer weight, zero-padded
    # b2_ref  : (1, OUTP)          VMEM
    # out_ref : (1, B, OUTP)       VMEM  lane-dense padded outputs
    # hid_ref : (1, B, HIDP)       VMEM
    bsz, cin, hp, wp = x_ref.shape
    h, w = hp - 2, wp - 2
    cf, hidp = w1_ref.shape
    n_taps = 9 * cin
    inv_hw = 1.0 / float(h * w)

    # Row tile: keep the Cf per-channel accumulators at ~1-2 vregs each (rt x W).
    rt = 8 if (h % 8 == 0) else h
    n_tiles = h // rt

    # Hoist all SMEM scalar reads out of the spatial / batch loops.
    wcs = [[wc_ref[co, k] for k in range(n_taps)] for co in range(cf)]
    bcs = [bc_ref[co] for co in range(cf)]

    hid_rows = []
    for b in range(bsz):
        pooled = [jnp.zeros((1, 1), jnp.float32) for _ in range(cf)]
        for t in range(n_tiles):
            r0 = t * rt
            # Per-channel accumulators live in vregs for the whole tap loop.
            accs = [jnp.zeros((rt, w), jnp.float32) for _ in range(cf)]
            k = 0
            for dy in range(3):
                for dx in range(3):
                    for ci in range(cin):
                        # One shifted tap slice, reused by all Cf output channels.
                        tap = x_ref[b, ci, r0 + dy:r0 + dy + rt, dx:dx + w]
                        for co in range(cf):
                            accs[co] = accs[co] + wcs[co][k] * tap
                        k += 1
            for co in range(cf):
                plane = jnp.maximum(accs[co] + bcs[co], 0.0)      # conv bias + ReLU
                psum = jnp.sum(jnp.sum(plane, axis=1, keepdims=True),
                               axis=0, keepdims=True)             # (1, 1)
                pooled[co] = pooled[co] + psum

        # Global average pool folded straight into the first Linear:
        # each channel's pooled mean scales one row of W1 (no transposes).
        hid_acc = b1_ref[...]                                     # (1, HIDP)
        for co in range(cf):
            hid_acc = hid_acc + (pooled[co] * inv_hw) * w1_ref[co:co + 1, :]
        hid_rows.append(jnp.maximum(hid_acc, 0.0))                # hidden ReLU
        # hidden_dropout == 0.0 -> the dropout branch of the torch forward is skipped.

    hid_mat = hid_rows[0] if bsz == 1 else jnp.concatenate(hid_rows, axis=0)  # (B, HIDP)
    hid_ref[0] = hid_mat

    # Output layer: one (B, HIDP) @ (HIDP, OUTP) MXU matmul per batch block.
    m_pad = _round_up(bsz, 8)
    if m_pad != bsz:
        hid_mm = jnp.concatenate(
            [hid_mat, jnp.zeros((m_pad - bsz, hidp), jnp.float32)], axis=0)
    else:
        hid_mm = hid_mat
    om = jnp.dot(hid_mm, w2_ref[...], preferred_element_type=jnp.float32)
    out_ref[0] = om[:bsz, :] + b2_ref[...]


# ---------------------------------------------------------------------------
# Wrapper (layout plumbing only: padding, weight flattening, slicing)
# ---------------------------------------------------------------------------
@jax.jit
def easy_model_forward(x_nchw, params):
    n, cin, h, w = x_nchw.shape
    conv_w = params["conv_w"]                       # (3, 3, Cin, Cf)  HWIO
    cf = conv_w.shape[-1]
    hidden_units = params["w1"].shape[-1]
    output_units = params["w2"].shape[-1]
    hidp = _round_up(hidden_units, 128)
    outp = _round_up(output_units, 128)

    # Batch blocking: B samples per grid step, grid stays >= 2 (v7x megacore split).
    bsz = max(1, min(8, n // 2))
    n_blocks = -(-n // bsz)
    n_pad = n_blocks * bsz

    # One XLA pad: zero batch tail + 1-pixel spatial halo for the "same" conv.
    hp_, wp_ = h + 2, w + 2
    xp = jnp.pad(x_nchw, ((0, n_pad - n), (0, 0), (1, 1), (1, 1)))

    # conv weights -> (Cf, 9*Cin) with column order (dy, dx, ci) matching the kernel.
    wc = jnp.transpose(conv_w, (3, 0, 1, 2)).reshape(cf, 9 * cin)
    bc = params["conv_b"]
    # Linear weights / biases zero-padded to lane-dense 128-wide slabs.
    w1p = jnp.zeros((cf, hidp), jnp.float32).at[:, :hidden_units].set(params["w1"])
    b1p = jnp.zeros((1, hidp), jnp.float32).at[0, :hidden_units].set(params["b1"])
    w2p = jnp.zeros((hidp, outp), jnp.float32).at[:hidden_units, :output_units].set(params["w2"])
    b2p = jnp.zeros((1, outp), jnp.float32).at[0, :output_units].set(params["b2"])

    # Right-sized VMEM request: double-buffered per-step blocks + resident weights,
    # with ~2x headroom (safe under v7x's 64 MiB / 32 MiB scoped default).
    block_bytes = 4 * (bsz * cin * hp_ * wp_ + bsz * (hidp + outp))
    weight_bytes = 4 * (cf * hidp + hidp + hidp * outp + outp)
    vmem_limit = int(min(64 * 2**20, max(4 * 2**20, 4 * (block_bytes + weight_bytes))))

    flops = n_pad * (2 * h * w * 9 * cin * cf + 2 * cf * hidden_units
                     + 2 * hidden_units * output_units)
    bytes_accessed = 4 * (xp.size + wc.size + bc.size + w1p.size + b1p.size
                          + w2p.size + b2p.size + n_pad * (hidp + outp))

    out_pad, hid_pad = pl.pallas_call(
        _fused_forward_kernel,
        out_shape=(jax.ShapeDtypeStruct((n_blocks, bsz, outp), jnp.float32),
                   jax.ShapeDtypeStruct((n_blocks, bsz, hidp), jnp.float32)),
        grid=(n_blocks,),
        in_specs=[
            pl.BlockSpec((bsz, cin, hp_, wp_), lambda i: (i, 0, 0, 0)),    # pre-padded x
            pl.BlockSpec(memory_space=pltpu.MemorySpace.SMEM),             # conv weights
            pl.BlockSpec(memory_space=pltpu.MemorySpace.SMEM),             # conv bias
            pl.BlockSpec((cf, hidp), lambda i: (0, 0)),                    # W1 (padded)
            pl.BlockSpec((1, hidp), lambda i: (0, 0)),                     # b1 (padded)
            pl.BlockSpec((hidp, outp), lambda i: (0, 0)),                  # W2 (padded)
            pl.BlockSpec((1, outp), lambda i: (0, 0)),                     # b2 (padded)
        ],
        out_specs=(pl.BlockSpec((1, bsz, outp), lambda i: (i, 0, 0)),
                   pl.BlockSpec((1, bsz, hidp), lambda i: (i, 0, 0))),
        compiler_params=pltpu.CompilerParams(
            dimension_semantics=("parallel",),
            vmem_limit_bytes=vmem_limit),
        cost_estimate=pl.CostEstimate(flops=flops, transcendentals=0,
                                      bytes_accessed=bytes_accessed),
    )(xp, wc, bc, w1p, b1p, w2p, b2p)

    outputs = out_pad.reshape(n_pad, outp)[:n, :output_units]
    hidden = hid_pad.reshape(n_pad, hidp)[:n, :hidden_units]
    return outputs, hidden


# ---------------------------------------------------------------------------
# Params + pure-JAX reference
# ---------------------------------------------------------------------------
def init_params(key, c_in, c_feat, hidden_units, output_units):
    ks = jax.random.split(key, 6)
    return {
        "conv_w": jax.random.normal(ks[0], (3, 3, c_in, c_feat), jnp.float32) * 0.1,
        "conv_b": jax.random.normal(ks[1], (c_feat,), jnp.float32) * 0.1,
        "w1": jax.random.normal(ks[2], (c_feat, hidden_units), jnp.float32) * 0.1,
        "b1": jax.random.normal(ks[3], (hidden_units,), jnp.float32) * 0.1,
        "w2": jax.random.normal(ks[4], (hidden_units, output_units), jnp.float32) * 0.1,
        "b2": jax.random.normal(ks[5], (output_units,), jnp.float32) * 0.1,
    }


def reference_forward(x_nchw, params):
    x = jnp.transpose(x_nchw, (0, 2, 3, 1))
    feats = jax.lax.conv_general_dilated(
        x, params["conv_w"], window_strides=(1, 1), padding="SAME",
        dimension_numbers=("NHWC", "HWIO", "NHWC")) + params["conv_b"]
    feats = jnp.maximum(feats, 0.0)
    pooled = jnp.mean(feats, axis=(1, 2))
    h = jnp.maximum(pooled @ params["w1"] + params["b1"], 0.0)
    out = h @ params["w2"] + params["b2"]
    return out, h


if __name__ == "__main__":
    # Small shapes: batch=2, in_channels=3, spatial=16x16 (module default is 3x128x128)
    N, C_IN, HW = 2, 3, 16
    C_FEAT, HIDDEN_UNITS, OUTPUT_UNITS = 8, 32, 10
    HIDDEN_DROPOUT = 0.0  # dropout branch skipped (matches `if hidden_dropout > 0`)

    key = jax.random.PRNGKey(0)
    kx, kp = jax.random.split(key)
    x = jax.random.normal(kx, (N, C_IN, HW, HW), jnp.float32)       # NCHW, as in torch
    params = init_params(kp, C_IN, C_FEAT, HIDDEN_UNITS, OUTPUT_UNITS)

    outputs, hidden = jax.block_until_ready(easy_model_forward(x, params))
    ref_out, ref_hid = reference_forward(x, params)

    assert outputs.shape == (N, OUTPUT_UNITS) and hidden.shape == (N, HIDDEN_UNITS)
    assert jnp.allclose(outputs, ref_out, atol=1e-4, rtol=1e-4)
    assert jnp.allclose(hidden, ref_hid, atol=1e-4, rtol=1e-4)
    print("KERNEL_OK")
</pallas_src>

<mosaic_0001>
module attributes {stable_mosaic.version = 11 : i64} {
  func.func @_fused_forward_kernel(%arg0: i32, %arg1: memref<1x3x18x18xf32, #tpu.memory_space<vmem>>, %arg2: memref<8x27xf32, #tpu.memory_space<smem>>, %arg3: memref<8xf32, #tpu.memory_space<smem>>, %arg4: memref<8x128xf32, #tpu.memory_space<vmem>>, %arg5: memref<1x128xf32, #tpu.memory_space<vmem>>, %arg6: memref<128x128xf32, #tpu.memory_space<vmem>>, %arg7: memref<1x128xf32, #tpu.memory_space<vmem>>, %arg8: memref<1x1x128xf32, #tpu.memory_space<vmem>>, %arg9: memref<1x1x128xf32, #tpu.memory_space<vmem>>) attributes {dimension_semantics = [#tpu.dimension_semantics<parallel>], iteration_bounds = array<i64: 2>, scalar_prefetch = 0 : i64, scratch_operands = 0 : i64, tpu.core_type = #tpu.core_type<tc>, window_params = [{transform_indices = @transform_0, window_bounds = array<i64: 1, 3, 18, 18>}, {transform_indices = @transform_1, window_bounds = array<i64: 8, 27>}, {transform_indices = @transform_2, window_bounds = array<i64: 8>}, {pipeline_mode = #tpu.pipeline_mode<synchronous>, transform_indices = @transform_3, window_bounds = array<i64: 8, 128>}, {pipeline_mode = #tpu.pipeline_mode<synchronous>, transform_indices = @transform_4, window_bounds = array<i64: 1, 128>}, {pipeline_mode = #tpu.pipeline_mode<synchronous>, transform_indices = @transform_5, window_bounds = array<i64: 128, 128>}, {pipeline_mode = #tpu.pipeline_mode<synchronous>, transform_indices = @transform_6, window_bounds = array<i64: 1, 128>}, {transform_indices = @transform_7, window_bounds = array<i64: 1, 1, 128>}, {transform_indices = @transform_8, window_bounds = array<i64: 1, 1, 128>}]} {
    %c0 = arith.constant 0 : index
    %c0_0 = arith.constant 0 : index
    %0 = memref.load %arg2[%c0, %c0_0] : memref<8x27xf32, #tpu.memory_space<smem>>
    %c0_1 = arith.constant 0 : index
    %c1 = arith.constant 1 : index
    %1 = memref.load %arg2[%c0_1, %c1] : memref<8x27xf32, #tpu.memory_space<smem>>
    %c0_2 = arith.constant 0 : index
    %c2 = arith.constant 2 : index
    %2 = memref.load %arg2[%c0_2, %c2] : memref<8x27xf32, #tpu.memory_space<smem>>
    %c0_3 = arith.constant 0 : index
    %c3 = arith.constant 3 : index
    %3 = memref.load %arg2[%c0_3, %c3] : memref<8x27xf32, #tpu.memory_space<smem>>
    %c0_4 = arith.constant 0 : index
    %c4 = arith.constant 4 : index
    %4 = memref.load %arg2[%c0_4, %c4] : memref<8x27xf32, #tpu.memory_space<smem>>
    %c0_5 = arith.constant 0 : index
    %c5 = arith.constant 5 : index
    %5 = memref.load %arg2[%c0_5, %c5] : memref<8x27xf32, #tpu.memory_space<smem>>
    %c0_6 = arith.constant 0 : index
    %c6 = arith.constant 6 : index
    %6 = memref.load %arg2[%c0_6, %c6] : memref<8x27xf32, #tpu.memory_space<smem>>
    %c0_7 = arith.constant 0 : index
    %c7 = arith.constant 7 : index
    %7 = memref.load %arg2[%c0_7, %c7] : memref<8x27xf32, #tpu.memory_space<smem>>
    %c0_8 = arith.constant 0 : index
    %c8 = arith.constant 8 : index
    %8 = memref.load %arg2[%c0_8, %c8] : memref<8x27xf32, #tpu.memory_space<smem>>
    %c0_9 = arith.constant 0 : index
    %c9 = arith.constant 9 : index
    %9 = memref.load %arg2[%c0_9, %c9] : memref<8x27xf32, #tpu.memory_space<smem>>
    %c0_10 = arith.constant 0 : index
    %c10 = arith.constant 10 : index
    %10 = memref.load %arg2[%c0_10, %c10] : memref<8x27xf32, #tpu.memory_space<smem>>
    %c0_11 = arith.constant 0 : index
    %c11 = arith.constant 11 : index
    %11 = memref.load %arg2[%c0_11, %c11] : memref<8x27xf32, #tpu.memory_space<smem>>
    %c0_12 = arith.constant 0 : index
    %c12 = arith.constant 12 : index
    %12 = memref.load %arg2[%c0_12, %c12] : memref<8x27xf32, #tpu.memory_space<smem>>
    %c0_13 = arith.constant 0 : index
    %c13 = arith.constant 13 : index
    %13 = memref.load %arg2[%c0_13, %c13] : memref<8x27xf32, #tpu.memory_space<smem>>
    %c0_14 = arith.constant 0 : index
    %c14 = arith.constant 14 : index
    %14 = memref.load %arg2[%c0_14, %c14] : memref<8x27xf32, #tpu.memory_space<smem>>
    %c0_15 = arith.constant 0 : index
    %c15 = arith.constant 15 : index
    %15 = memref.load %arg2[%c0_15, %c15] : memref<8x27xf32, #tpu.memory_space<smem>>
    %c0_16 = arith.constant 0 : index
    %c16 = arith.constant 16 : index
    %16 = memref.load %arg2[%c0_16, %c16] : memref<8x27xf32, #tpu.memory_space<smem>>
    %c0_17 = arith.constant 0 : index
    %c17 = arith.constant 17 : index
    %17 = memref.load %arg2[%c0_17, %c17] : memref<8x27xf32, #tpu.memory_space<smem>>
    %c0_18 = arith.constant 0 : index
    %c18 = arith.constant 18 : index
    %18 = memref.load %arg2[%c0_18, %c18] : memref<8x27xf32, #tpu.memory_space<smem>>
    %c0_19 = arith.constant 0 : index
    %c19 = arith.constant 19 : index
    %19 = memref.load %arg2[%c0_19, %c19] : memref<8x27xf32, #tpu.memory_space<smem>>
    %c0_20 = arith.constant 0 : index
    %c20 = arith.constant 20 : index
    %20 = memref.load %arg2[%c0_20, %c20] : memref<8x27xf32, #tpu.memory_space<smem>>
    %c0_21 = arith.constant 0 : index
    %c21 = arith.constant 21 : index
    %21 = memref.load %arg2[%c0_21, %c21] : memref<8x27xf32, #tpu.memory_space<smem>>
    %c0_22 = arith.constant 0 : index
    %c22 = arith.constant 22 : index
    %22 = memref.load %arg2[%c0_22, %c22] : memref<8x27xf32, #tpu.memory_space<smem>>
    %c0_23 = arith.constant 0 : index
    %c23 = arith.constant 23 : index
    %23 = memref.load %arg2[%c0_23, %c23] : memref<8x27xf32, #tpu.memory_space<smem>>
    %c0_24 = arith.constant 0 : index
    %c24 = arith.constant 24 : index
    %24 = memref.load %arg2[%c0_24, %c24] : memref<8x27xf32, #tpu.memory_space<smem>>
    %c0_25 = arith.constant 0 : index
    %c25 = arith.constant 25 : index
    %25 = memref.load %arg2[%c0_25, %c25] : memref<8x27xf32, #tpu.memory_space<smem>>
    %c0_26 = arith.constant 0 : index
    %c26 = arith.constant 26 : index
    %26 = memref.load %arg2[%c0_26, %c26] : memref<8x27xf32, #tpu.memory_space<smem>>
    %c1_27 = arith.constant 1 : index
    %c0_28 = arith.constant 0 : index
    %27 = memref.load %arg2[%c1_27, %c0_28] : memref<8x27xf32, #tpu.memory_space<smem>>
    %c1_29 = arith.constant 1 : index
    %c1_30 = arith.constant 1 : index
    %28 = memref.load %arg2[%c1_29, %c1_30] : memref<8x27xf32, #tpu.memory_space<smem>>
    %c1_31 = arith.constant 1 : index
    %c2_32 = arith.constant 2 : index
    %29 = memref.load %arg2[%c1_31, %c2_32] : memref<8x27xf32, #tpu.memory_space<smem>>
    %c1_33 = arith.constant 1 : index
    %c3_34 = arith.constant 3 : index
    %30 = memref.load %arg2[%c1_33, %c3_34] : memref<8x27xf32, #tpu.memory_space<smem>>
    %c1_35 = arith.constant 1 : index
    %c4_36 = arith.constant 4 : index
    %31 = memref.load %arg2[%c1_35, %c4_36] : memref<8x27xf32, #tpu.memory_space<smem>>
    %c1_37 = arith.constant 1 : index
    %c5_38 = arith.constant 5 : index
    %32 = memref.load %arg2[%c1_37, %c5_38] : memref<8x27xf32, #tpu.memory_space<smem>>
    %c1_39 = arith.constant 1 : index
    %c6_40 = arith.constant 6 : index
    %33 = memref.load %arg2[%c1_39, %c6_40] : memref<8x27xf32, #tpu.memory_space<smem>>
    %c1_41 = arith.constant 1 : index
    %c7_42 = arith.constant 7 : index
    %34 = memref.load %arg2[%c1_41, %c7_42] : memref<8x27xf32, #tpu.memory_space<smem>>
    %c1_43 = arith.constant 1 : index
    %c8_44 = arith.constant 8 : index
    %35 = memref.load %arg2[%c1_43, %c8_44] : memref<8x27xf32, #tpu.memory_space<smem>>
    %c1_45 = arith.constant 1 : index
    %c9_46 = arith.constant 9 : index
    %36 = memref.load %arg2[%c1_45, %c9_46] : memref<8x27xf32, #tpu.memory_space<smem>>
    %c1_47 = arith.constant 1 : index
    %c10_48 = arith.constant 10 : index
    %37 = memref.load %arg2[%c1_47, %c10_48] : memref<8x27xf32, #tpu.memory_space<smem>>
    %c1_49 = arith.constant 1 : index
    %c11_50 = arith.constant 11 : index
    %38 = memref.load %arg2[%c1_49, %c11_50] : memref<8x27xf32, #tpu.memory_space<smem>>
    %c1_51 = arith.constant 1 : index
    %c12_52 = arith.constant 12 : index
    %39 = memref.load %arg2[%c1_51, %c12_52] : memref<8x27xf32, #tpu.memory_space<smem>>
    %c1_53 = arith.constant 1 : index
    %c13_54 = arith.constant 13 : index
    %40 = memref.load %arg2[%c1_53, %c13_54] : memref<8x27xf32, #tpu.memory_space<smem>>
    %c1_55 = arith.constant 1 : index
    %c14_56 = arith.constant 14 : index
    %41 = memref.load %arg2[%c1_55, %c14_56] : memref<8x27xf32, #tpu.memory_space<smem>>
    %c1_57 = arith.constant 1 : index
    %c15_58 = arith.constant 15 : index
    %42 = memref.load %arg2[%c1_57, %c15_58] : memref<8x27xf32, #tpu.memory_space<smem>>
    %c1_59 = arith.constant 1 : index
    %c16_60 = arith.constant 16 : index
    %43 = memref.load %arg2[%c1_59, %c16_60] : memref<8x27xf32, #tpu.memory_space<smem>>
    %c1_61 = arith.constant 1 : index
    %c17_62 = arith.constant 17 : index
    %44 = memref.load %arg2[%c1_61, %c17_62] : memref<8x27xf32, #tpu.memory_space<smem>>
    %c1_63 = arith.constant 1 : index
    %c18_64 = arith.constant 18 : index
    %45 = memref.load %arg2[%c1_63, %c18_64] : memref<8x27xf32, #tpu.memory_space<smem>>
    %c1_65 = arith.constant 1 : index
    %c19_66 = arith.constant 19 : index
    %46 = memref.load %arg2[%c1_65, %c19_66] : memref<8x27xf32, #tpu.memory_space<smem>>
    %c1_67 = arith.constant 1 : index
    %c20_68 = arith.constant 20 : index
    %47 = memref.load %arg2[%c1_67, %c20_68] : memref<8x27xf32, #tpu.memory_space<smem>>
    %c1_69 = arith.constant 1 : index
    %c21_70 = arith.constant 21 : index
    %48 = memref.load %arg2[%c1_69, %c21_70] : memref<8x27xf32, #tpu.memory_space<smem>>
    %c1_71 = arith.constant 1 : index
    %c22_72 = arith.constant 22 : index
    %49 = memref.load %arg2[%c1_71, %c22_72] : memref<8x27xf32, #tpu.memory_space<smem>>
    %c1_73 = arith.constant 1 : index
    %c23_74 = arith.constant 23 : index
    %50 = memref.load %arg2[%c1_73, %c23_74] : memref<8x27xf32, #tpu.memory_space<smem>>
    %c1_75 = arith.constant 1 : index
    %c24_76 = arith.constant 24 : index
    %51 = memref.load %arg2[%c1_75, %c24_76] : memref<8x27xf32, #tpu.memory_space<smem>>
    %c1_77 = arith.constant 1 : index
    %c25_78 = arith.constant 25 : index
    %52 = memref.load %arg2[%c1_77, %c25_78] : memref<8x27xf32, #tpu.memory_space<smem>>
    %c1_79 = arith.constant 1 : index
    %c26_80 = arith.constant 26 : index
    %53 = memref.load %arg2[%c1_79, %c26_80] : memref<8x27xf32, #tpu.memory_space<smem>>
    %c2_81 = arith.constant 2 : index
    %c0_82 = arith.constant 0 : index
    %54 = memref.load %arg2[%c2_81, %c0_82] : memref<8x27xf32, #tpu.memory_space<smem>>
    %c2_83 = arith.constant 2 : index
    %c1_84 = arith.constant 1 : index
    %55 = memref.load %arg2[%c2_83, %c1_84] : memref<8x27xf32, #tpu.memory_space<smem>>
    %c2_85 = arith.constant 2 : index
    %c2_86 = arith.constant 2 : index
    %56 = memref.load %arg2[%c2_85, %c2_86] : memref<8x27xf32, #tpu.memory_space<smem>>
    %c2_87 = arith.constant 2 : index
    %c3_88 = arith.constant 3 : index
    %57 = memref.load %arg2[%c2_87, %c3_88] : memref<8x27xf32, #tpu.memory_space<smem>>
    %c2_89 = arith.constant 2 : index
    %c4_90 = arith.constant 4 : index
    %58 = memref.load %arg2[%c2_89, %c4_90] : memref<8x27xf32, #tpu.memory_space<smem>>
    %c2_91 = arith.constant 2 : index
    %c5_92 = arith.constant 5 : index
    %59 = memref.load %arg2[%c2_91, %c5_92] : memref<8x27xf32, #tpu.memory_space<smem>>
    %c2_93 = arith.constant 2 : index
    %c6_94 = arith.constant 6 : index
    %60 = memref.load %arg2[%c2_93, %c6_94] : memref<8x27xf32, #tpu.memory_space<smem>>
    %c2_95 = arith.constant 2 : index
    %c7_96 = arith.constant 7 : index
    %61 = memref.load %arg2[%c2_95, %c7_96] : memref<8x27xf32, #tpu.memory_space<smem>>
    %c2_97 = arith.constant 2 : index
    %c8_98 = arith.constant 8 : index
    %62 = memref.load %arg2[%c2_97, %c8_98] : memref<8x27xf32, #tpu.memory_space<smem>>
    %c2_99 = arith.constant 2 : index
    %c9_100 = arith.constant 9 : index
    %63 = memref.load %arg2[%c2_99, %c9_100] : memref<8x27xf32, #tpu.memory_space<smem>>
    %c2_101 = arith.constant 2 : index
    %c10_102 = arith.constant 10 : index
    %64 = memref.load %arg2[%c2_101, %c10_102] : memref<8x27xf32, #tpu.memory_space<smem>>
    %c2_103 = arith.constant 2 : index
    %c11_104 = arith.constant 11 : index
    %65 = memref.load %arg2[%c2_103, %c11_104] : memref<8x27xf32, #tpu.memory_space<smem>>
    %c2_105 = arith.constant 2 : index
    %c12_106 = arith.constant 12 : index
    %66 = memref.load %arg2[%c2_105, %c12_106] : memref<8x27xf32, #tpu.memory_space<smem>>
    %c2_107 = arith.constant 2 : index
    %c13_108 = arith.constant 13 : index
    %67 = memref.load %arg2[%c2_107, %c13_108] : memref<8x27xf32, #tpu.memory_space<smem>>
    %c2_109 = arith.constant 2 : index
    %c14_110 = arith.constant 14 : index
    %68 = memref.load %arg2[%c2_109, %c14_110] : memref<8x27xf32, #tpu.memory_space<smem>>
    %c2_111 = arith.constant 2 : index
    %c15_112 = arith.constant 15 : index
    %69 = memref.load %arg2[%c2_111, %c15_112] : memref<8x27xf32, #tpu.memory_space<smem>>
    %c2_113 = arith.constant 2 : index
    %c16_114 = arith.constant 16 : index
    %70 = memref.load %arg2[%c2_113, %c16_114] : memref<8x27xf32, #tpu.memory_space<smem>>
    %c2_115 = arith.constant 2 : index
    %c17_116 = arith.constant 17 : index
    %71 = memref.load %arg2[%c2_115, %c17_116] : memref<8x27xf32, #tpu.memory_space<smem>>
    %c2_117 = arith.constant 2 : index
    %c18_118 = arith.constant 18 : index
    %72 = memref.load %arg2[%c2_117, %c18_118] : memref<8x27xf32, #tpu.memory_space<smem>>
    %c2_119 = arith.constant 2 : index
    %c19_120 = arith.constant 19 : index
    %73 = memref.load %arg2[%c2_119, %c19_120] : memref<8x27xf32, #tpu.memory_space<smem>>
    %c2_121 = arith.constant 2 : index
    %c20_122 = arith.constant 20 : index
    %74 = memref.load %arg2[%c2_121, %c20_122] : memref<8x27xf32, #tpu.memory_space<smem>>
    %c2_123 = arith.constant 2 : index
    %c21_124 = arith.constant 21 : index
    %75 = memref.load %arg2[%c2_123, %c21_124] : memref<8x27xf32, #tpu.memory_space<smem>>
    %c2_125 = arith.constant 2 : index
    %c22_126 = arith.constant 22 : index
    %76 = memref.load %arg2[%c2_125, %c22_126] : memref<8x27xf32, #tpu.memory_space<smem>>
    %c2_127 = arith.constant 2 : index
    %c23_128 = arith.constant 23 : index
    %77 = memref.load %arg2[%c2_127, %c23_128] : memref<8x27xf32, #tpu.memory_space<smem>>
    %c2_129 = arith.constant 2 : index
    %c24_130 = arith.constant 24 : index
    %78 = memref.load %arg2[%c2_129, %c24_130] : memref<8x27xf32, #tpu.memory_space<smem>>
    %c2_131 = arith.constant 2 : index
    %c25_132 = arith.constant 25 : index
    %79 = memref.load %arg2[%c2_131, %c25_132] : memref<8x27xf32, #tpu.memory_space<smem>>
    %c2_133 = arith.constant 2 : index
    %c26_134 = arith.constant 26 : index
    %80 = memref.load %arg2[%c2_133, %c26_134] : memref<8x27xf32, #tpu.memory_space<smem>>
    %c3_135 = arith.constant 3 : index
    %c0_136 = arith.constant 0 : index
    %81 = memref.load %arg2[%c3_135, %c0_136] : memref<8x27xf32, #tpu.memory_space<smem>>
    %c3_137 = arith.constant 3 : index
    %c1_138 = arith.constant 1 : index
    %82 = memref.load %arg2[%c3_137, %c1_138] : memref<8x27xf32, #tpu.memory_space<smem>>
    %c3_139 = arith.constant 3 : index
    %c2_140 = arith.constant 2 : index
    %83 = memref.load %arg2[%c3_139, %c2_140] : memref<8x27xf32, #tpu.memory_space<smem>>
    %c3_141 = arith.constant 3 : index
    %c3_142 = arith.constant 3 : index
    %84 = memref.load %arg2[%c3_141, %c3_142] : memref<8x27xf32, #tpu.memory_space<smem>>
    %c3_143 = arith.constant 3 : index
    %c4_144 = arith.constant 4 : index
    %85 = memref.load %arg2[%c3_143, %c4_144] : memref<8x27xf32, #tpu.memory_space<smem>>
    %c3_145 = arith.constant 3 : index
    %c5_146 = arith.constant 5 : index
    %86 = memref.load %arg2[%c3_145, %c5_146] : memref<8x27xf32, #tpu.memory_space<smem>>
    %c3_147 = arith.constant 3 : index
    %c6_148 = arith.constant 6 : index
    %87 = memref.load %arg2[%c3_147, %c6_148] : memref<8x27xf32, #tpu.memory_space<smem>>
    %c3_149 = arith.constant 3 : index
    %c7_150 = arith.constant 7 : index
    %88 = memref.load %arg2[%c3_149, %c7_150] : memref<8x27xf32, #tpu.memory_space<smem>>
    %c3_151 = arith.constant 3 : index
    %c8_152 = arith.constant 8 : index
    %89 = memref.load %arg2[%c3_151, %c8_152] : memref<8x27xf32, #tpu.memory_space<smem>>
    %c3_153 = arith.constant 3 : index
    %c9_154 = arith.constant 9 : index
    %90 = memref.load %arg2[%c3_153, %c9_154] : memref<8x27xf32, #tpu.memory_space<smem>>
    %c3_155 = arith.constant 3 : index
    %c10_156 = arith.constant 10 : index
    %91 = memref.load %arg2[%c3_155, %c10_156] : memref<8x27xf32, #tpu.memory_space<smem>>
    %c3_157 = arith.constant 3 : index
    %c11_158 = arith.constant 11 : index
    %92 = memref.load %arg2[%c3_157, %c11_158] : memref<8x27xf32, #tpu.memory_space<smem>>
    %c3_159 = arith.constant 3 : index
    %c12_160 = arith.constant 12 : index
    %93 = memref.load %arg2[%c3_159, %c12_160] : memref<8x27xf32, #tpu.memory_space<smem>>
    %c3_161 = arith.constant 3 : index
    %c13_162 = arith.constant 13 : index
    %94 = memref.load %arg2[%c3_161, %c13_162] : memref<8x27xf32, #tpu.memory_space<smem>>
    %c3_163 = arith.constant 3 : index
    %c14_164 = arith.constant 14 : index
    %95 = memref.load %arg2[%c3_163, %c14_164] : memref<8x27xf32, #tpu.memory_space<smem>>
    %c3_165 = arith.constant 3 : index
    %c15_166 = arith.constant 15 : index
    %96 = memref.load %arg2[%c3_165, %c15_166] : memref<8x27xf32, #tpu.memory_space<smem>>
    %c3_167 = arith.constant 3 : index
    %c16_168 = arith.constant 16 : index
    %97 = memref.load %arg2[%c3_167, %c16_168] : memref<8x27xf32, #tpu.memory_space<smem>>
    %c3_169 = arith.constant 3 : index
    %c17_170 = arith.constant 17 : index
    %98 = memref.load %arg2[%c3_169, %c17_170] : memref<8x27xf32, #tpu.memory_space<smem>>
    %c3_171 = arith.constant 3 : index
    %c18_172 = arith.constant 18 : index
    %99 = memref.load %arg2[%c3_171, %c18_172] : memref<8x27xf32, #tpu.memory_space<smem>>
    %c3_173 = arith.constant 3 : index
    %c19_174 = arith.constant 19 : index
    %100 = memref.load %arg2[%c3_173, %c19_174] : memref<8x27xf32, #tpu.memory_space<smem>>
    %c3_175 = arith.constant 3 : index
    %c20_176 = arith.constant 20 : index
    %101 = memref.load %arg2[%c3_175, %c20_176] : memref<8x27xf32, #tpu.memory_space<smem>>
    %c3_177 = arith.constant 3 : index
    %c21_178 = arith.constant 21 : index
    %102 = memref.load %arg2[%c3_177, %c21_178] : memref<8x27xf32, #tpu.memory_space<smem>>
    %c3_179 = arith.constant 3 : index
    %c22_180 = arith.constant 22 : index
    %103 = memref.load %arg2[%c3_179, %c22_180] : memref<8x27xf32, #tpu.memory_space<smem>>
    %c3_181 = arith.constant 3 : index
    %c23_182 = arith.constant 23 : index
    %104 = memref.load %arg2[%c3_181, %c23_182] : memref<8x27xf32, #tpu.memory_space<smem>>
    %c3_183 = arith.constant 3 : index
    %c24_184 = arith.constant 24 : index
    %105 = memref.load %arg2[%c3_183, %c24_184] : memref<8x27xf32, #tpu.memory_space<smem>>
    %c3_185 = arith.constant 3 : index
    %c25_186 = arith.constant 25 : index
    %106 = memref.load %arg2[%c3_185, %c25_186] : memref<8x27xf32, #tpu.memory_space<smem>>
    %c3_187 = arith.constant 3 : index
    %c26_188 = arith.constant 26 : index
    %107 = memref.load %arg2[%c3_187, %c26_188] : memref<8x27xf32, #tpu.memory_space<smem>>
    %c4_189 = arith.constant 4 : index
    %c0_190 = arith.constant 0 : index
    %108 = memref.load %arg2[%c4_189, %c0_190] : memref<8x27xf32, #tpu.memory_space<smem>>
    %c4_191 = arith.constant 4 : index
    %c1_192 = arith.constant 1 : index
    %109 = memref.load %arg2[%c4_191, %c1_192] : memref<8x27xf32, #tpu.memory_space<smem>>
    %c4_193 = arith.constant 4 : index
    %c2_194 = arith.constant 2 : index
    %110 = memref.load %arg2[%c4_193, %c2_194] : memref<8x27xf32, #tpu.memory_space<smem>>
    %c4_195 = arith.constant 4 : index
    %c3_196 = arith.constant 3 : index
    %111 = memref.load %arg2[%c4_195, %c3_196] : memref<8x27xf32, #tpu.memory_space<smem>>
    %c4_197 = arith.constant 4 : index
    %c4_198 = arith.constant 4 : index
    %112 = memref.load %arg2[%c4_197, %c4_198] : memref<8x27xf32, #tpu.memory_space<smem>>
    %c4_199 = arith.constant 4 : index
    %c5_200 = arith.constant 5 : index
    %113 = memref.load %arg2[%c4_199, %c5_200] : memref<8x27xf32, #tpu.memory_space<smem>>
    %c4_201 = arith.constant 4 : index
    %c6_202 = arith.constant 6 : index
    %114 = memref.load %arg2[%c4_201, %c6_202] : memref<8x27xf32, #tpu.memory_space<smem>>
    %c4_203 = arith.constant 4 : index
    %c7_204 = arith.constant 7 : index
    %115 = memref.load %arg2[%c4_203, %c7_204] : memref<8x27xf32, #tpu.memory_space<smem>>
    %c4_205 = arith.constant 4 : index
    %c8_206 = arith.constant 8 : index
    %116 = memref.load %arg2[%c4_205, %c8_206] : memref<8x27xf32, #tpu.memory_space<smem>>
    %c4_207 = arith.constant 4 : index
    %c9_208 = arith.constant 9 : index
    %117 = memref.load %arg2[%c4_207, %c9_208] : memref<8x27xf32, #tpu.memory_space<smem>>
    %c4_209 = arith.constant 4 : index
    %c10_210 = arith.constant 10 : index
    %118 = memref.load %arg2[%c4_209, %c10_210] : memref<8x27xf32, #tpu.memory_space<smem>>
    %c4_211 = arith.constant 4 : index
    %c11_212 = arith.constant 11 : index
    %119 = memref.load %arg2[%c4_211, %c11_212] : memref<8x27xf32, #tpu.memory_space<smem>>
    %c4_213 = arith.constant 4 : index
    %c12_214 = arith.constant 12 : index
    %120 = memref.load %arg2[%c4_213, %c12_214] : memref<8x27xf32, #tpu.memory_space<smem>>
    %c4_215 = arith.constant 4 : index
    %c13_216 = arith.constant 13 : index
    %121 = memref.load %arg2[%c4_215, %c13_216] : memref<8x27xf32, #tpu.memory_space<smem>>
    %c4_217 = arith.constant 4 : index
    %c14_218 = arith.constant 14 : index
    %122 = memref.load %arg2[%c4_217, %c14_218] : memref<8x27xf32, #tpu.memory_space<smem>>
    %c4_219 = arith.constant 4 : index
    %c15_220 = arith.constant 15 : index
    %123 = memref.load %arg2[%c4_219, %c15_220] : memref<8x27xf32, #tpu.memory_space<smem>>
    %c4_221 = arith.constant 4 : index
    %c16_222 = arith.constant 16 : index
    %124 = memref.load %arg2[%c4_221, %c16_222] : memref<8x27xf32, #tpu.memory_space<smem>>
    %c4_223 = arith.constant 4 : index
    %c17_224 = arith.constant 17 : index
    %125 = memref.load %arg2[%c4_223, %c17_224] : memref<8x27xf32, #tpu.memory_space<smem>>
    %c4_225 = arith.constant 4 : index
    %c18_226 = arith.constant 18 : index
    %126 = memref.load %arg2[%c4_225, %c18_226] : memref<8x27xf32, #tpu.memory_space<smem>>
    %c4_227 = arith.constant 4 : index
    %c19_228 = arith.constant 19 : index
    %127 = memref.load %arg2[%c4_227, %c19_228] : memref<8x27xf32, #tpu.memory_space<smem>>
    %c4_229 = arith.constant 4 : index
    %c20_230 = arith.constant 20 : index
    %128 = memref.load %arg2[%c4_229, %c20_230] : memref<8x27xf32, #tpu.memory_space<smem>>
    %c4_231 = arith.constant 4 : index
    %c21_232 = arith.constant 21 : index
    %129 = memref.load %arg2[%c4_231, %c21_232] : memref<8x27xf32, #tpu.memory_space<smem>>
    %c4_233 = arith.constant 4 : index
    %c22_234 = arith.constant 22 : index
    %130 = memref.load %arg2[%c4_233, %c22_234] : memref<8x27xf32, #tpu.memory_space<smem>>
    %c4_235 = arith.constant 4 : index
    %c23_236 = arith.constant 23 : index
    %131 = memref.load %arg2[%c4_235, %c23_236] : memref<8x27xf32, #tpu.memory_space<smem>>
    %c4_237 = arith.constant 4 : index
    %c24_238 = arith.constant 24 : index
    %132 = memref.load %arg2[%c4_237, %c24_238] : memref<8x27xf32, #tpu.memory_space<smem>>
    %c4_239 = arith.constant 4 : index
    %c25_240 = arith.constant 25 : index
    %133 = memref.load %arg2[%c4_239, %c25_240] : memref<8x27xf32, #tpu.memory_space<smem>>
    %c4_241 = arith.constant 4 : index
    %c26_242 = arith.constant 26 : index
    %134 = memref.load %arg2[%c4_241, %c26_242] : memref<8x27xf32, #tpu.memory_space<smem>>
    %c5_243 = arith.constant 5 : index
    %c0_244 = arith.constant 0 : index
    %135 = memref.load %arg2[%c5_243, %c0_244] : memref<8x27xf32, #tpu.memory_space<smem>>
    %c5_245 = arith.constant 5 : index
    %c1_246 = arith.constant 1 : index
    %136 = memref.load %arg2[%c5_245, %c1_246] : memref<8x27xf32, #tpu.memory_space<smem>>
    %c5_247 = arith.constant 5 : index
    %c2_248 = arith.constant 2 : index
    %137 = memref.load %arg2[%c5_247, %c2_248] : memref<8x27xf32, #tpu.memory_space<smem>>
    %c5_249 = arith.constant 5 : index
    %c3_250 = arith.constant 3 : index
    %138 = memref.load %arg2[%c5_249, %c3_250] : memref<8x27xf32, #tpu.memory_space<smem>>
    %c5_251 = arith.constant 5 : index
    %c4_252 = arith.constant 4 : index
    %139 = memref.load %arg2[%c5_251, %c4_252] : memref<8x27xf32, #tpu.memory_space<smem>>
    %c5_253 = arith.constant 5 : index
    %c5_254 = arith.constant 5 : index
    %140 = memref.load %arg2[%c5_253, %c5_254] : memref<8x27xf32, #tpu.memory_space<smem>>
    %c5_255 = arith.constant 5 : index
    %c6_256 = arith.constant 6 : index
    %141 = memref.load %arg2[%c5_255, %c6_256] : memref<8x27xf32, #tpu.memory_space<smem>>
    %c5_257 = arith.constant 5 : index
    %c7_258 = arith.constant 7 : index
    %142 = memref.load %arg2[%c5_257, %c7_258] : memref<8x27xf32, #tpu.memory_space<smem>>
    %c5_259 = arith.constant 5 : index
    %c8_260 = arith.constant 8 : index
    %143 = memref.load %arg2[%c5_259, %c8_260] : memref<8x27xf32, #tpu.memory_space<smem>>
    %c5_261 = arith.constant 5 : index
    %c9_262 = arith.constant 9 : index
    %144 = memref.load %arg2[%c5_261, %c9_262] : memref<8x27xf32, #tpu.memory_space<smem>>
    %c5_263 = arith.constant 5 : index
    %c10_264 = arith.constant 10 : index
    %145 = memref.load %arg2[%c5_263, %c10_264] : memref<8x27xf32, #tpu.memory_space<smem>>
    %c5_265 = arith.constant 5 : index
    %c11_266 = arith.constant 11 : index
    %146 = memref.load %arg2[%c5_265, %c11_266] : memref<8x27xf32, #tpu.memory_space<smem>>
    %c5_267 = arith.constant 5 : index
    %c12_268 = arith.constant 12 : index
    %147 = memref.load %arg2[%c5_267, %c12_268] : memref<8x27xf32, #tpu.memory_space<smem>>
    %c5_269 = arith.constant 5 : index
    %c13_270 = arith.constant 13 : index
    %148 = memref.load %arg2[%c5_269, %c13_270] : memref<8x27xf32, #tpu.memory_space<smem>>
    %c5_271 = arith.constant 5 : index
    %c14_272 = arith.constant 14 : index
    %149 = memref.load %arg2[%c5_271, %c14_272] : memref<8x27xf32, #tpu.memory_space<smem>>
    %c5_273 = arith.constant 5 : index
    %c15_274 = arith.constant 15 : index
    %150 = memref.load %arg2[%c5_273, %c15_274] : memref<8x27xf32, #tpu.memory_space<smem>>
    %c5_275 = arith.constant 5 : index
    %c16_276 = arith.constant 16 : index
    %151 = memref.load %arg2[%c5_275, %c16_276] : memref<8x27xf32, #tpu.memory_space<smem>>
    %c5_277 = arith.constant 5 : index
    %c17_278 = arith.constant 17 : index
    %152 = memref.load %arg2[%c5_277, %c17_278] : memref<8x27xf32, #tpu.memory_space<smem>>
    %c5_279 = arith.constant 5 : index
    %c18_280 = arith.constant 18 : index
    %153 = memref.load %arg2[%c5_279, %c18_280] : memref<8x27xf32, #tpu.memory_space<smem>>
    %c5_281 = arith.constant 5 : index
    %c19_282 = arith.constant 19 : index
    %154 = memref.load %arg2[%c5_281, %c19_282] : memref<8x27xf32, #tpu.memory_space<smem>>
    %c5_283 = arith.constant 5 : index
    %c20_284 = arith.constant 20 : index
    %155 = memref.load %arg2[%c5_283, %c20_284] : memref<8x27xf32, #tpu.memory_space<smem>>
    %c5_285 = arith.constant 5 : index
    %c21_286 = arith.constant 21 : index
    %156 = memref.load %arg2[%c5_285, %c21_286] : memref<8x27xf32, #tpu.memory_space<smem>>
    %c5_287 = arith.constant 5 : index
    %c22_288 = arith.constant 22 : index
    %157 = memref.load %arg2[%c5_287, %c22_288] : memref<8x27xf32, #tpu.memory_space<smem>>
    %c5_289 = arith.constant 5 : index
    %c23_290 = arith.constant 23 : index
    %158 = memref.load %arg2[%c5_289, %c23_290] : memref<8x27xf32, #tpu.memory_space<smem>>
    %c5_291 = arith.constant 5 : index
    %c24_292 = arith.constant 24 : index
    %159 = memref.load %arg2[%c5_291, %c24_292] : memref<8x27xf32, #tpu.memory_space<smem>>
    %c5_293 = arith.constant 5 : index
    %c25_294 = arith.constant 25 : index
    %160 = memref.load %arg2[%c5_293, %c25_294] : memref<8x27xf32, #tpu.memory_space<smem>>
    %c5_295 = arith.constant 5 : index
    %c26_296 = arith.constant 26 : index
    %161 = memref.load %arg2[%c5_295, %c26_296] : memref<8x27xf32, #tpu.memory_space<smem>>
    %c6_297 = arith.constant 6 : index
    %c0_298 = arith.constant 0 : index
    %162 = memref.load %arg2[%c6_297, %c0_298] : memref<8x27xf32, #tpu.memory_space<smem>>
    %c6_299 = arith.constant 6 : index
    %c1_300 = arith.constant 1 : index
    %163 = memref.load %arg2[%c6_299, %c1_300] : memref<8x27xf32, #tpu.memory_space<smem>>
    %c6_301 = arith.constant 6 : index
    %c2_302 = arith.constant 2 : index
    %164 = memref.load %arg2[%c6_301, %c2_302] : memref<8x27xf32, #tpu.memory_space<smem>>
    %c6_303 = arith.constant 6 : index
    %c3_304 = arith.constant 3 : index
    %165 = memref.load %arg2[%c6_303, %c3_304] : memref<8x27xf32, #tpu.memory_space<smem>>
    %c6_305 = arith.constant 6 : index
    %c4_306 = arith.constant 4 : index
    %166 = memref.load %arg2[%c6_305, %c4_306] : memref<8x27xf32, #tpu.memory_space<smem>>
    %c6_307 = arith.constant 6 : index
    %c5_308 = arith.constant 5 : index
    %167 = memref.load %arg2[%c6_307, %c5_308] : memref<8x27xf32, #tpu.memory_space<smem>>
    %c6_309 = arith.constant 6 : index
    %c6_310 = arith.constant 6 : index
    %168 = memref.load %arg2[%c6_309, %c6_310] : memref<8x27xf32, #tpu.memory_space<smem>>
    %c6_311 = arith.constant 6 : index
    %c7_312 = arith.constant 7 : index
    %169 = memref.load %arg2[%c6_311, %c7_312] : memref<8x27xf32, #tpu.memory_space<smem>>
    %c6_313 = arith.constant 6 : index
    %c8_314 = arith.constant 8 : index
    %170 = memref.load %arg2[%c6_313, %c8_314] : memref<8x27xf32, #tpu.memory_space<smem>>
    %c6_315 = arith.constant 6 : index
    %c9_316 = arith.constant 9 : index
    %171 = memref.load %arg2[%c6_315, %c9_316] : memref<8x27xf32, #tpu.memory_space<smem>>
    %c6_317 = arith.constant 6 : index
    %c10_318 = arith.constant 10 : index
    %172 = memref.load %arg2[%c6_317, %c10_318] : memref<8x27xf32, #tpu.memory_space<smem>>
    %c6_319 = arith.constant 6 : index
    %c11_320 = arith.constant 11 : index
    %173 = memref.load %arg2[%c6_319, %c11_320] : memref<8x27xf32, #tpu.memory_space<smem>>
    %c6_321 = arith.constant 6 : index
    %c12_322 = arith.constant 12 : index
    %174 = memref.load %arg2[%c6_321, %c12_322] : memref<8x27xf32, #tpu.memory_space<smem>>
    %c6_323 = arith.constant 6 : index
    %c13_324 = arith.constant 13 : index
    %175 = memref.load %arg2[%c6_323, %c13_324] : memref<8x27xf32, #tpu.memory_space<smem>>
    %c6_325 = arith.constant 6 : index
    %c14_326 = arith.constant 14 : index
    %176 = memref.load %arg2[%c6_325, %c14_326] : memref<8x27xf32, #tpu.memory_space<smem>>
    %c6_327 = arith.constant 6 : index
    %c15_328 = arith.constant 15 : index
    %177 = memref.load %arg2[%c6_327, %c15_328] : memref<8x27xf32, #tpu.memory_space<smem>>
    %c6_329 = arith.constant 6 : index
    %c16_330 = arith.constant 16 : index
    %178 = memref.load %arg2[%c6_329, %c16_330] : memref<8x27xf32, #tpu.memory_space<smem>>
    %c6_331 = arith.constant 6 : index
    %c17_332 = arith.constant 17 : index
    %179 = memref.load %arg2[%c6_331, %c17_332] : memref<8x27xf32, #tpu.memory_space<smem>>
    %c6_333 = arith.constant 6 : index
    %c18_334 = arith.constant 18 : index
    %180 = memref.load %arg2[%c6_333, %c18_334] : memref<8x27xf32, #tpu.memory_space<smem>>
    %c6_335 = arith.constant 6 : index
    %c19_336 = arith.constant 19 : index
    %181 = memref.load %arg2[%c6_335, %c19_336] : memref<8x27xf32, #tpu.memory_space<smem>>
    %c6_337 = arith.constant 6 : index
    %c20_338 = arith.constant 20 : index
    %182 = memref.load %arg2[%c6_337, %c20_338] : memref<8x27xf32, #tpu.memory_space<smem>>
    %c6_339 = arith.constant 6 : index
    %c21_340 = arith.constant 21 : index
    %183 = memref.load %arg2[%c6_339, %c21_340] : memref<8x27xf32, #tpu.memory_space<smem>>
    %c6_341 = arith.constant 6 : index
    %c22_342 = arith.constant 22 : index
    %184 = memref.load %arg2[%c6_341, %c22_342] : memref<8x27xf32, #tpu.memory_space<smem>>
    %c6_343 = arith.constant 6 : index
    %c23_344 = arith.constant 23 : index
    %185 = memref.load %arg2[%c6_343, %c23_344] : memref<8x27xf32, #tpu.memory_space<smem>>
    %c6_345 = arith.constant 6 : index
    %c24_346 = arith.constant 24 : index
    %186 = memref.load %arg2[%c6_345, %c24_346] : memref<8x27xf32, #tpu.memory_space<smem>>
    %c6_347 = arith.constant 6 : index
    %c25_348 = arith.constant 25 : index
    %187 = memref.load %arg2[%c6_347, %c25_348] : memref<8x27xf32, #tpu.memory_space<smem>>
    %c6_349 = arith.constant 6 : index
    %c26_350 = arith.constant 26 : index
    %188 = memref.load %arg2[%c6_349, %c26_350] : memref<8x27xf32, #tpu.memory_space<smem>>
    %c7_351 = arith.constant 7 : index
    %c0_352 = arith.constant 0 : index
    %189 = memref.load %arg2[%c7_351, %c0_352] : memref<8x27xf32, #tpu.memory_space<smem>>
    %c7_353 = arith.constant 7 : index
    %c1_354 = arith.constant 1 : index
    %190 = memref.load %arg2[%c7_353, %c1_354] : memref<8x27xf32, #tpu.memory_space<smem>>
    %c7_355 = arith.constant 7 : index
    %c2_356 = arith.constant 2 : index
    %191 = memref.load %arg2[%c7_355, %c2_356] : memref<8x27xf32, #tpu.memory_space<smem>>
    %c7_357 = arith.constant 7 : index
    %c3_358 = arith.constant 3 : index
    %192 = memref.load %arg2[%c7_357, %c3_358] : memref<8x27xf32, #tpu.memory_space<smem>>
    %c7_359 = arith.constant 7 : index
    %c4_360 = arith.constant 4 : index
    %193 = memref.load %arg2[%c7_359, %c4_360] : memref<8x27xf32, #tpu.memory_space<smem>>
    %c7_361 = arith.constant 7 : index
    %c5_362 = arith.constant 5 : index
    %194 = memref.load %arg2[%c7_361, %c5_362] : memref<8x27xf32, #tpu.memory_space<smem>>
    %c7_363 = arith.constant 7 : index
    %c6_364 = arith.constant 6 : index
    %195 = memref.load %arg2[%c7_363, %c6_364] : memref<8x27xf32, #tpu.memory_space<smem>>
    %c7_365 = arith.constant 7 : index
    %c7_366 = arith.constant 7 : index
    %196 = memref.load %arg2[%c7_365, %c7_366] : memref<8x27xf32, #tpu.memory_space<smem>>
    %c7_367 = arith.constant 7 : index
    %c8_368 = arith.constant 8 : index
    %197 = memref.load %arg2[%c7_367, %c8_368] : memref<8x27xf32, #tpu.memory_space<smem>>
    %c7_369 = arith.constant 7 : index
    %c9_370 = arith.constant 9 : index
    %198 = memref.load %arg2[%c7_369, %c9_370] : memref<8x27xf32, #tpu.memory_space<smem>>
    %c7_371 = arith.constant 7 : index
    %c10_372 = arith.constant 10 : index
    %199 = memref.load %arg2[%c7_371, %c10_372] : memref<8x27xf32, #tpu.memory_space<smem>>
    %c7_373 = arith.constant 7 : index
    %c11_374 = arith.constant 11 : index
    %200 = memref.load %arg2[%c7_373, %c11_374] : memref<8x27xf32, #tpu.memory_space<smem>>
    %c7_375 = arith.constant 7 : index
    %c12_376 = arith.constant 12 : index
    %201 = memref.load %arg2[%c7_375, %c12_376] : memref<8x27xf32, #tpu.memory_space<smem>>
    %c7_377 = arith.constant 7 : index
    %c13_378 = arith.constant 13 : index
    %202 = memref.load %arg2[%c7_377, %c13_378] : memref<8x27xf32, #tpu.memory_space<smem>>
    %c7_379 = arith.constant 7 : index
    %c14_380 = arith.constant 14 : index
    %203 = memref.load %arg2[%c7_379, %c14_380] : memref<8x27xf32, #tpu.memory_space<smem>>
    %c7_381 = arith.constant 7 : index
    %c15_382 = arith.constant 15 : index
    %204 = memref.load %arg2[%c7_381, %c15_382] : memref<8x27xf32, #tpu.memory_space<smem>>
    %c7_383 = arith.constant 7 : index
    %c16_384 = arith.constant 16 : index
    %205 = memref.load %arg2[%c7_383, %c16_384] : memref<8x27xf32, #tpu.memory_space<smem>>
    %c7_385 = arith.constant 7 : index
    %c17_386 = arith.constant 17 : index
    %206 = memref.load %arg2[%c7_385, %c17_386] : memref<8x27xf32, #tpu.memory_space<smem>>
    %c7_387 = arith.constant 7 : index
    %c18_388 = arith.constant 18 : index
    %207 = memref.load %arg2[%c7_387, %c18_388] : memref<8x27xf32, #tpu.memory_space<smem>>
    %c7_389 = arith.constant 7 : index
    %c19_390 = arith.constant 19 : index
    %208 = memref.load %arg2[%c7_389, %c19_390] : memref<8x27xf32, #tpu.memory_space<smem>>
    %c7_391 = arith.constant 7 : index
    %c20_392 = arith.constant 20 : index
    %209 = memref.load %arg2[%c7_391, %c20_392] : memref<8x27xf32, #tpu.memory_space<smem>>
    %c7_393 = arith.constant 7 : index
    %c21_394 = arith.constant 21 : index
    %210 = memref.load %arg2[%c7_393, %c21_394] : memref<8x27xf32, #tpu.memory_space<smem>>
    %c7_395 = arith.constant 7 : index
    %c22_396 = arith.constant 22 : index
    %211 = memref.load %arg2[%c7_395, %c22_396] : memref<8x27xf32, #tpu.memory_space<smem>>
    %c7_397 = arith.constant 7 : index
    %c23_398 = arith.constant 23 : index
    %212 = memref.load %arg2[%c7_397, %c23_398] : memref<8x27xf32, #tpu.memory_space<smem>>
    %c7_399 = arith.constant 7 : index
    %c24_400 = arith.constant 24 : index
    %213 = memref.load %arg2[%c7_399, %c24_400] : memref<8x27xf32, #tpu.memory_space<smem>>
    %c7_401 = arith.constant 7 : index
    %c25_402 = arith.constant 25 : index
    %214 = memref.load %arg2[%c7_401, %c25_402] : memref<8x27xf32, #tpu.memory_space<smem>>
    %c7_403 = arith.constant 7 : index
    %c26_404 = arith.constant 26 : index
    %215 = memref.load %arg2[%c7_403, %c26_404] : memref<8x27xf32, #tpu.memory_space<smem>>
    %c0_405 = arith.constant 0 : index
    %216 = memref.load %arg3[%c0_405] : memref<8xf32, #tpu.memory_space<smem>>
    %c1_406 = arith.constant 1 : index
    %217 = memref.load %arg3[%c1_406] : memref<8xf32, #tpu.memory_space<smem>>
    %c2_407 = arith.constant 2 : index
    %218 = memref.load %arg3[%c2_407] : memref<8xf32, #tpu.memory_space<smem>>
    %c3_408 = arith.constant 3 : index
    %219 = memref.load %arg3[%c3_408] : memref<8xf32, #tpu.memory_space<smem>>
    %c4_409 = arith.constant 4 : index
    %220 = memref.load %arg3[%c4_409] : memref<8xf32, #tpu.memory_space<smem>>
    %c5_410 = arith.constant 5 : index
    %221 = memref.load %arg3[%c5_410] : memref<8xf32, #tpu.memory_space<smem>>
    %c6_411 = arith.constant 6 : index
    %222 = memref.load %arg3[%c6_411] : memref<8xf32, #tpu.memory_space<smem>>
    %c7_412 = arith.constant 7 : index
    %223 = memref.load %arg3[%c7_412] : memref<8xf32, #tpu.memory_space<smem>>
    %cst = arith.constant 0.000000e+00 : f32
    %224 = vector.broadcast %cst : f32 to vector<1x1xf32>
    %cst_413 = arith.constant 0.000000e+00 : f32
    %225 = vector.broadcast %cst_413 : f32 to vector<1x1xf32>
    %cst_414 = arith.constant 0.000000e+00 : f32
    %226 = vector.broadcast %cst_414 : f32 to vector<1x1xf32>
    %cst_415 = arith.constant 0.000000e+00 : f32
    %227 = vector.broadcast %cst_415 : f32 to vector<1x1xf32>
    %cst_416 = arith.constant 0.000000e+00 : f32
    %228 = vector.broadcast %cst_416 : f32 to vector<1x1xf32>
    %cst_417 = arith.constant 0.000000e+00 : f32
    %229 = vector.broadcast %cst_417 : f32 to vector<1x1xf32>
    %cst_418 = arith.constant 0.000000e+00 : f32
    %230 = vector.broadcast %cst_418 : f32 to vector<1x1xf32>
    %cst_419 = arith.constant 0.000000e+00 : f32
    %231 = vector.broadcast %cst_419 : f32 to vector<1x1xf32>
    %cst_420 = arith.constant 0.000000e+00 : f32
    %232 = vector.broadcast %cst_420 : f32 to vector<8x16xf32>
    %cst_421 = arith.constant 0.000000e+00 : f32
    %233 = vector.broadcast %cst_421 : f32 to vector<8x16xf32>
    %cst_422 = arith.constant 0.000000e+00 : f32
    %234 = vector.broadcast %cst_422 : f32 to vector<8x16xf32>
    %cst_423 = arith.constant 0.000000e+00 : f32
    %235 = vector.broadcast %cst_423 : f32 to vector<8x16xf32>
    %cst_424 = arith.constant 0.000000e+00 : f32
    %236 = vector.broadcast %cst_424 : f32 to vector<8x16xf32>
    %cst_425 = arith.constant 0.000000e+00 : f32
    %237 = vector.broadcast %cst_425 : f32 to vector<8x16xf32>
    %cst_426 = arith.constant 0.000000e+00 : f32
    %238 = vector.broadcast %cst_426 : f32 to vector<8x16xf32>
    %cst_427 = arith.constant 0.000000e+00 : f32
    %239 = vector.broadcast %cst_427 : f32 to vector<8x16xf32>
    %c0_428 = arith.constant 0 : index
    %c0_429 = arith.constant 0 : index
    %c0_430 = arith.constant 0 : index
    %c0_431 = arith.constant 0 : index
    %240 = vector.load %arg1[%c0_428, %c0_429, %c0_430, %c0_431] : memref<1x3x18x18xf32, #tpu.memory_space<vmem>>, vector<1x1x8x16xf32>
    %241 = vector.shape_cast %240 : vector<1x1x8x16xf32> to vector<8x16xf32>
    %242 = vector.broadcast %0 : f32 to vector<8x16xf32>
    %243 = arith.mulf %242, %241 : vector<8x16xf32>
    %244 = arith.addf %232, %243 : vector<8x16xf32>
    %245 = vector.broadcast %27 : f32 to vector<8x16xf32>
    %246 = arith.mulf %245, %241 : vector<8x16xf32>
    %247 = arith.addf %233, %246 : vector<8x16xf32>
    %248 = vector.broadcast %54 : f32 to vector<8x16xf32>
    %249 = arith.mulf %248, %241 : vector<8x16xf32>
    %250 = arith.addf %234, %249 : vector<8x16xf32>
    %251 = vector.broadcast %81 : f32 to vector<8x16xf32>
    %252 = arith.mulf %251, %241 : vector<8x16xf32>
    %253 = arith.addf %235, %252 : vector<8x16xf32>
    %254 = vector.broadcast %108 : f32 to vector<8x16xf32>
    %255 = arith.mulf %254, %241 : vector<8x16xf32>
    %256 = arith.addf %236, %255 : vector<8x16xf32>
    %257 = vector.broadcast %135 : f32 to vector<8x16xf32>
    %258 = arith.mulf %257, %241 : vector<8x16xf32>
    %259 = arith.addf %237, %258 : vector<8x16xf32>
    %260 = vector.broadcast %162 : f32 to vector<8x16xf32>
    %261 = arith.mulf %260, %241 : vector<8x16xf32>
    %262 = arith.addf %238, %261 : vector<8x16xf32>
    %263 = vector.broadcast %189 : f32 to vector<8x16xf32>
    %264 = arith.mulf %263, %241 : vector<8x16xf32>
    %265 = arith.addf %239, %264 : vector<8x16xf32>
    %c0_432 = arith.constant 0 : index
    %c1_433 = arith.constant 1 : index
    %c0_434 = arith.constant 0 : index
    %c0_435 = arith.constant 0 : index
    %266 = vector.load %arg1[%c0_432, %c1_433, %c0_434, %c0_435] : memref<1x3x18x18xf32, #tpu.memory_space<vmem>>, vector<1x1x8x16xf32>
    %267 = vector.shape_cast %266 : vector<1x1x8x16xf32> to vector<8x16xf32>
    %268 = vector.broadcast %1 : f32 to vector<8x16xf32>
    %269 = arith.mulf %268, %267 : vector<8x16xf32>
    %270 = arith.addf %244, %269 : vector<8x16xf32>
    %271 = vector.broadcast %28 : f32 to vector<8x16xf32>
    %272 = arith.mulf %271, %267 : vector<8x16xf32>
    %273 = arith.addf %247, %272 : vector<8x16xf32>
    %274 = vector.broadcast %55 : f32 to vector<8x16xf32>
    %275 = arith.mulf %274, %267 : vector<8x16xf32>
    %276 = arith.addf %250, %275 : vector<8x16xf32>
    %277 = vector.broadcast %82 : f32 to vector<8x16xf32>
    %278 = arith.mulf %277, %267 : vector<8x16xf32>
    %279 = arith.addf %253, %278 : vector<8x16xf32>
    %280 = vector.broadcast %109 : f32 to vector<8x16xf32>
    %281 = arith.mulf %280, %267 : vector<8x16xf32>
    %282 = arith.addf %256, %281 : vector<8x16xf32>
    %283 = vector.broadcast %136 : f32 to vector<8x16xf32>
    %284 = arith.mulf %283, %267 : vector<8x16xf32>
    %285 = arith.addf %259, %284 : vector<8x16xf32>
    %286 = vector.broadcast %163 : f32 to vector<8x16xf32>
    %287 = arith.mulf %286, %267 : vector<8x16xf32>
    %288 = arith.addf %262, %287 : vector<8x16xf32>
    %289 = vector.broadcast %190 : f32 to vector<8x16xf32>
    %290 = arith.mulf %289, %267 : vector<8x16xf32>
    %291 = arith.addf %265, %290 : vector<8x16xf32>
    %c0_436 = arith.constant 0 : index
    %c2_437 = arith.constant 2 : index
    %c0_438 = arith.constant 0 : index
    %c0_439 = arith.constant 0 : index
    %292 = vector.load %arg1[%c0_436, %c2_437, %c0_438, %c0_439] : memref<1x3x18x18xf32, #tpu.memory_space<vmem>>, vector<1x1x8x16xf32>
    %293 = vector.shape_cast %292 : vector<1x1x8x16xf32> to vector<8x16xf32>
    %294 = vector.broadcast %2 : f32 to vector<8x16xf32>
    %295 = arith.mulf %294, %293 : vector<8x16xf32>
    %296 = arith.addf %270, %295 : vector<8x16xf32>
    %297 = vector.broadcast %29 : f32 to vector<8x16xf32>
    %298 = arith.mulf %297, %293 : vector<8x16xf32>
    %299 = arith.addf %273, %298 : vector<8x16xf32>
    %300 = vector.broadcast %56 : f32 to vector<8x16xf32>
    %301 = arith.mulf %300, %293 : vector<8x16xf32>
    %302 = arith.addf %276, %301 : vector<8x16xf32>
    %303 = vector.broadcast %83 : f32 to vector<8x16xf32>
    %304 = arith.mulf %303, %293 : vector<8x16xf32>
    %305 = arith.addf %279, %304 : vector<8x16xf32>
    %306 = vector.broadcast %110 : f32 to vector<8x16xf32>
    %307 = arith.mulf %306, %293 : vector<8x16xf32>
    %308 = arith.addf %282, %307 : vector<8x16xf32>
    %309 = vector.broadcast %137 : f32 to vector<8x16xf32>
    %310 = arith.mulf %309, %293 : vector<8x16xf32>
    %311 = arith.addf %285, %310 : vector<8x16xf32>
    %312 = vector.broadcast %164 : f32 to vector<8x16xf32>
    %313 = arith.mulf %312, %293 : vector<8x16xf32>
    %314 = arith.addf %288, %313 : vector<8x16xf32>
    %315 = vector.broadcast %191 : f32 to vector<8x16xf32>
    %316 = arith.mulf %315, %293 : vector<8x16xf32>
    %317 = arith.addf %291, %316 : vector<8x16xf32>
    %c0_440 = arith.constant 0 : index
    %c0_441 = arith.constant 0 : index
    %c0_442 = arith.constant 0 : index
    %c1_443 = arith.constant 1 : index
    %318 = vector.load %arg1[%c0_440, %c0_441, %c0_442, %c1_443] : memref<1x3x18x18xf32, #tpu.memory_space<vmem>>, vector<1x1x8x16xf32>
    %319 = vector.shape_cast %318 : vector<1x1x8x16xf32> to vector<8x16xf32>
    %320 = vector.broadcast %3 : f32 to vector<8x16xf32>
    %321 = arith.mulf %320, %319 : vector<8x16xf32>
    %322 = arith.addf %296, %321 : vector<8x16xf32>
    %323 = vector.broadcast %30 : f32 to vector<8x16xf32>
    %324 = arith.mulf %323, %319 : vector<8x16xf32>
    %325 = arith.addf %299, %324 : vector<8x16xf32>
    %326 = vector.broadcast %57 : f32 to vector<8x16xf32>
    %327 = arith.mulf %326, %319 : vector<8x16xf32>
    %328 = arith.addf %302, %327 : vector<8x16xf32>
    %329 = vector.broadcast %84 : f32 to vector<8x16xf32>
    %330 = arith.mulf %329, %319 : vector<8x16xf32>
    %331 = arith.addf %305, %330 : vector<8x16xf32>
    %332 = vector.broadcast %111 : f32 to vector<8x16xf32>
    %333 = arith.mulf %332, %319 : vector<8x16xf32>
    %334 = arith.addf %308, %333 : vector<8x16xf32>
    %335 = vector.broadcast %138 : f32 to vector<8x16xf32>
    %336 = arith.mulf %335, %319 : vector<8x16xf32>
    %337 = arith.addf %311, %336 : vector<8x16xf32>
    %338 = vector.broadcast %165 : f32 to vector<8x16xf32>
    %339 = arith.mulf %338, %319 : vector<8x16xf32>
    %340 = arith.addf %314, %339 : vector<8x16xf32>
    %341 = vector.broadcast %192 : f32 to vector<8x16xf32>
    %342 = arith.mulf %341, %319 : vector<8x16xf32>
    %343 = arith.addf %317, %342 : vector<8x16xf32>
    %c0_444 = arith.constant 0 : index
    %c1_445 = arith.constant 1 : index
    %c0_446 = arith.constant 0 : index
    %c1_447 = arith.constant 1 : index
    %344 = vector.load %arg1[%c0_444, %c1_445, %c0_446, %c1_447] : memref<1x3x18x18xf32, #tpu.memory_space<vmem>>, vector<1x1x8x16xf32>
    %345 = vector.shape_cast %344 : vector<1x1x8x16xf32> to vector<8x16xf32>
    %346 = vector.broadcast %4 : f32 to vector<8x16xf32>
    %347 = arith.mulf %346, %345 : vector<8x16xf32>
    %348 = arith.addf %322, %347 : vector<8x16xf32>
    %349 = vector.broadcast %31 : f32 to vector<8x16xf32>
    %350 = arith.mulf %349, %345 : vector<8x16xf32>
    %351 = arith.addf %325, %350 : vector<8x16xf32>
    %352 = vector.broadcast %58 : f32 to vector<8x16xf32>
    %353 = arith.mulf %352, %345 : vector<8x16xf32>
    %354 = arith.addf %328, %353 : vector<8x16xf32>
    %355 = vector.broadcast %85 : f32 to vector<8x16xf32>
    %356 = arith.mulf %355, %345 : vector<8x16xf32>
    %357 = arith.addf %331, %356 : vector<8x16xf32>
    %358 = vector.broadcast %112 : f32 to vector<8x16xf32>
    %359 = arith.mulf %358, %345 : vector<8x16xf32>
    %360 = arith.addf %334, %359 : vector<8x16xf32>
    %361 = vector.broadcast %139 : f32 to vector<8x16xf32>
    %362 = arith.mulf %361, %345 : vector<8x16xf32>
    %363 = arith.addf %337, %362 : vector<8x16xf32>
    %364 = vector.broadcast %166 : f32 to vector<8x16xf32>
    %365 = arith.mulf %364, %345 : vector<8x16xf32>
    %366 = arith.addf %340, %365 : vector<8x16xf32>
    %367 = vector.broadcast %193 : f32 to vector<8x16xf32>
    %368 = arith.mulf %367, %345 : vector<8x16xf32>
    %369 = arith.addf %343, %368 : vector<8x16xf32>
    %c0_448 = arith.constant 0 : index
    %c2_449 = arith.constant 2 : index
    %c0_450 = arith.constant 0 : index
    %c1_451 = arith.constant 1 : index
    %370 = vector.load %arg1[%c0_448, %c2_449, %c0_450, %c1_451] : memref<1x3x18x18xf32, #tpu.memory_space<vmem>>, vector<1x1x8x16xf32>
    %371 = vector.shape_cast %370 : vector<1x1x8x16xf32> to vector<8x16xf32>
    %372 = vector.broadcast %5 : f32 to vector<8x16xf32>
    %373 = arith.mulf %372, %371 : vector<8x16xf32>
    %374 = arith.addf %348, %373 : vector<8x16xf32>
    %375 = vector.broadcast %32 : f32 to vector<8x16xf32>
    %376 = arith.mulf %375, %371 : vector<8x16xf32>
    %377 = arith.addf %351, %376 : vector<8x16xf32>
    %378 = vector.broadcast %59 : f32 to vector<8x16xf32>
    %379 = arith.mulf %378, %371 : vector<8x16xf32>
    %380 = arith.addf %354, %379 : vector<8x16xf32>
    %381 = vector.broadcast %86 : f32 to vector<8x16xf32>
    %382 = arith.mulf %381, %371 : vector<8x16xf32>
    %383 = arith.addf %357, %382 : vector<8x16xf32>
    %384 = vector.broadcast %113 : f32 to vector<8x16xf32>
    %385 = arith.mulf %384, %371 : vector<8x16xf32>
    %386 = arith.addf %360, %385 : vector<8x16xf32>
    %387 = vector.broadcast %140 : f32 to vector<8x16xf32>
    %388 = arith.mulf %387, %371 : vector<8x16xf32>
    %389 = arith.addf %363, %388 : vector<8x16xf32>
    %390 = vector.broadcast %167 : f32 to vector<8x16xf32>
    %391 = arith.mulf %390, %371 : vector<8x16xf32>
    %392 = arith.addf %366, %391 : vector<8x16xf32>
    %393 = vector.broadcast %194 : f32 to vector<8x16xf32>
    %394 = arith.mulf %393, %371 : vector<8x16xf32>
    %395 = arith.addf %369, %394 : vector<8x16xf32>
    %c0_452 = arith.constant 0 : index
    %c0_453 = arith.constant 0 : index
    %c0_454 = arith.constant 0 : index
    %c2_455 = arith.constant 2 : index
    %396 = vector.load %arg1[%c0_452, %c0_453, %c0_454, %c2_455] : memref<1x3x18x18xf32, #tpu.memory_space<vmem>>, vector<1x1x8x16xf32>
    %397 = vector.shape_cast %396 : vector<1x1x8x16xf32> to vector<8x16xf32>
    %398 = vector.broadcast %6 : f32 to vector<8x16xf32>
    %399 = arith.mulf %398, %397 : vector<8x16xf32>
    %400 = arith.addf %374, %399 : vector<8x16xf32>
    %401 = vector.broadcast %33 : f32 to vector<8x16xf32>
    %402 = arith.mulf %401, %397 : vector<8x16xf32>
    %403 = arith.addf %377, %402 : vector<8x16xf32>
    %404 = vector.broadcast %60 : f32 to vector<8x16xf32>
    %405 = arith.mulf %404, %397 : vector<8x16xf32>
    %406 = arith.addf %380, %405 : vector<8x16xf32>
    %407 = vector.broadcast %87 : f32 to vector<8x16xf32>
    %408 = arith.mulf %407, %397 : vector<8x16xf32>
    %409 = arith.addf %383, %408 : vector<8x16xf32>
    %410 = vector.broadcast %114 : f32 to vector<8x16xf32>
    %411 = arith.mulf %410, %397 : vector<8x16xf32>
    %412 = arith.addf %386, %411 : vector<8x16xf32>
    %413 = vector.broadcast %141 : f32 to vector<8x16xf32>
    %414 = arith.mulf %413, %397 : vector<8x16xf32>
    %415 = arith.addf %389, %414 : vector<8x16xf32>
    %416 = vector.broadcast %168 : f32 to vector<8x16xf32>
    %417 = arith.mulf %416, %397 : vector<8x16xf32>
    %418 = arith.addf %392, %417 : vector<8x16xf32>
    %419 = vector.broadcast %195 : f32 to vector<8x16xf32>
    %420 = arith.mulf %419, %397 : vector<8x16xf32>
    %421 = arith.addf %395, %420 : vector<8x16xf32>
    %c0_456 = arith.constant 0 : index
    %c1_457 = arith.constant 1 : index
    %c0_458 = arith.constant 0 : index
    %c2_459 = arith.constant 2 : index
    %422 = vector.load %arg1[%c0_456, %c1_457, %c0_458, %c2_459] : memref<1x3x18x18xf32, #tpu.memory_space<vmem>>, vector<1x1x8x16xf32>
    %423 = vector.shape_cast %422 : vector<1x1x8x16xf32> to vector<8x16xf32>
    %424 = vector.broadcast %7 : f32 to vector<8x16xf32>
    %425 = arith.mulf %424, %423 : vector<8x16xf32>
    %426 = arith.addf %400, %425 : vector<8x16xf32>
    %427 = vector.broadcast %34 : f32 to vector<8x16xf32>
    %428 = arith.mulf %427, %423 : vector<8x16xf32>
    %429 = arith.addf %403, %428 : vector<8x16xf32>
    %430 = vector.broadcast %61 : f32 to vector<8x16xf32>
    %431 = arith.mulf %430, %423 : vector<8x16xf32>
    %432 = arith.addf %406, %431 : vector<8x16xf32>
    %433 = vector.broadcast %88 : f32 to vector<8x16xf32>
    %434 = arith.mulf %433, %423 : vector<8x16xf32>
    %435 = arith.addf %409, %434 : vector<8x16xf32>
    %436 = vector.broadcast %115 : f32 to vector<8x16xf32>
    %437 = arith.mulf %436, %423 : vector<8x16xf32>
    %438 = arith.addf %412, %437 : vector<8x16xf32>
    %439 = vector.broadcast %142 : f32 to vector<8x16xf32>
    %440 = arith.mulf %439, %423 : vector<8x16xf32>
    %441 = arith.addf %415, %440 : vector<8x16xf32>
    %442 = vector.broadcast %169 : f32 to vector<8x16xf32>
    %443 = arith.mulf %442, %423 : vector<8x16xf32>
    %444 = arith.addf %418, %443 : vector<8x16xf32>
    %445 = vector.broadcast %196 : f32 to vector<8x16xf32>
    %446 = arith.mulf %445, %423 : vector<8x16xf32>
    %447 = arith.addf %421, %446 : vector<8x16xf32>
    %c0_460 = arith.constant 0 : index
    %c2_461 = arith.constant 2 : index
    %c0_462 = arith.constant 0 : index
    %c2_463 = arith.constant 2 : index
    %448 = vector.load %arg1[%c0_460, %c2_461, %c0_462, %c2_463] : memref<1x3x18x18xf32, #tpu.memory_space<vmem>>, vector<1x1x8x16xf32>
    %449 = vector.shape_cast %448 : vector<1x1x8x16xf32> to vector<8x16xf32>
    %450 = vector.broadcast %8 : f32 to vector<8x16xf32>
    %451 = arith.mulf %450, %449 : vector<8x16xf32>
    %452 = arith.addf %426, %451 : vector<8x16xf32>
    %453 = vector.broadcast %35 : f32 to vector<8x16xf32>
    %454 = arith.mulf %453, %449 : vector<8x16xf32>
    %455 = arith.addf %429, %454 : vector<8x16xf32>
    %456 = vector.broadcast %62 : f32 to vector<8x16xf32>
    %457 = arith.mulf %456, %449 : vector<8x16xf32>
    %458 = arith.addf %432, %457 : vector<8x16xf32>
    %459 = vector.broadcast %89 : f32 to vector<8x16xf32>
    %460 = arith.mulf %459, %449 : vector<8x16xf32>
    %461 = arith.addf %435, %460 : vector<8x16xf32>
    %462 = vector.broadcast %116 : f32 to vector<8x16xf32>
    %463 = arith.mulf %462, %449 : vector<8x16xf32>
    %464 = arith.addf %438, %463 : vector<8x16xf32>
    %465 = vector.broadcast %143 : f32 to vector<8x16xf32>
    %466 = arith.mulf %465, %449 : vector<8x16xf32>
    %467 = arith.addf %441, %466 : vector<8x16xf32>
    %468 = vector.broadcast %170 : f32 to vector<8x16xf32>
    %469 = arith.mulf %468, %449 : vector<8x16xf32>
    %470 = arith.addf %444, %469 : vector<8x16xf32>
    %471 = vector.broadcast %197 : f32 to vector<8x16xf32>
    %472 = arith.mulf %471, %449 : vector<8x16xf32>
    %473 = arith.addf %447, %472 : vector<8x16xf32>
    %c0_464 = arith.constant 0 : index
    %c0_465 = arith.constant 0 : index
    %c1_466 = arith.constant 1 : index
    %c0_467 = arith.constant 0 : index
    %474 = vector.load %arg1[%c0_464, %c0_465, %c1_466, %c0_467] : memref<1x3x18x18xf32, #tpu.memory_space<vmem>>, vector<1x1x8x16xf32>
    %475 = vector.shape_cast %474 : vector<1x1x8x16xf32> to vector<8x16xf32>
    %476 = vector.broadcast %9 : f32 to vector<8x16xf32>
    %477 = arith.mulf %476, %475 : vector<8x16xf32>
    %478 = arith.addf %452, %477 : vector<8x16xf32>
    %479 = vector.broadcast %36 : f32 to vector<8x16xf32>
    %480 = arith.mulf %479, %475 : vector<8x16xf32>
    %481 = arith.addf %455, %480 : vector<8x16xf32>
    %482 = vector.broadcast %63 : f32 to vector<8x16xf32>
    %483 = arith.mulf %482, %475 : vector<8x16xf32>
    %484 = arith.addf %458, %483 : vector<8x16xf32>
    %485 = vector.broadcast %90 : f32 to vector<8x16xf32>
    %486 = arith.mulf %485, %475 : vector<8x16xf32>
    %487 = arith.addf %461, %486 : vector<8x16xf32>
    %488 = vector.broadcast %117 : f32 to vector<8x16xf32>
    %489 = arith.mulf %488, %475 : vector<8x16xf32>
    %490 = arith.addf %464, %489 : vector<8x16xf32>
    %491 = vector.broadcast %144 : f32 to vector<8x16xf32>
    %492 = arith.mulf %491, %475 : vector<8x16xf32>
    %493 = arith.addf %467, %492 : vector<8x16xf32>
    %494 = vector.broadcast %171 : f32 to vector<8x16xf32>
    %495 = arith.mulf %494, %475 : vector<8x16xf32>
    %496 = arith.addf %470, %495 : vector<8x16xf32>
    %497 = vector.broadcast %198 : f32 to vector<8x16xf32>
    %498 = arith.mulf %497, %475 : vector<8x16xf32>
    %499 = arith.addf %473, %498 : vector<8x16xf32>
    %c0_468 = arith.constant 0 : index
    %c1_469 = arith.constant 1 : index
    %c1_470 = arith.constant 1 : index
    %c0_471 = arith.constant 0 : index
    %500 = vector.load %arg1[%c0_468, %c1_469, %c1_470, %c0_471] : memref<1x3x18x18xf32, #tpu.memory_space<vmem>>, vector<1x1x8x16xf32>
    %501 = vector.shape_cast %500 : vector<1x1x8x16xf32> to vector<8x16xf32>
    %502 = vector.broadcast %10 : f32 to vector<8x16xf32>
    %503 = arith.mulf %502, %501 : vector<8x16xf32>
    %504 = arith.addf %478, %503 : vector<8x16xf32>
    %505 = vector.broadcast %37 : f32 to vector<8x16xf32>
    %506 = arith.mulf %505, %501 : vector<8x16xf32>
    %507 = arith.addf %481, %506 : vector<8x16xf32>
    %508 = vector.broadcast %64 : f32 to vector<8x16xf32>
    %509 = arith.mulf %508, %501 : vector<8x16xf32>
    %510 = arith.addf %484, %509 : vector<8x16xf32>
    %511 = vector.broadcast %91 : f32 to vector<8x16xf32>
    %512 = arith.mulf %511, %501 : vector<8x16xf32>
    %513 = arith.addf %487, %512 : vector<8x16xf32>
    %514 = vector.broadcast %118 : f32 to vector<8x16xf32>
    %515 = arith.mulf %514, %501 : vector<8x16xf32>
    %516 = arith.addf %490, %515 : vector<8x16xf32>
    %517 = vector.broadcast %145 : f32 to vector<8x16xf32>
    %518 = arith.mulf %517, %501 : vector<8x16xf32>
    %519 = arith.addf %493, %518 : vector<8x16xf32>
    %520 = vector.broadcast %172 : f32 to vector<8x16xf32>
    %521 = arith.mulf %520, %501 : vector<8x16xf32>
    %522 = arith.addf %496, %521 : vector<8x16xf32>
    %523 = vector.broadcast %199 : f32 to vector<8x16xf32>
    %524 = arith.mulf %523, %501 : vector<8x16xf32>
    %525 = arith.addf %499, %524 : vector<8x16xf32>
    %c0_472 = arith.constant 0 : index
    %c2_473 = arith.constant 2 : index
    %c1_474 = arith.constant 1 : index
    %c0_475 = arith.constant 0 : index
    %526 = vector.load %arg1[%c0_472, %c2_473, %c1_474, %c0_475] : memref<1x3x18x18xf32, #tpu.memory_space<vmem>>, vector<1x1x8x16xf32>
    %527 = vector.shape_cast %526 : vector<1x1x8x16xf32> to vector<8x16xf32>
    %528 = vector.broadcast %11 : f32 to vector<8x16xf32>
    %529 = arith.mulf %528, %527 : vector<8x16xf32>
    %530 = arith.addf %504, %529 : vector<8x16xf32>
    %531 = vector.broadcast %38 : f32 to vector<8x16xf32>
    %532 = arith.mulf %531, %527 : vector<8x16xf32>
    %533 = arith.addf %507, %532 : vector<8x16xf32>
    %534 = vector.broadcast %65 : f32 to vector<8x16xf32>
    %535 = arith.mulf %534, %527 : vector<8x16xf32>
    %536 = arith.addf %510, %535 : vector<8x16xf32>
    %537 = vector.broadcast %92 : f32 to vector<8x16xf32>
    %538 = arith.mulf %537, %527 : vector<8x16xf32>
    %539 = arith.addf %513, %538 : vector<8x16xf32>
    %540 = vector.broadcast %119 : f32 to vector<8x16xf32>
    %541 = arith.mulf %540, %527 : vector<8x16xf32>
    %542 = arith.addf %516, %541 : vector<8x16xf32>
    %543 = vector.broadcast %146 : f32 to vector<8x16xf32>
    %544 = arith.mulf %543, %527 : vector<8x16xf32>
    %545 = arith.addf %519, %544 : vector<8x16xf32>
    %546 = vector.broadcast %173 : f32 to vector<8x16xf32>
    %547 = arith.mulf %546, %527 : vector<8x16xf32>
    %548 = arith.addf %522, %547 : vector<8x16xf32>
    %549 = vector.broadcast %200 : f32 to vector<8x16xf32>
    %550 = arith.mulf %549, %527 : vector<8x16xf32>
    %551 = arith.addf %525, %550 : vector<8x16xf32>
    %c0_476 = arith.constant 0 : index
    %c0_477 = arith.constant 0 : index
    %c1_478 = arith.constant 1 : index
    %c1_479 = arith.constant 1 : index
    %552 = vector.load %arg1[%c0_476, %c0_477, %c1_478, %c1_479] : memref<1x3x18x18xf32, #tpu.memory_space<vmem>>, vector<1x1x8x16xf32>
    %553 = vector.shape_cast %552 : vector<1x1x8x16xf32> to vector<8x16xf32>
    %554 = vector.broadcast %12 : f32 to vector<8x16xf32>
    %555 = arith.mulf %554, %553 : vector<8x16xf32>
    %556 = arith.addf %530, %555 : vector<8x16xf32>
    %557 = vector.broadcast %39 : f32 to vector<8x16xf32>
    %558 = arith.mulf %557, %553 : vector<8x16xf32>
    %559 = arith.addf %533, %558 : vector<8x16xf32>
    %560 = vector.broadcast %66 : f32 to vector<8x16xf32>
    %561 = arith.mulf %560, %553 : vector<8x16xf32>
    %562 = arith.addf %536, %561 : vector<8x16xf32>
    %563 = vector.broadcast %93 : f32 to vector<8x16xf32>
    %564 = arith.mulf %563, %553 : vector<8x16xf32>
    %565 = arith.addf %539, %564 : vector<8x16xf32>
    %566 = vector.broadcast %120 : f32 to vector<8x16xf32>
    %567 = arith.mulf %566, %553 : vector<8x16xf32>
    %568 = arith.addf %542, %567 : vector<8x16xf32>
    %569 = vector.broadcast %147 : f32 to vector<8x16xf32>
    %570 = arith.mulf %569, %553 : vector<8x16xf32>
    %571 = arith.addf %545, %570 : vector<8x16xf32>
    %572 = vector.broadcast %174 : f32 to vector<8x16xf32>
    %573 = arith.mulf %572, %553 : vector<8x16xf32>
    %574 = arith.addf %548, %573 : vector<8x16xf32>
    %575 = vector.broadcast %201 : f32 to vector<8x16xf32>
    %576 = arith.mulf %575, %553 : vector<8x16xf32>
    %577 = arith.addf %551, %576 : vector<8x16xf32>
    %c0_480 = arith.constant 0 : index
    %c1_481 = arith.constant 1 : index
    %c1_482 = arith.constant 1 : index
    %c1_483 = arith.constant 1 : index
    %578 = vector.load %arg1[%c0_480, %c1_481, %c1_482, %c1_483] : memref<1x3x18x18xf32, #tpu.memory_space<vmem>>, vector<1x1x8x16xf32>
    %579 = vector.shape_cast %578 : vector<1x1x8x16xf32> to vector<8x16xf32>
    %580 = vector.broadcast %13 : f32 to vector<8x16xf32>
    %581 = arith.mulf %580, %579 : vector<8x16xf32>
    %582 = arith.addf %556, %581 : vector<8x16xf32>
    %583 = vector.broadcast %40 : f32 to vector<8x16xf32>
    %584 = arith.mulf %583, %579 : vector<8x16xf32>
    %585 = arith.addf %559, %584 : vector<8x16xf32>
    %586 = vector.broadcast %67 : f32 to vector<8x16xf32>
    %587 = arith.mulf %586, %579 : vector<8x16xf32>
    %588 = arith.addf %562, %587 : vector<8x16xf32>
    %589 = vector.broadcast %94 : f32 to vector<8x16xf32>
    %590 = arith.mulf %589, %579 : vector<8x16xf32>
    %591 = arith.addf %565, %590 : vector<8x16xf32>
    %592 = vector.broadcast %121 : f32 to vector<8x16xf32>
    %593 = arith.mulf %592, %579 : vector<8x16xf32>
    %594 = arith.addf %568, %593 : vector<8x16xf32>
    %595 = vector.broadcast %148 : f32 to vector<8x16xf32>
    %596 = arith.mulf %595, %579 : vector<8x16xf32>
    %597 = arith.addf %571, %596 : vector<8x16xf32>
    %598 = vector.broadcast %175 : f32 to vector<8x16xf32>
    %599 = arith.mulf %598, %579 : vector<8x16xf32>
    %600 = arith.addf %574, %599 : vector<8x16xf32>
    %601 = vector.broadcast %202 : f32 to vector<8x16xf32>
    %602 = arith.mulf %601, %579 : vector<8x16xf32>
    %603 = arith.addf %577, %602 : vector<8x16xf32>
    %c0_484 = arith.constant 0 : index
    %c2_485 = arith.constant 2 : index
    %c1_486 = arith.constant 1 : index
    %c1_487 = arith.constant 1 : index
    %604 = vector.load %arg1[%c0_484, %c2_485, %c1_486, %c1_487] : memref<1x3x18x18xf32, #tpu.memory_space<vmem>>, vector<1x1x8x16xf32>
    %605 = vector.shape_cast %604 : vector<1x1x8x16xf32> to vector<8x16xf32>
    %606 = vector.broadcast %14 : f32 to vector<8x16xf32>
    %607 = arith.mulf %606, %605 : vector<8x16xf32>
    %608 = arith.addf %582, %607 : vector<8x16xf32>
    %609 = vector.broadcast %41 : f32 to vector<8x16xf32>
    %610 = arith.mulf %609, %605 : vector<8x16xf32>
    %611 = arith.addf %585, %610 : vector<8x16xf32>
    %612 = vector.broadcast %68 : f32 to vector<8x16xf32>
    %613 = arith.mulf %612, %605 : vector<8x16xf32>
    %614 = arith.addf %588, %613 : vector<8x16xf32>
    %615 = vector.broadcast %95 : f32 to vector<8x16xf32>
    %616 = arith.mulf %615, %605 : vector<8x16xf32>
    %617 = arith.addf %591, %616 : vector<8x16xf32>
    %618 = vector.broadcast %122 : f32 to vector<8x16xf32>
    %619 = arith.mulf %618, %605 : vector<8x16xf32>
    %620 = arith.addf %594, %619 : vector<8x16xf32>
    %621 = vector.broadcast %149 : f32 to vector<8x16xf32>
    %622 = arith.mulf %621, %605 : vector<8x16xf32>
    %623 = arith.addf %597, %622 : vector<8x16xf32>
    %624 = vector.broadcast %176 : f32 to vector<8x16xf32>
    %625 = arith.mulf %624, %605 : vector<8x16xf32>
    %626 = arith.addf %600, %625 : vector<8x16xf32>
    %627 = vector.broadcast %203 : f32 to vector<8x16xf32>
    %628 = arith.mulf %627, %605 : vector<8x16xf32>
    %629 = arith.addf %603, %628 : vector<8x16xf32>
    %c0_488 = arith.constant 0 : index
    %c0_489 = arith.constant 0 : index
    %c1_490 = arith.constant 1 : index
    %c2_491 = arith.constant 2 : index
    %630 = vector.load %arg1[%c0_488, %c0_489, %c1_490, %c2_491] : memref<1x3x18x18xf32, #tpu.memory_space<vmem>>, vector<1x1x8x16xf32>
    %631 = vector.shape_cast %630 : vector<1x1x8x16xf32> to vector<8x16xf32>
    %632 = vector.broadcast %15 : f32 to vector<8x16xf32>
    %633 = arith.mulf %632, %631 : vector<8x16xf32>
    %634 = arith.addf %608, %633 : vector<8x16xf32>
    %635 = vector.broadcast %42 : f32 to vector<8x16xf32>
    %636 = arith.mulf %635, %631 : vector<8x16xf32>
    %637 = arith.addf %611, %636 : vector<8x16xf32>
    %638 = vector.broadcast %69 : f32 to vector<8x16xf32>
    %639 = arith.mulf %638, %631 : vector<8x16xf32>
    %640 = arith.addf %614, %639 : vector<8x16xf32>
    %641 = vector.broadcast %96 : f32 to vector<8x16xf32>
    %642 = arith.mulf %641, %631 : vector<8x16xf32>
    %643 = arith.addf %617, %642 : vector<8x16xf32>
    %644 = vector.broadcast %123 : f32 to vector<8x16xf32>
    %645 = arith.mulf %644, %631 : vector<8x16xf32>
    %646 = arith.addf %620, %645 : vector<8x16xf32>
    %647 = vector.broadcast %150 : f32 to vector<8x16xf32>
    %648 = arith.mulf %647, %631 : vector<8x16xf32>
    %649 = arith.addf %623, %648 : vector<8x16xf32>
    %650 = vector.broadcast %177 : f32 to vector<8x16xf32>
    %651 = arith.mulf %650, %631 : vector<8x16xf32>
    %652 = arith.addf %626, %651 : vector<8x16xf32>
    %653 = vector.broadcast %204 : f32 to vector<8x16xf32>
    %654 = arith.mulf %653, %631 : vector<8x16xf32>
    %655 = arith.addf %629, %654 : vector<8x16xf32>
    %c0_492 = arith.constant 0 : index
    %c1_493 = arith.constant 1 : index
    %c1_494 = arith.constant 1 : index
    %c2_495 = arith.constant 2 : index
    %656 = vector.load %arg1[%c0_492, %c1_493, %c1_494, %c2_495] : memref<1x3x18x18xf32, #tpu.memory_space<vmem>>, vector<1x1x8x16xf32>
    %657 = vector.shape_cast %656 : vector<1x1x8x16xf32> to vector<8x16xf32>
    %658 = vector.broadcast %16 : f32 to vector<8x16xf32>
    %659 = arith.mulf %658, %657 : vector<8x16xf32>
    %660 = arith.addf %634, %659 : vector<8x16xf32>
    %661 = vector.broadcast %43 : f32 to vector<8x16xf32>
    %662 = arith.mulf %661, %657 : vector<8x16xf32>
    %663 = arith.addf %637, %662 : vector<8x16xf32>
    %664 = vector.broadcast %70 : f32 to vector<8x16xf32>
    %665 = arith.mulf %664, %657 : vector<8x16xf32>
    %666 = arith.addf %640, %665 : vector<8x16xf32>
    %667 = vector.broadcast %97 : f32 to vector<8x16xf32>
    %668 = arith.mulf %667, %657 : vector<8x16xf32>
    %669 = arith.addf %643, %668 : vector<8x16xf32>
    %670 = vector.broadcast %124 : f32 to vector<8x16xf32>
    %671 = arith.mulf %670, %657 : vector<8x16xf32>
    %672 = arith.addf %646, %671 : vector<8x16xf32>
    %673 = vector.broadcast %151 : f32 to vector<8x16xf32>
    %674 = arith.mulf %673, %657 : vector<8x16xf32>
    %675 = arith.addf %649, %674 : vector<8x16xf32>
    %676 = vector.broadcast %178 : f32 to vector<8x16xf32>
    %677 = arith.mulf %676, %657 : vector<8x16xf32>
    %678 = arith.addf %652, %677 : vector<8x16xf32>
    %679 = vector.broadcast %205 : f32 to vector<8x16xf32>
    %680 = arith.mulf %679, %657 : vector<8x16xf32>
    %681 = arith.addf %655, %680 : vector<8x16xf32>
    %c0_496 = arith.constant 0 : index
    %c2_497 = arith.constant 2 : index
    %c1_498 = arith.constant 1 : index
    %c2_499 = arith.constant 2 : index
    %682 = vector.load %arg1[%c0_496, %c2_497, %c1_498, %c2_499] : memref<1x3x18x18xf32, #tpu.memory_space<vmem>>, vector<1x1x8x16xf32>
    %683 = vector.shape_cast %682 : vector<1x1x8x16xf32> to vector<8x16xf32>
    %684 = vector.broadcast %17 : f32 to vector<8x16xf32>
    %685 = arith.mulf %684, %683 : vector<8x16xf32>
    %686 = arith.addf %660, %685 : vector<8x16xf32>
    %687 = vector.broadcast %44 : f32 to vector<8x16xf32>
    %688 = arith.mulf %687, %683 : vector<8x16xf32>
    %689 = arith.addf %663, %688 : vector<8x16xf32>
    %690 = vector.broadcast %71 : f32 to vector<8x16xf32>
    %691 = arith.mulf %690, %683 : vector<8x16xf32>
    %692 = arith.addf %666, %691 : vector<8x16xf32>
    %693 = vector.broadcast %98 : f32 to vector<8x16xf32>
    %694 = arith.mulf %693, %683 : vector<8x16xf32>
    %695 = arith.addf %669, %694 : vector<8x16xf32>
    %696 = vector.broadcast %125 : f32 to vector<8x16xf32>
    %697 = arith.mulf %696, %683 : vector<8x16xf32>
    %698 = arith.addf %672, %697 : vector<8x16xf32>
    %699 = vector.broadcast %152 : f32 to vector<8x16xf32>
    %700 = arith.mulf %699, %683 : vector<8x16xf32>
    %701 = arith.addf %675, %700 : vector<8x16xf32>
    %702 = vector.broadcast %179 : f32 to vector<8x16xf32>
    %703 = arith.mulf %702, %683 : vector<8x16xf32>
    %704 = arith.addf %678, %703 : vector<8x16xf32>
    %705 = vector.broadcast %206 : f32 to vector<8x16xf32>
    %706 = arith.mulf %705, %683 : vector<8x16xf32>
    %707 = arith.addf %681, %706 : vector<8x16xf32>
    %c0_500 = arith.constant 0 : index
    %c0_501 = arith.constant 0 : index
    %c2_502 = arith.constant 2 : index
    %c0_503 = arith.constant 0 : index
    %708 = vector.load %arg1[%c0_500, %c0_501, %c2_502, %c0_503] : memref<1x3x18x18xf32, #tpu.memory_space<vmem>>, vector<1x1x8x16xf32>
    %709 = vector.shape_cast %708 : vector<1x1x8x16xf32> to vector<8x16xf32>
    %710 = vector.broadcast %18 : f32 to vector<8x16xf32>
    %711 = arith.mulf %710, %709 : vector<8x16xf32>
    %712 = arith.addf %686, %711 : vector<8x16xf32>
    %713 = vector.broadcast %45 : f32 to vector<8x16xf32>
    %714 = arith.mulf %713, %709 : vector<8x16xf32>
    %715 = arith.addf %689, %714 : vector<8x16xf32>
    %716 = vector.broadcast %72 : f32 to vector<8x16xf32>
    %717 = arith.mulf %716, %709 : vector<8x16xf32>
    %718 = arith.addf %692, %717 : vector<8x16xf32>
    %719 = vector.broadcast %99 : f32 to vector<8x16xf32>
    %720 = arith.mulf %719, %709 : vector<8x16xf32>
    %721 = arith.addf %695, %720 : vector<8x16xf32>
    %722 = vector.broadcast %126 : f32 to vector<8x16xf32>
    %723 = arith.mulf %722, %709 : vector<8x16xf32>
    %724 = arith.addf %698, %723 : vector<8x16xf32>
    %725 = vector.broadcast %153 : f32 to vector<8x16xf32>
    %726 = arith.mulf %725, %709 : vector<8x16xf32>
    %727 = arith.addf %701, %726 : vector<8x16xf32>
    %728 = vector.broadcast %180 : f32 to vector<8x16xf32>
    %729 = arith.mulf %728, %709 : vector<8x16xf32>
    %730 = arith.addf %704, %729 : vector<8x16xf32>
    %731 = vector.broadcast %207 : f32 to vector<8x16xf32>
    %732 = arith.mulf %731, %709 : vector<8x16xf32>
    %733 = arith.addf %707, %732 : vector<8x16xf32>
    %c0_504 = arith.constant 0 : index
    %c1_505 = arith.constant 1 : index
    %c2_506 = arith.constant 2 : index
    %c0_507 = arith.constant 0 : index
    %734 = vector.load %arg1[%c0_504, %c1_505, %c2_506, %c0_507] : memref<1x3x18x18xf32, #tpu.memory_space<vmem>>, vector<1x1x8x16xf32>
    %735 = vector.shape_cast %734 : vector<1x1x8x16xf32> to vector<8x16xf32>
    %736 = vector.broadcast %19 : f32 to vector<8x16xf32>
    %737 = arith.mulf %736, %735 : vector<8x16xf32>
    %738 = arith.addf %712, %737 : vector<8x16xf32>
    %739 = vector.broadcast %46 : f32 to vector<8x16xf32>
    %740 = arith.mulf %739, %735 : vector<8x16xf32>
    %741 = arith.addf %715, %740 : vector<8x16xf32>
    %742 = vector.broadcast %73 : f32 to vector<8x16xf32>
    %743 = arith.mulf %742, %735 : vector<8x16xf32>
    %744 = arith.addf %718, %743 : vector<8x16xf32>
    %745 = vector.broadcast %100 : f32 to vector<8x16xf32>
    %746 = arith.mulf %745, %735 : vector<8x16xf32>
    %747 = arith.addf %721, %746 : vector<8x16xf32>
    %748 = vector.broadcast %127 : f32 to vector<8x16xf32>
    %749 = arith.mulf %748, %735 : vector<8x16xf32>
    %750 = arith.addf %724, %749 : vector<8x16xf32>
    %751 = vector.broadcast %154 : f32 to vector<8x16xf32>
    %752 = arith.mulf %751, %735 : vector<8x16xf32>
    %753 = arith.addf %727, %752 : vector<8x16xf32>
    %754 = vector.broadcast %181 : f32 to vector<8x16xf32>
    %755 = arith.mulf %754, %735 : vector<8x16xf32>
    %756 = arith.addf %730, %755 : vector<8x16xf32>
    %757 = vector.broadcast %208 : f32 to vector<8x16xf32>
    %758 = arith.mulf %757, %735 : vector<8x16xf32>
    %759 = arith.addf %733, %758 : vector<8x16xf32>
    %c0_508 = arith.constant 0 : index
    %c2_509 = arith.constant 2 : index
    %c2_510 = arith.constant 2 : index
    %c0_511 = arith.constant 0 : index
    %760 = vector.load %arg1[%c0_508, %c2_509, %c2_510, %c0_511] : memref<1x3x18x18xf32, #tpu.memory_space<vmem>>, vector<1x1x8x16xf32>
    %761 = vector.shape_cast %760 : vector<1x1x8x16xf32> to vector<8x16xf32>
    %762 = vector.broadcast %20 : f32 to vector<8x16xf32>
    %763 = arith.mulf %762, %761 : vector<8x16xf32>
    %764 = arith.addf %738, %763 : vector<8x16xf32>
    %765 = vector.broadcast %47 : f32 to vector<8x16xf32>
    %766 = arith.mulf %765, %761 : vector<8x16xf32>
    %767 = arith.addf %741, %766 : vector<8x16xf32>
    %768 = vector.broadcast %74 : f32 to vector<8x16xf32>
    %769 = arith.mulf %768, %761 : vector<8x16xf32>
    %770 = arith.addf %744, %769 : vector<8x16xf32>
    %771 = vector.broadcast %101 : f32 to vector<8x16xf32>
    %772 = arith.mulf %771, %761 : vector<8x16xf32>
    %773 = arith.addf %747, %772 : vector<8x16xf32>
    %774 = vector.broadcast %128 : f32 to vector<8x16xf32>
    %775 = arith.mulf %774, %761 : vector<8x16xf32>
    %776 = arith.addf %750, %775 : vector<8x16xf32>
    %777 = vector.broadcast %155 : f32 to vector<8x16xf32>
    %778 = arith.mulf %777, %761 : vector<8x16xf32>
    %779 = arith.addf %753, %778 : vector<8x16xf32>
    %780 = vector.broadcast %182 : f32 to vector<8x16xf32>
    %781 = arith.mulf %780, %761 : vector<8x16xf32>
    %782 = arith.addf %756, %781 : vector<8x16xf32>
    %783 = vector.broadcast %209 : f32 to vector<8x16xf32>
    %784 = arith.mulf %783, %761 : vector<8x16xf32>
    %785 = arith.addf %759, %784 : vector<8x16xf32>
    %c0_512 = arith.constant 0 : index
    %c0_513 = arith.constant 0 : index
    %c2_514 = arith.constant 2 : index
    %c1_515 = arith.constant 1 : index
    %786 = vector.load %arg1[%c0_512, %c0_513, %c2_514, %c1_515] : memref<1x3x18x18xf32, #tpu.memory_space<vmem>>, vector<1x1x8x16xf32>
    %787 = vector.shape_cast %786 : vector<1x1x8x16xf32> to vector<8x16xf32>
    %788 = vector.broadcast %21 : f32 to vector<8x16xf32>
    %789 = arith.mulf %788, %787 : vector<8x16xf32>
    %790 = arith.addf %764, %789 : vector<8x16xf32>
    %791 = vector.broadcast %48 : f32 to vector<8x16xf32>
    %792 = arith.mulf %791, %787 : vector<8x16xf32>
    %793 = arith.addf %767, %792 : vector<8x16xf32>
    %794 = vector.broadcast %75 : f32 to vector<8x16xf32>
    %795 = arith.mulf %794, %787 : vector<8x16xf32>
    %796 = arith.addf %770, %795 : vector<8x16xf32>
    %797 = vector.broadcast %102 : f32 to vector<8x16xf32>
    %798 = arith.mulf %797, %787 : vector<8x16xf32>
    %799 = arith.addf %773, %798 : vector<8x16xf32>
    %800 = vector.broadcast %129 : f32 to vector<8x16xf32>
    %801 = arith.mulf %800, %787 : vector<8x16xf32>
    %802 = arith.addf %776, %801 : vector<8x16xf32>
    %803 = vector.broadcast %156 : f32 to vector<8x16xf32>
    %804 = arith.mulf %803, %787 : vector<8x16xf32>
    %805 = arith.addf %779, %804 : vector<8x16xf32>
    %806 = vector.broadcast %183 : f32 to vector<8x16xf32>
    %807 = arith.mulf %806, %787 : vector<8x16xf32>
    %808 = arith.addf %782, %807 : vector<8x16xf32>
    %809 = vector.broadcast %210 : f32 to vector<8x16xf32>
    %810 = arith.mulf %809, %787 : vector<8x16xf32>
    %811 = arith.addf %785, %810 : vector<8x16xf32>
    %c0_516 = arith.constant 0 : index
    %c1_517 = arith.constant 1 : index
    %c2_518 = arith.constant 2 : index
    %c1_519 = arith.constant 1 : index
    %812 = vector.load %arg1[%c0_516, %c1_517, %c2_518, %c1_519] : memref<1x3x18x18xf32, #tpu.memory_space<vmem>>, vector<1x1x8x16xf32>
    %813 = vector.shape_cast %812 : vector<1x1x8x16xf32> to vector<8x16xf32>
    %814 = vector.broadcast %22 : f32 to vector<8x16xf32>
    %815 = arith.mulf %814, %813 : vector<8x16xf32>
    %816 = arith.addf %790, %815 : vector<8x16xf32>
    %817 = vector.broadcast %49 : f32 to vector<8x16xf32>
    %818 = arith.mulf %817, %813 : vector<8x16xf32>
    %819 = arith.addf %793, %818 : vector<8x16xf32>
    %820 = vector.broadcast %76 : f32 to vector<8x16xf32>
    %821 = arith.mulf %820, %813 : vector<8x16xf32>
    %822 = arith.addf %796, %821 : vector<8x16xf32>
    %823 = vector.broadcast %103 : f32 to vector<8x16xf32>
    %824 = arith.mulf %823, %813 : vector<8x16xf32>
    %825 = arith.addf %799, %824 : vector<8x16xf32>
    %826 = vector.broadcast %130 : f32 to vector<8x16xf32>
    %827 = arith.mulf %826, %813 : vector<8x16xf32>
    %828 = arith.addf %802, %827 : vector<8x16xf32>
    %829 = vector.broadcast %157 : f32 to vector<8x16xf32>
    %830 = arith.mulf %829, %813 : vector<8x16xf32>
    %831 = arith.addf %805, %830 : vector<8x16xf32>
    %832 = vector.broadcast %184 : f32 to vector<8x16xf32>
    %833 = arith.mulf %832, %813 : vector<8x16xf32>
    %834 = arith.addf %808, %833 : vector<8x16xf32>
    %835 = vector.broadcast %211 : f32 to vector<8x16xf32>
    %836 = arith.mulf %835, %813 : vector<8x16xf32>
    %837 = arith.addf %811, %836 : vector<8x16xf32>
    %c0_520 = arith.constant 0 : index
    %c2_521 = arith.constant 2 : index
    %c2_522 = arith.constant 2 : index
    %c1_523 = arith.constant 1 : index
    %838 = vector.load %arg1[%c0_520, %c2_521, %c2_522, %c1_523] : memref<1x3x18x18xf32, #tpu.memory_space<vmem>>, vector<1x1x8x16xf32>
    %839 = vector.shape_cast %838 : vector<1x1x8x16xf32> to vector<8x16xf32>
    %840 = vector.broadcast %23 : f32 to vector<8x16xf32>
    %841 = arith.mulf %840, %839 : vector<8x16xf32>
    %842 = arith.addf %816, %841 : vector<8x16xf32>
    %843 = vector.broadcast %50 : f32 to vector<8x16xf32>
    %844 = arith.mulf %843, %839 : vector<8x16xf32>
    %845 = arith.addf %819, %844 : vector<8x16xf32>
    %846 = vector.broadcast %77 : f32 to vector<8x16xf32>
    %847 = arith.mulf %846, %839 : vector<8x16xf32>
    %848 = arith.addf %822, %847 : vector<8x16xf32>
    %849 = vector.broadcast %104 : f32 to vector<8x16xf32>
    %850 = arith.mulf %849, %839 : vector<8x16xf32>
    %851 = arith.addf %825, %850 : vector<8x16xf32>
    %852 = vector.broadcast %131 : f32 to vector<8x16xf32>
    %853 = arith.mulf %852, %839 : vector<8x16xf32>
    %854 = arith.addf %828, %853 : vector<8x16xf32>
    %855 = vector.broadcast %158 : f32 to vector<8x16xf32>
    %856 = arith.mulf %855, %839 : vector<8x16xf32>
    %857 = arith.addf %831, %856 : vector<8x16xf32>
    %858 = vector.broadcast %185 : f32 to vector<8x16xf32>
    %859 = arith.mulf %858, %839 : vector<8x16xf32>
    %860 = arith.addf %834, %859 : vector<8x16xf32>
    %861 = vector.broadcast %212 : f32 to vector<8x16xf32>
    %862 = arith.mulf %861, %839 : vector<8x16xf32>
    %863 = arith.addf %837, %862 : vector<8x16xf32>
    %c0_524 = arith.constant 0 : index
    %c0_525 = arith.constant 0 : index
    %c2_526 = arith.constant 2 : index
    %c2_527 = arith.constant 2 : index
    %864 = vector.load %arg1[%c0_524, %c0_525, %c2_526, %c2_527] : memref<1x3x18x18xf32, #tpu.memory_space<vmem>>, vector<1x1x8x16xf32>
    %865 = vector.shape_cast %864 : vector<1x1x8x16xf32> to vector<8x16xf32>
    %866 = vector.broadcast %24 : f32 to vector<8x16xf32>
    %867 = arith.mulf %866, %865 : vector<8x16xf32>
    %868 = arith.addf %842, %867 : vector<8x16xf32>
    %869 = vector.broadcast %51 : f32 to vector<8x16xf32>
    %870 = arith.mulf %869, %865 : vector<8x16xf32>
    %871 = arith.addf %845, %870 : vector<8x16xf32>
    %872 = vector.broadcast %78 : f32 to vector<8x16xf32>
    %873 = arith.mulf %872, %865 : vector<8x16xf32>
    %874 = arith.addf %848, %873 : vector<8x16xf32>
    %875 = vector.broadcast %105 : f32 to vector<8x16xf32>
    %876 = arith.mulf %875, %865 : vector<8x16xf32>
    %877 = arith.addf %851, %876 : vector<8x16xf32>
    %878 = vector.broadcast %132 : f32 to vector<8x16xf32>
    %879 = arith.mulf %878, %865 : vector<8x16xf32>
    %880 = arith.addf %854, %879 : vector<8x16xf32>
    %881 = vector.broadcast %159 : f32 to vector<8x16xf32>
    %882 = arith.mulf %881, %865 : vector<8x16xf32>
    %883 = arith.addf %857, %882 : vector<8x16xf32>
    %884 = vector.broadcast %186 : f32 to vector<8x16xf32>
    %885 = arith.mulf %884, %865 : vector<8x16xf32>
    %886 = arith.addf %860, %885 : vector<8x16xf32>
    %887 = vector.broadcast %213 : f32 to vector<8x16xf32>
    %888 = arith.mulf %887, %865 : vector<8x16xf32>
    %889 = arith.addf %863, %888 : vector<8x16xf32>
    %c0_528 = arith.constant 0 : index
    %c1_529 = arith.constant 1 : index
    %c2_530 = arith.constant 2 : index
    %c2_531 = arith.constant 2 : index
    %890 = vector.load %arg1[%c0_528, %c1_529, %c2_530, %c2_531] : memref<1x3x18x18xf32, #tpu.memory_space<vmem>>, vector<1x1x8x16xf32>
    %891 = vector.shape_cast %890 : vector<1x1x8x16xf32> to vector<8x16xf32>
    %892 = vector.broadcast %25 : f32 to vector<8x16xf32>
    %893 = arith.mulf %892, %891 : vector<8x16xf32>
    %894 = arith.addf %868, %893 : vector<8x16xf32>
    %895 = vector.broadcast %52 : f32 to vector<8x16xf32>
    %896 = arith.mulf %895, %891 : vector<8x16xf32>
    %897 = arith.addf %871, %896 : vector<8x16xf32>
    %898 = vector.broadcast %79 : f32 to vector<8x16xf32>
    %899 = arith.mulf %898, %891 : vector<8x16xf32>
    %900 = arith.addf %874, %899 : vector<8x16xf32>
    %901 = vector.broadcast %106 : f32 to vector<8x16xf32>
    %902 = arith.mulf %901, %891 : vector<8x16xf32>
    %903 = arith.addf %877, %902 : vector<8x16xf32>
    %904 = vector.broadcast %133 : f32 to vector<8x16xf32>
    %905 = arith.mulf %904, %891 : vector<8x16xf32>
    %906 = arith.addf %880, %905 : vector<8x16xf32>
    %907 = vector.broadcast %160 : f32 to vector<8x16xf32>
    %908 = arith.mulf %907, %891 : vector<8x16xf32>
    %909 = arith.addf %883, %908 : vector<8x16xf32>
    %910 = vector.broadcast %187 : f32 to vector<8x16xf32>
    %911 = arith.mulf %910, %891 : vector<8x16xf32>
    %912 = arith.addf %886, %911 : vector<8x16xf32>
    %913 = vector.broadcast %214 : f32 to vector<8x16xf32>
    %914 = arith.mulf %913, %891 : vector<8x16xf32>
    %915 = arith.addf %889, %914 : vector<8x16xf32>
    %c0_532 = arith.constant 0 : index
    %c2_533 = arith.constant 2 : index
    %c2_534 = arith.constant 2 : index
    %c2_535 = arith.constant 2 : index
    %916 = vector.load %arg1[%c0_532, %c2_533, %c2_534, %c2_535] : memref<1x3x18x18xf32, #tpu.memory_space<vmem>>, vector<1x1x8x16xf32>
    %917 = vector.shape_cast %916 : vector<1x1x8x16xf32> to vector<8x16xf32>
    %918 = vector.broadcast %26 : f32 to vector<8x16xf32>
    %919 = arith.mulf %918, %917 : vector<8x16xf32>
    %920 = arith.addf %894, %919 : vector<8x16xf32>
    %921 = vector.broadcast %53 : f32 to vector<8x16xf32>
    %922 = arith.mulf %921, %917 : vector<8x16xf32>
    %923 = arith.addf %897, %922 : vector<8x16xf32>
    %924 = vector.broadcast %80 : f32 to vector<8x16xf32>
    %925 = arith.mulf %924, %917 : vector<8x16xf32>
    %926 = arith.addf %900, %925 : vector<8x16xf32>
    %927 = vector.broadcast %107 : f32 to vector<8x16xf32>
    %928 = arith.mulf %927, %917 : vector<8x16xf32>
    %929 = arith.addf %903, %928 : vector<8x16xf32>
    %930 = vector.broadcast %134 : f32 to vector<8x16xf32>
    %931 = arith.mulf %930, %917 : vector<8x16xf32>
    %932 = arith.addf %906, %931 : vector<8x16xf32>
    %933 = vector.broadcast %161 : f32 to vector<8x16xf32>
    %934 = arith.mulf %933, %917 : vector<8x16xf32>
    %935 = arith.addf %909, %934 : vector<8x16xf32>
    %936 = vector.broadcast %188 : f32 to vector<8x16xf32>
    %937 = arith.mulf %936, %917 : vector<8x16xf32>
    %938 = arith.addf %912, %937 : vector<8x16xf32>
    %939 = vector.broadcast %215 : f32 to vector<8x16xf32>
    %940 = arith.mulf %939, %917 : vector<8x16xf32>
    %941 = arith.addf %915, %940 : vector<8x16xf32>
    %942 = vector.broadcast %216 : f32 to vector<8x16xf32>
    %943 = arith.addf %920, %942 : vector<8x16xf32>
    %cst_536 = arith.constant 0.000000e+00 : f32
    %944 = vector.broadcast %cst_536 : f32 to vector<8x16xf32>
    %945 = arith.maximumf %943, %944 : vector<8x16xf32>
    %cst_537 = arith.constant dense<0.000000e+00> : vector<8xf32>
    %946 = vector.multi_reduction <add>, %945, %cst_537 [1] : vector<8x16xf32> to vector<8xf32>
    %947 = vector.shape_cast %946 : vector<8xf32> to vector<8x1xf32>
    %cst_538 = arith.constant dense<0.000000e+00> : vector<1xf32>
    %948 = vector.multi_reduction <add>, %947, %cst_538 [0] : vector<8x1xf32> to vector<1xf32>
    %949 = vector.shape_cast %948 : vector<1xf32> to vector<1x1xf32>
    %950 = arith.addf %224, %949 : vector<1x1xf32>
    %951 = vector.broadcast %217 : f32 to vector<8x16xf32>
    %952 = arith.addf %923, %951 : vector<8x16xf32>
    %cst_539 = arith.constant 0.000000e+00 : f32
    %953 = vector.broadcast %cst_539 : f32 to vector<8x16xf32>
    %954 = arith.maximumf %952, %953 : vector<8x16xf32>
    %cst_540 = arith.constant dense<0.000000e+00> : vector<8xf32>
    %955 = vector.multi_reduction <add>, %954, %cst_540 [1] : vector<8x16xf32> to vector<8xf32>
    %956 = vector.shape_cast %955 : vector<8xf32> to vector<8x1xf32>
    %cst_541 = arith.constant dense<0.000000e+00> : vector<1xf32>
    %957 = vector.multi_reduction <add>, %956, %cst_541 [0] : vector<8x1xf32> to vector<1xf32>
    %958 = vector.shape_cast %957 : vector<1xf32> to vector<1x1xf32>
    %959 = arith.addf %225, %958 : vector<1x1xf32>
    %960 = vector.broadcast %218 : f32 to vector<8x16xf32>
    %961 = arith.addf %926, %960 : vector<8x16xf32>
    %cst_542 = arith.constant 0.000000e+00 : f32
    %962 = vector.broadcast %cst_542 : f32 to vector<8x16xf32>
    %963 = arith.maximumf %961, %962 : vector<8x16xf32>
    %cst_543 = arith.constant dense<0.000000e+00> : vector<8xf32>
    %964 = vector.multi_reduction <add>, %963, %cst_543 [1] : vector<8x16xf32> to vector<8xf32>
    %965 = vector.shape_cast %964 : vector<8xf32> to vector<8x1xf32>
    %cst_544 = arith.constant dense<0.000000e+00> : vector<1xf32>
    %966 = vector.multi_reduction <add>, %965, %cst_544 [0] : vector<8x1xf32> to vector<1xf32>
    %967 = vector.shape_cast %966 : vector<1xf32> to vector<1x1xf32>
    %968 = arith.addf %226, %967 : vector<1x1xf32>
    %969 = vector.broadcast %219 : f32 to vector<8x16xf32>
    %970 = arith.addf %929, %969 : vector<8x16xf32>
    %cst_545 = arith.constant 0.000000e+00 : f32
    %971 = vector.broadcast %cst_545 : f32 to vector<8x16xf32>
    %972 = arith.maximumf %970, %971 : vector<8x16xf32>
    %cst_546 = arith.constant dense<0.000000e+00> : vector<8xf32>
    %973 = vector.multi_reduction <add>, %972, %cst_546 [1] : vector<8x16xf32> to vector<8xf32>
    %974 = vector.shape_cast %973 : vector<8xf32> to vector<8x1xf32>
    %cst_547 = arith.constant dense<0.000000e+00> : vector<1xf32>
    %975 = vector.multi_reduction <add>, %974, %cst_547 [0] : vector<8x1xf32> to vector<1xf32>
    %976 = vector.shape_cast %975 : vector<1xf32> to vector<1x1xf32>
    %977 = arith.addf %227, %976 : vector<1x1xf32>
    %978 = vector.broadcast %220 : f32 to vector<8x16xf32>
    %979 = arith.addf %932, %978 : vector<8x16xf32>
    %cst_548 = arith.constant 0.000000e+00 : f32
    %980 = vector.broadcast %cst_548 : f32 to vector<8x16xf32>
    %981 = arith.maximumf %979, %980 : vector<8x16xf32>
    %cst_549 = arith.constant dense<0.000000e+00> : vector<8xf32>
    %982 = vector.multi_reduction <add>, %981, %cst_549 [1] : vector<8x16xf32> to vector<8xf32>
    %983 = vector.shape_cast %982 : vector<8xf32> to vector<8x1xf32>
    %cst_550 = arith.constant dense<0.000000e+00> : vector<1xf32>
    %984 = vector.multi_reduction <add>, %983, %cst_550 [0] : vector<8x1xf32> to vector<1xf32>
    %985 = vector.shape_cast %984 : vector<1xf32> to vector<1x1xf32>
    %986 = arith.addf %228, %985 : vector<1x1xf32>
    %987 = vector.broadcast %221 : f32 to vector<8x16xf32>
    %988 = arith.addf %935, %987 : vector<8x16xf32>
    %cst_551 = arith.constant 0.000000e+00 : f32
    %989 = vector.broadcast %cst_551 : f32 to vector<8x16xf32>
    %990 = arith.maximumf %988, %989 : vector<8x16xf32>
    %cst_552 = arith.constant dense<0.000000e+00> : vector<8xf32>
    %991 = vector.multi_reduction <add>, %990, %cst_552 [1] : vector<8x16xf32> to vector<8xf32>
    %992 = vector.shape_cast %991 : vector<8xf32> to vector<8x1xf32>
    %cst_553 = arith.constant dense<0.000000e+00> : vector<1xf32>
    %993 = vector.multi_reduction <add>, %992, %cst_553 [0] : vector<8x1xf32> to vector<1xf32>
    %994 = vector.shape_cast %993 : vector<1xf32> to vector<1x1xf32>
    %995 = arith.addf %229, %994 : vector<1x1xf32>
    %996 = vector.broadcast %222 : f32 to vector<8x16xf32>
    %997 = arith.addf %938, %996 : vector<8x16xf32>
    %cst_554 = arith.constant 0.000000e+00 : f32
    %998 = vector.broadcast %cst_554 : f32 to vector<8x16xf32>
    %999 = arith.maximumf %997, %998 : vector<8x16xf32>
    %cst_555 = arith.constant dense<0.000000e+00> : vector<8xf32>
    %1000 = vector.multi_reduction <add>, %999, %cst_555 [1] : vector<8x16xf32> to vector<8xf32>
    %1001 = vector.shape_cast %1000 : vector<8xf32> to vector<8x1xf32>
    %cst_556 = arith.constant dense<0.000000e+00> : vector<1xf32>
    %1002 = vector.multi_reduction <add>, %1001, %cst_556 [0] : vector<8x1xf32> to vector<1xf32>
    %1003 = vector.shape_cast %1002 : vector<1xf32> to vector<1x1xf32>
    %1004 = arith.addf %230, %1003 : vector<1x1xf32>
    %1005 = vector.broadcast %223 : f32 to vector<8x16xf32>
    %1006 = arith.addf %941, %1005 : vector<8x16xf32>
    %cst_557 = arith.constant 0.000000e+00 : f32
    %1007 = vector.broadcast %cst_557 : f32 to vector<8x16xf32>
    %1008 = arith.maximumf %1006, %1007 : vector<8x16xf32>
    %cst_558 = arith.constant dense<0.000000e+00> : vector<8xf32>
    %1009 = vector.multi_reduction <add>, %1008, %cst_558 [1] : vector<8x16xf32> to vector<8xf32>
    %1010 = vector.shape_cast %1009 : vector<8xf32> to vector<8x1xf32>
    %cst_559 = arith.constant dense<0.000000e+00> : vector<1xf32>
    %1011 = vector.multi_reduction <add>, %1010, %cst_559 [0] : vector<8x1xf32> to vector<1xf32>
    %1012 = vector.shape_cast %1011 : vector<1xf32> to vector<1x1xf32>
    %1013 = arith.addf %231, %1012 : vector<1x1xf32>
    %cst_560 = arith.constant 0.000000e+00 : f32
    %1014 = vector.broadcast %cst_560 : f32 to vector<8x16xf32>
    %cst_561 = arith.constant 0.000000e+00 : f32
    %1015 = vector.broadcast %cst_561 : f32 to vector<8x16xf32>
    %cst_562 = arith.constant 0.000000e+00 : f32
    %1016 = vector.broadcast %cst_562 : f32 to vector<8x16xf32>
    %cst_563 = arith.constant 0.000000e+00 : f32
    %1017 = vector.broadcast %cst_563 : f32 to vector<8x16xf32>
    %cst_564 = arith.constant 0.000000e+00 : f32
    %1018 = vector.broadcast %cst_564 : f32 to vector<8x16xf32>
    %cst_565 = arith.constant 0.000000e+00 : f32
    %1019 = vector.broadcast %cst_565 : f32 to vector<8x16xf32>
    %cst_566 = arith.constant 0.000000e+00 : f32
    %1020 = vector.broadcast %cst_566 : f32 to vector<8x16xf32>
    %cst_567 = arith.constant 0.000000e+00 : f32
    %1021 = vector.broadcast %cst_567 : f32 to vector<8x16xf32>
    %c0_568 = arith.constant 0 : index
    %c0_569 = arith.constant 0 : index
    %c8_570 = arith.constant 8 : index
    %c0_571 = arith.constant 0 : index
    %1022 = vector.load %arg1[%c0_568, %c0_569, %c8_570, %c0_571] : memref<1x3x18x18xf32, #tpu.memory_space<vmem>>, vector<1x1x8x16xf32>
    %1023 = vector.shape_cast %1022 : vector<1x1x8x16xf32> to vector<8x16xf32>
    %1024 = vector.broadcast %0 : f32 to vector<8x16xf32>
    %1025 = arith.mulf %1024, %1023 : vector<8x16xf32>
    %1026 = arith.addf %1014, %1025 : vector<8x16xf32>
    %1027 = vector.broadcast %27 : f32 to vector<8x16xf32>
    %1028 = arith.mulf %1027, %1023 : vector<8x16xf32>
    %1029 = arith.addf %1015, %1028 : vector<8x16xf32>
    %1030 = vector.broadcast %54 : f32 to vector<8x16xf32>
    %1031 = arith.mulf %1030, %1023 : vector<8x16xf32>
    %1032 = arith.addf %1016, %1031 : vector<8x16xf32>
    %1033 = vector.broadcast %81 : f32 to vector<8x16xf32>
    %1034 = arith.mulf %1033, %1023 : vector<8x16xf32>
    %1035 = arith.addf %1017, %1034 : vector<8x16xf32>
    %1036 = vector.broadcast %108 : f32 to vector<8x16xf32>
    %1037 = arith.mulf %1036, %1023 : vector<8x16xf32>
    %1038 = arith.addf %1018, %1037 : vector<8x16xf32>
    %1039 = vector.broadcast %135 : f32 to vector<8x16xf32>
    %1040 = arith.mulf %1039, %1023 : vector<8x16xf32>
    %1041 = arith.addf %1019, %1040 : vector<8x16xf32>
    %1042 = vector.broadcast %162 : f32 to vector<8x16xf32>
    %1043 = arith.mulf %1042, %1023 : vector<8x16xf32>
    %1044 = arith.addf %1020, %1043 : vector<8x16xf32>
    %1045 = vector.broadcast %189 : f32 to vector<8x16xf32>
    %1046 = arith.mulf %1045, %1023 : vector<8x16xf32>
    %1047 = arith.addf %1021, %1046 : vector<8x16xf32>
    %c0_572 = arith.constant 0 : index
    %c1_573 = arith.constant 1 : index
    %c8_574 = arith.constant 8 : index
    %c0_575 = arith.constant 0 : index
    %1048 = vector.load %arg1[%c0_572, %c1_573, %c8_574, %c0_575] : memref<1x3x18x18xf32, #tpu.memory_space<vmem>>, vector<1x1x8x16xf32>
    %1049 = vector.shape_cast %1048 : vector<1x1x8x16xf32> to vector<8x16xf32>
    %1050 = vector.broadcast %1 : f32 to vector<8x16xf32>
    %1051 = arith.mulf %1050, %1049 : vector<8x16xf32>
    %1052 = arith.addf %1026, %1051 : vector<8x16xf32>
    %1053 = vector.broadcast %28 : f32 to vector<8x16xf32>
    %1054 = arith.mulf %1053, %1049 : vector<8x16xf32>
    %1055 = arith.addf %1029, %1054 : vector<8x16xf32>
    %1056 = vector.broadcast %55 : f32 to vector<8x16xf32>
    %1057 = arith.mulf %1056, %1049 : vector<8x16xf32>
    %1058 = arith.addf %1032, %1057 : vector<8x16xf32>
    %1059 = vector.broadcast %82 : f32 to vector<8x16xf32>
    %1060 = arith.mulf %1059, %1049 : vector<8x16xf32>
    %1061 = arith.addf %1035, %1060 : vector<8x16xf32>
    %1062 = vector.broadcast %109 : f32 to vector<8x16xf32>
    %1063 = arith.mulf %1062, %1049 : vector<8x16xf32>
    %1064 = arith.addf %1038, %1063 : vector<8x16xf32>
    %1065 = vector.broadcast %136 : f32 to vector<8x16xf32>
    %1066 = arith.mulf %1065, %1049 : vector<8x16xf32>
    %1067 = arith.addf %1041, %1066 : vector<8x16xf32>
    %1068 = vector.broadcast %163 : f32 to vector<8x16xf32>
    %1069 = arith.mulf %1068, %1049 : vector<8x16xf32>
    %1070 = arith.addf %1044, %1069 : vector<8x16xf32>
    %1071 = vector.broadcast %190 : f32 to vector<8x16xf32>
    %1072 = arith.mulf %1071, %1049 : vector<8x16xf32>
    %1073 = arith.addf %1047, %1072 : vector<8x16xf32>
    %c0_576 = arith.constant 0 : index
    %c2_577 = arith.constant 2 : index
    %c8_578 = arith.constant 8 : index
    %c0_579 = arith.constant 0 : index
    %1074 = vector.load %arg1[%c0_576, %c2_577, %c8_578, %c0_579] : memref<1x3x18x18xf32, #tpu.memory_space<vmem>>, vector<1x1x8x16xf32>
    %1075 = vector.shape_cast %1074 : vector<1x1x8x16xf32> to vector<8x16xf32>
    %1076 = vector.broadcast %2 : f32 to vector<8x16xf32>
    %1077 = arith.mulf %1076, %1075 : vector<8x16xf32>
    %1078 = arith.addf %1052, %1077 : vector<8x16xf32>
    %1079 = vector.broadcast %29 : f32 to vector<8x16xf32>
    %1080 = arith.mulf %1079, %1075 : vector<8x16xf32>
    %1081 = arith.addf %1055, %1080 : vector<8x16xf32>
    %1082 = vector.broadcast %56 : f32 to vector<8x16xf32>
    %1083 = arith.mulf %1082, %1075 : vector<8x16xf32>
    %1084 = arith.addf %1058, %1083 : vector<8x16xf32>
    %1085 = vector.broadcast %83 : f32 to vector<8x16xf32>
    %1086 = arith.mulf %1085, %1075 : vector<8x16xf32>
    %1087 = arith.addf %1061, %1086 : vector<8x16xf32>
    %1088 = vector.broadcast %110 : f32 to vector<8x16xf32>
    %1089 = arith.mulf %1088, %1075 : vector<8x16xf32>
    %1090 = arith.addf %1064, %1089 : vector<8x16xf32>
    %1091 = vector.broadcast %137 : f32 to vector<8x16xf32>
    %1092 = arith.mulf %1091, %1075 : vector<8x16xf32>
    %1093 = arith.addf %1067, %1092 : vector<8x16xf32>
    %1094 = vector.broadcast %164 : f32 to vector<8x16xf32>
    %1095 = arith.mulf %1094, %1075 : vector<8x16xf32>
    %1096 = arith.addf %1070, %1095 : vector<8x16xf32>
    %1097 = vector.broadcast %191 : f32 to vector<8x16xf32>
    %1098 = arith.mulf %1097, %1075 : vector<8x16xf32>
    %1099 = arith.addf %1073, %1098 : vector<8x16xf32>
    %c0_580 = arith.constant 0 : index
    %c0_581 = arith.constant 0 : index
    %c8_582 = arith.constant 8 : index
    %c1_583 = arith.constant 1 : index
    %1100 = vector.load %arg1[%c0_580, %c0_581, %c8_582, %c1_583] : memref<1x3x18x18xf32, #tpu.memory_space<vmem>>, vector<1x1x8x16xf32>
    %1101 = vector.shape_cast %1100 : vector<1x1x8x16xf32> to vector<8x16xf32>
    %1102 = vector.broadcast %3 : f32 to vector<8x16xf32>
    %1103 = arith.mulf %1102, %1101 : vector<8x16xf32>
    %1104 = arith.addf %1078, %1103 : vector<8x16xf32>
    %1105 = vector.broadcast %30 : f32 to vector<8x16xf32>
    %1106 = arith.mulf %1105, %1101 : vector<8x16xf32>
    %1107 = arith.addf %1081, %1106 : vector<8x16xf32>
    %1108 = vector.broadcast %57 : f32 to vector<8x16xf32>
    %1109 = arith.mulf %1108, %1101 : vector<8x16xf32>
    %1110 = arith.addf %1084, %1109 : vector<8x16xf32>
    %1111 = vector.broadcast %84 : f32 to vector<8x16xf32>
    %1112 = arith.mulf %1111, %1101 : vector<8x16xf32>
    %1113 = arith.addf %1087, %1112 : vector<8x16xf32>
    %1114 = vector.broadcast %111 : f32 to vector<8x16xf32>
    %1115 = arith.mulf %1114, %1101 : vector<8x16xf32>
    %1116 = arith.addf %1090, %1115 : vector<8x16xf32>
    %1117 = vector.broadcast %138 : f32 to vector<8x16xf32>
    %1118 = arith.mulf %1117, %1101 : vector<8x16xf32>
    %1119 = arith.addf %1093, %1118 : vector<8x16xf32>
    %1120 = vector.broadcast %165 : f32 to vector<8x16xf32>
    %1121 = arith.mulf %1120, %1101 : vector<8x16xf32>
    %1122 = arith.addf %1096, %1121 : vector<8x16xf32>
    %1123 = vector.broadcast %192 : f32 to vector<8x16xf32>
    %1124 = arith.mulf %1123, %1101 : vector<8x16xf32>
    %1125 = arith.addf %1099, %1124 : vector<8x16xf32>
    %c0_584 = arith.constant 0 : index
    %c1_585 = arith.constant 1 : index
    %c8_586 = arith.constant 8 : index
    %c1_587 = arith.constant 1 : index
    %1126 = vector.load %arg1[%c0_584, %c1_585, %c8_586, %c1_587] : memref<1x3x18x18xf32, #tpu.memory_space<vmem>>, vector<1x1x8x16xf32>
    %1127 = vector.shape_cast %1126 : vector<1x1x8x16xf32> to vector<8x16xf32>
    %1128 = vector.broadcast %4 : f32 to vector<8x16xf32>
    %1129 = arith.mulf %1128, %1127 : vector<8x16xf32>
    %1130 = arith.addf %1104, %1129 : vector<8x16xf32>
    %1131 = vector.broadcast %31 : f32 to vector<8x16xf32>
    %1132 = arith.mulf %1131, %1127 : vector<8x16xf32>
    %1133 = arith.addf %1107, %1132 : vector<8x16xf32>
    %1134 = vector.broadcast %58 : f32 to vector<8x16xf32>
    %1135 = arith.mulf %1134, %1127 : vector<8x16xf32>
    %1136 = arith.addf %1110, %1135 : vector<8x16xf32>
    %1137 = vector.broadcast %85 : f32 to vector<8x16xf32>
    %1138 = arith.mulf %1137, %1127 : vector<8x16xf32>
    %1139 = arith.addf %1113, %1138 : vector<8x16xf32>
    %1140 = vector.broadcast %112 : f32 to vector<8x16xf32>
    %1141 = arith.mulf %1140, %1127 : vector<8x16xf32>
    %1142 = arith.addf %1116, %1141 : vector<8x16xf32>
    %1143 = vector.broadcast %139 : f32 to vector<8x16xf32>
    %1144 = arith.mulf %1143, %1127 : vector<8x16xf32>
    %1145 = arith.addf %1119, %1144 : vector<8x16xf32>
    %1146 = vector.broadcast %166 : f32 to vector<8x16xf32>
    %1147 = arith.mulf %1146, %1127 : vector<8x16xf32>
    %1148 = arith.addf %1122, %1147 : vector<8x16xf32>
    %1149 = vector.broadcast %193 : f32 to vector<8x16xf32>
    %1150 = arith.mulf %1149, %1127 : vector<8x16xf32>
    %1151 = arith.addf %1125, %1150 : vector<8x16xf32>
    %c0_588 = arith.constant 0 : index
    %c2_589 = arith.constant 2 : index
    %c8_590 = arith.constant 8 : index
    %c1_591 = arith.constant 1 : index
    %1152 = vector.load %arg1[%c0_588, %c2_589, %c8_590, %c1_591] : memref<1x3x18x18xf32, #tpu.memory_space<vmem>>, vector<1x1x8x16xf32>
    %1153 = vector.shape_cast %1152 : vector<1x1x8x16xf32> to vector<8x16xf32>
    %1154 = vector.broadcast %5 : f32 to vector<8x16xf32>
    %1155 = arith.mulf %1154, %1153 : vector<8x16xf32>
    %1156 = arith.addf %1130, %1155 : vector<8x16xf32>
    %1157 = vector.broadcast %32 : f32 to vector<8x16xf32>
    %1158 = arith.mulf %1157, %1153 : vector<8x16xf32>
    %1159 = arith.addf %1133, %1158 : vector<8x16xf32>
    %1160 = vector.broadcast %59 : f32 to vector<8x16xf32>
    %1161 = arith.mulf %1160, %1153 : vector<8x16xf32>
    %1162 = arith.addf %1136, %1161 : vector<8x16xf32>
    %1163 = vector.broadcast %86 : f32 to vector<8x16xf32>
    %1164 = arith.mulf %1163, %1153 : vector<8x16xf32>
    %1165 = arith.addf %1139, %1164 : vector<8x16xf32>
    %1166 = vector.broadcast %113 : f32 to vector<8x16xf32>
    %1167 = arith.mulf %1166, %1153 : vector<8x16xf32>
    %1168 = arith.addf %1142, %1167 : vector<8x16xf32>
    %1169 = vector.broadcast %140 : f32 to vector<8x16xf32>
    %1170 = arith.mulf %1169, %1153 : vector<8x16xf32>
    %1171 = arith.addf %1145, %1170 : vector<8x16xf32>
    %1172 = vector.broadcast %167 : f32 to vector<8x16xf32>
    %1173 = arith.mulf %1172, %1153 : vector<8x16xf32>
    %1174 = arith.addf %1148, %1173 : vector<8x16xf32>
    %1175 = vector.broadcast %194 : f32 to vector<8x16xf32>
    %1176 = arith.mulf %1175, %1153 : vector<8x16xf32>
    %1177 = arith.addf %1151, %1176 : vector<8x16xf32>
    %c0_592 = arith.constant 0 : index
    %c0_593 = arith.constant 0 : index
    %c8_594 = arith.constant 8 : index
    %c2_595 = arith.constant 2 : index
    %1178 = vector.load %arg1[%c0_592, %c0_593, %c8_594, %c2_595] : memref<1x3x18x18xf32, #tpu.memory_space<vmem>>, vector<1x1x8x16xf32>
    %1179 = vector.shape_cast %1178 : vector<1x1x8x16xf32> to vector<8x16xf32>
    %1180 = vector.broadcast %6 : f32 to vector<8x16xf32>
    %1181 = arith.mulf %1180, %1179 : vector<8x16xf32>
    %1182 = arith.addf %1156, %1181 : vector<8x16xf32>
    %1183 = vector.broadcast %33 : f32 to vector<8x16xf32>
    %1184 = arith.mulf %1183, %1179 : vector<8x16xf32>
    %1185 = arith.addf %1159, %1184 : vector<8x16xf32>
    %1186 = vector.broadcast %60 : f32 to vector<8x16xf32>
    %1187 = arith.mulf %1186, %1179 : vector<8x16xf32>
    %1188 = arith.addf %1162, %1187 : vector<8x16xf32>
    %1189 = vector.broadcast %87 : f32 to vector<8x16xf32>
    %1190 = arith.mulf %1189, %1179 : vector<8x16xf32>
    %1191 = arith.addf %1165, %1190 : vector<8x16xf32>
    %1192 = vector.broadcast %114 : f32 to vector<8x16xf32>
    %1193 = arith.mulf %1192, %1179 : vector<8x16xf32>
    %1194 = arith.addf %1168, %1193 : vector<8x16xf32>
    %1195 = vector.broadcast %141 : f32 to vector<8x16xf32>
    %1196 = arith.mulf %1195, %1179 : vector<8x16xf32>
    %1197 = arith.addf %1171, %1196 : vector<8x16xf32>
    %1198 = vector.broadcast %168 : f32 to vector<8x16xf32>
    %1199 = arith.mulf %1198, %1179 : vector<8x16xf32>
    %1200 = arith.addf %1174, %1199 : vector<8x16xf32>
    %1201 = vector.broadcast %195 : f32 to vector<8x16xf32>
    %1202 = arith.mulf %1201, %1179 : vector<8x16xf32>
    %1203 = arith.addf %1177, %1202 : vector<8x16xf32>
    %c0_596 = arith.constant 0 : index
    %c1_597 = arith.constant 1 : index
    %c8_598 = arith.constant 8 : index
    %c2_599 = arith.constant 2 : index
    %1204 = vector.load %arg1[%c0_596, %c1_597, %c8_598, %c2_599] : memref<1x3x18x18xf32, #tpu.memory_space<vmem>>, vector<1x1x8x16xf32>
    %1205 = vector.shape_cast %1204 : vector<1x1x8x16xf32> to vector<8x16xf32>
    %1206 = vector.broadcast %7 : f32 to vector<8x16xf32>
    %1207 = arith.mulf %1206, %1205 : vector<8x16xf32>
    %1208 = arith.addf %1182, %1207 : vector<8x16xf32>
    %1209 = vector.broadcast %34 : f32 to vector<8x16xf32>
    %1210 = arith.mulf %1209, %1205 : vector<8x16xf32>
    %1211 = arith.addf %1185, %1210 : vector<8x16xf32>
    %1212 = vector.broadcast %61 : f32 to vector<8x16xf32>
    %1213 = arith.mulf %1212, %1205 : vector<8x16xf32>
    %1214 = arith.addf %1188, %1213 : vector<8x16xf32>
    %1215 = vector.broadcast %88 : f32 to vector<8x16xf32>
    %1216 = arith.mulf %1215, %1205 : vector<8x16xf32>
    %1217 = arith.addf %1191, %1216 : vector<8x16xf32>
    %1218 = vector.broadcast %115 : f32 to vector<8x16xf32>
    %1219 = arith.mulf %1218, %1205 : vector<8x16xf32>
    %1220 = arith.addf %1194, %1219 : vector<8x16xf32>
    %1221 = vector.broadcast %142 : f32 to vector<8x16xf32>
    %1222 = arith.mulf %1221, %1205 : vector<8x16xf32>
    %1223 = arith.addf %1197, %1222 : vector<8x16xf32>
    %1224 = vector.broadcast %169 : f32 to vector<8x16xf32>
    %1225 = arith.mulf %1224, %1205 : vector<8x16xf32>
    %1226 = arith.addf %1200, %1225 : vector<8x16xf32>
    %1227 = vector.broadcast %196 : f32 to vector<8x16xf32>
    %1228 = arith.mulf %1227, %1205 : vector<8x16xf32>
    %1229 = arith.addf %1203, %1228 : vector<8x16xf32>
    %c0_600 = arith.constant 0 : index
    %c2_601 = arith.constant 2 : index
    %c8_602 = arith.constant 8 : index
    %c2_603 = arith.constant 2 : index
    %1230 = vector.load %arg1[%c0_600, %c2_601, %c8_602, %c2_603] : memref<1x3x18x18xf32, #tpu.memory_space<vmem>>, vector<1x1x8x16xf32>
    %1231 = vector.shape_cast %1230 : vector<1x1x8x16xf32> to vector<8x16xf32>
    %1232 = vector.broadcast %8 : f32 to vector<8x16xf32>
    %1233 = arith.mulf %1232, %1231 : vector<8x16xf32>
    %1234 = arith.addf %1208, %1233 : vector<8x16xf32>
    %1235 = vector.broadcast %35 : f32 to vector<8x16xf32>
    %1236 = arith.mulf %1235, %1231 : vector<8x16xf32>
    %1237 = arith.addf %1211, %1236 : vector<8x16xf32>
    %1238 = vector.broadcast %62 : f32 to vector<8x16xf32>
    %1239 = arith.mulf %1238, %1231 : vector<8x16xf32>
    %1240 = arith.addf %1214, %1239 : vector<8x16xf32>
    %1241 = vector.broadcast %89 : f32 to vector<8x16xf32>
    %1242 = arith.mulf %1241, %1231 : vector<8x16xf32>
    %1243 = arith.addf %1217, %1242 : vector<8x16xf32>
    %1244 = vector.broadcast %116 : f32 to vector<8x16xf32>
    %1245 = arith.mulf %1244, %1231 : vector<8x16xf32>
    %1246 = arith.addf %1220, %1245 : vector<8x16xf32>
    %1247 = vector.broadcast %143 : f32 to vector<8x16xf32>
    %1248 = arith.mulf %1247, %1231 : vector<8x16xf32>
    %1249 = arith.addf %1223, %1248 : vector<8x16xf32>
    %1250 = vector.broadcast %170 : f32 to vector<8x16xf32>
    %1251 = arith.mulf %1250, %1231 : vector<8x16xf32>
    %1252 = arith.addf %1226, %1251 : vector<8x16xf32>
    %1253 = vector.broadcast %197 : f32 to vector<8x16xf32>
    %1254 = arith.mulf %1253, %1231 : vector<8x16xf32>
    %1255 = arith.addf %1229, %1254 : vector<8x16xf32>
    %c0_604 = arith.constant 0 : index
    %c0_605 = arith.constant 0 : index
    %c9_606 = arith.constant 9 : index
    %c0_607 = arith.constant 0 : index
    %1256 = vector.load %arg1[%c0_604, %c0_605, %c9_606, %c0_607] : memref<1x3x18x18xf32, #tpu.memory_space<vmem>>, vector<1x1x8x16xf32>
    %1257 = vector.shape_cast %1256 : vector<1x1x8x16xf32> to vector<8x16xf32>
    %1258 = vector.broadcast %9 : f32 to vector<8x16xf32>
    %1259 = arith.mulf %1258, %1257 : vector<8x16xf32>
    %1260 = arith.addf %1234, %1259 : vector<8x16xf32>
    %1261 = vector.broadcast %36 : f32 to vector<8x16xf32>
    %1262 = arith.mulf %1261, %1257 : vector<8x16xf32>
    %1263 = arith.addf %1237, %1262 : vector<8x16xf32>
    %1264 = vector.broadcast %63 : f32 to vector<8x16xf32>
    %1265 = arith.mulf %1264, %1257 : vector<8x16xf32>
    %1266 = arith.addf %1240, %1265 : vector<8x16xf32>
    %1267 = vector.broadcast %90 : f32 to vector<8x16xf32>
    %1268 = arith.mulf %1267, %1257 : vector<8x16xf32>
    %1269 = arith.addf %1243, %1268 : vector<8x16xf32>
    %1270 = vector.broadcast %117 : f32 to vector<8x16xf32>
    %1271 = arith.mulf %1270, %1257 : vector<8x16xf32>
    %1272 = arith.addf %1246, %1271 : vector<8x16xf32>
    %1273 = vector.broadcast %144 : f32 to vector<8x16xf32>
    %1274 = arith.mulf %1273, %1257 : vector<8x16xf32>
    %1275 = arith.addf %1249, %1274 : vector<8x16xf32>
    %1276 = vector.broadcast %171 : f32 to vector<8x16xf32>
    %1277 = arith.mulf %1276, %1257 : vector<8x16xf32>
    %1278 = arith.addf %1252, %1277 : vector<8x16xf32>
    %1279 = vector.broadcast %198 : f32 to vector<8x16xf32>
    %1280 = arith.mulf %1279, %1257 : vector<8x16xf32>
    %1281 = arith.addf %1255, %1280 : vector<8x16xf32>
    %c0_608 = arith.constant 0 : index
    %c1_609 = arith.constant 1 : index
    %c9_610 = arith.constant 9 : index
    %c0_611 = arith.constant 0 : index
    %1282 = vector.load %arg1[%c0_608, %c1_609, %c9_610, %c0_611] : memref<1x3x18x18xf32, #tpu.memory_space<vmem>>, vector<1x1x8x16xf32>
    %1283 = vector.shape_cast %1282 : vector<1x1x8x16xf32> to vector<8x16xf32>
    %1284 = vector.broadcast %10 : f32 to vector<8x16xf32>
    %1285 = arith.mulf %1284, %1283 : vector<8x16xf32>
    %1286 = arith.addf %1260, %1285 : vector<8x16xf32>
    %1287 = vector.broadcast %37 : f32 to vector<8x16xf32>
    %1288 = arith.mulf %1287, %1283 : vector<8x16xf32>
    %1289 = arith.addf %1263, %1288 : vector<8x16xf32>
    %1290 = vector.broadcast %64 : f32 to vector<8x16xf32>
    %1291 = arith.mulf %1290, %1283 : vector<8x16xf32>
    %1292 = arith.addf %1266, %1291 : vector<8x16xf32>
    %1293 = vector.broadcast %91 : f32 to vector<8x16xf32>
    %1294 = arith.mulf %1293, %1283 : vector<8x16xf32>
    %1295 = arith.addf %1269, %1294 : vector<8x16xf32>
    %1296 = vector.broadcast %118 : f32 to vector<8x16xf32>
    %1297 = arith.mulf %1296, %1283 : vector<8x16xf32>
    %1298 = arith.addf %1272, %1297 : vector<8x16xf32>
    %1299 = vector.broadcast %145 : f32 to vector<8x16xf32>
    %1300 = arith.mulf %1299, %1283 : vector<8x16xf32>
    %1301 = arith.addf %1275, %1300 : vector<8x16xf32>
    %1302 = vector.broadcast %172 : f32 to vector<8x16xf32>
    %1303 = arith.mulf %1302, %1283 : vector<8x16xf32>
    %1304 = arith.addf %1278, %1303 : vector<8x16xf32>
    %1305 = vector.broadcast %199 : f32 to vector<8x16xf32>
    %1306 = arith.mulf %1305, %1283 : vector<8x16xf32>
    %1307 = arith.addf %1281, %1306 : vector<8x16xf32>
    %c0_612 = arith.constant 0 : index
    %c2_613 = arith.constant 2 : index
    %c9_614 = arith.constant 9 : index
    %c0_615 = arith.constant 0 : index
    %1308 = vector.load %arg1[%c0_612, %c2_613, %c9_614, %c0_615] : memref<1x3x18x18xf32, #tpu.memory_space<vmem>>, vector<1x1x8x16xf32>
    %1309 = vector.shape_cast %1308 : vector<1x1x8x16xf32> to vector<8x16xf32>
    %1310 = vector.broadcast %11 : f32 to vector<8x16xf32>
    %1311 = arith.mulf %1310, %1309 : vector<8x16xf32>
    %1312 = arith.addf %1286, %1311 : vector<8x16xf32>
    %1313 = vector.broadcast %38 : f32 to vector<8x16xf32>
    %1314 = arith.mulf %1313, %1309 : vector<8x16xf32>
    %1315 = arith.addf %1289, %1314 : vector<8x16xf32>
    %1316 = vector.broadcast %65 : f32 to vector<8x16xf32>
    %1317 = arith.mulf %1316, %1309 : vector<8x16xf32>
    %1318 = arith.addf %1292, %1317 : vector<8x16xf32>
    %1319 = vector.broadcast %92 : f32 to vector<8x16xf32>
    %1320 = arith.mulf %1319, %1309 : vector<8x16xf32>
    %1321 = arith.addf %1295, %1320 : vector<8x16xf32>
    %1322 = vector.broadcast %119 : f32 to vector<8x16xf32>
    %1323 = arith.mulf %1322, %1309 : vector<8x16xf32>
    %1324 = arith.addf %1298, %1323 : vector<8x16xf32>
    %1325 = vector.broadcast %146 : f32 to vector<8x16xf32>
    %1326 = arith.mulf %1325, %1309 : vector<8x16xf32>
    %1327 = arith.addf %1301, %1326 : vector<8x16xf32>
    %1328 = vector.broadcast %173 : f32 to vector<8x16xf32>
    %1329 = arith.mulf %1328, %1309 : vector<8x16xf32>
    %1330 = arith.addf %1304, %1329 : vector<8x16xf32>
    %1331 = vector.broadcast %200 : f32 to vector<8x16xf32>
    %1332 = arith.mulf %1331, %1309 : vector<8x16xf32>
    %1333 = arith.addf %1307, %1332 : vector<8x16xf32>
    %c0_616 = arith.constant 0 : index
    %c0_617 = arith.constant 0 : index
    %c9_618 = arith.constant 9 : index
    %c1_619 = arith.constant 1 : index
    %1334 = vector.load %arg1[%c0_616, %c0_617, %c9_618, %c1_619] : memref<1x3x18x18xf32, #tpu.memory_space<vmem>>, vector<1x1x8x16xf32>
    %1335 = vector.shape_cast %1334 : vector<1x1x8x16xf32> to vector<8x16xf32>
    %1336 = vector.broadcast %12 : f32 to vector<8x16xf32>
    %1337 = arith.mulf %1336, %1335 : vector<8x16xf32>
    %1338 = arith.addf %1312, %1337 : vector<8x16xf32>
    %1339 = vector.broadcast %39 : f32 to vector<8x16xf32>
    %1340 = arith.mulf %1339, %1335 : vector<8x16xf32>
    %1341 = arith.addf %1315, %1340 : vector<8x16xf32>
    %1342 = vector.broadcast %66 : f32 to vector<8x16xf32>
    %1343 = arith.mulf %1342, %1335 : vector<8x16xf32>
    %1344 = arith.addf %1318, %1343 : vector<8x16xf32>
    %1345 = vector.broadcast %93 : f32 to vector<8x16xf32>
    %1346 = arith.mulf %1345, %1335 : vector<8x16xf32>
    %1347 = arith.addf %1321, %1346 : vector<8x16xf32>
    %1348 = vector.broadcast %120 : f32 to vector<8x16xf32>
    %1349 = arith.mulf %1348, %1335 : vector<8x16xf32>
    %1350 = arith.addf %1324, %1349 : vector<8x16xf32>
    %1351 = vector.broadcast %147 : f32 to vector<8x16xf32>
    %1352 = arith.mulf %1351, %1335 : vector<8x16xf32>
    %1353 = arith.addf %1327, %1352 : vector<8x16xf32>
    %1354 = vector.broadcast %174 : f32 to vector<8x16xf32>
    %1355 = arith.mulf %1354, %1335 : vector<8x16xf32>
    %1356 = arith.addf %1330, %1355 : vector<8x16xf32>
    %1357 = vector.broadcast %201 : f32 to vector<8x16xf32>
    %1358 = arith.mulf %1357, %1335 : vector<8x16xf32>
    %1359 = arith.addf %1333, %1358 : vector<8x16xf32>
    %c0_620 = arith.constant 0 : index
    %c1_621 = arith.constant 1 : index
    %c9_622 = arith.constant 9 : index
    %c1_623 = arith.constant 1 : index
    %1360 = vector.load %arg1[%c0_620, %c1_621, %c9_622, %c1_623] : memref<1x3x18x18xf32, #tpu.memory_space<vmem>>, vector<1x1x8x16xf32>
    %1361 = vector.shape_cast %1360 : vector<1x1x8x16xf32> to vector<8x16xf32>
    %1362 = vector.broadcast %13 : f32 to vector<8x16xf32>
    %1363 = arith.mulf %1362, %1361 : vector<8x16xf32>
    %1364 = arith.addf %1338, %1363 : vector<8x16xf32>
    %1365 = vector.broadcast %40 : f32 to vector<8x16xf32>
    %1366 = arith.mulf %1365, %1361 : vector<8x16xf32>
    %1367 = arith.addf %1341, %1366 : vector<8x16xf32>
    %1368 = vector.broadcast %67 : f32 to vector<8x16xf32>
    %1369 = arith.mulf %1368, %1361 : vector<8x16xf32>
    %1370 = arith.addf %1344, %1369 : vector<8x16xf32>
    %1371 = vector.broadcast %94 : f32 to vector<8x16xf32>
    %1372 = arith.mulf %1371, %1361 : vector<8x16xf32>
    %1373 = arith.addf %1347, %1372 : vector<8x16xf32>
    %1374 = vector.broadcast %121 : f32 to vector<8x16xf32>
    %1375 = arith.mulf %1374, %1361 : vector<8x16xf32>
    %1376 = arith.addf %1350, %1375 : vector<8x16xf32>
    %1377 = vector.broadcast %148 : f32 to vector<8x16xf32>
    %1378 = arith.mulf %1377, %1361 : vector<8x16xf32>
    %1379 = arith.addf %1353, %1378 : vector<8x16xf32>
    %1380 = vector.broadcast %175 : f32 to vector<8x16xf32>
    %1381 = arith.mulf %1380, %1361 : vector<8x16xf32>
    %1382 = arith.addf %1356, %1381 : vector<8x16xf32>
    %1383 = vector.broadcast %202 : f32 to vector<8x16xf32>
    %1384 = arith.mulf %1383, %1361 : vector<8x16xf32>
    %1385 = arith.addf %1359, %1384 : vector<8x16xf32>
    %c0_624 = arith.constant 0 : index
    %c2_625 = arith.constant 2 : index
    %c9_626 = arith.constant 9 : index
    %c1_627 = arith.constant 1 : index
    %1386 = vector.load %arg1[%c0_624, %c2_625, %c9_626, %c1_627] : memref<1x3x18x18xf32, #tpu.memory_space<vmem>>, vector<1x1x8x16xf32>
    %1387 = vector.shape_cast %1386 : vector<1x1x8x16xf32> to vector<8x16xf32>
    %1388 = vector.broadcast %14 : f32 to vector<8x16xf32>
    %1389 = arith.mulf %1388, %1387 : vector<8x16xf32>
    %1390 = arith.addf %1364, %1389 : vector<8x16xf32>
    %1391 = vector.broadcast %41 : f32 to vector<8x16xf32>
    %1392 = arith.mulf %1391, %1387 : vector<8x16xf32>
    %1393 = arith.addf %1367, %1392 : vector<8x16xf32>
    %1394 = vector.broadcast %68 : f32 to vector<8x16xf32>
    %1395 = arith.mulf %1394, %1387 : vector<8x16xf32>
    %1396 = arith.addf %1370, %1395 : vector<8x16xf32>
    %1397 = vector.broadcast %95 : f32 to vector<8x16xf32>
    %1398 = arith.mulf %1397, %1387 : vector<8x16xf32>
    %1399 = arith.addf %1373, %1398 : vector<8x16xf32>
    %1400 = vector.broadcast %122 : f32 to vector<8x16xf32>
    %1401 = arith.mulf %1400, %1387 : vector<8x16xf32>
    %1402 = arith.addf %1376, %1401 : vector<8x16xf32>
    %1403 = vector.broadcast %149 : f32 to vector<8x16xf32>
    %1404 = arith.mulf %1403, %1387 : vector<8x16xf32>
    %1405 = arith.addf %1379, %1404 : vector<8x16xf32>
    %1406 = vector.broadcast %176 : f32 to vector<8x16xf32>
    %1407 = arith.mulf %1406, %1387 : vector<8x16xf32>
    %1408 = arith.addf %1382, %1407 : vector<8x16xf32>
    %1409 = vector.broadcast %203 : f32 to vector<8x16xf32>
    %1410 = arith.mulf %1409, %1387 : vector<8x16xf32>
    %1411 = arith.addf %1385, %1410 : vector<8x16xf32>
    %c0_628 = arith.constant 0 : index
    %c0_629 = arith.constant 0 : index
    %c9_630 = arith.constant 9 : index
    %c2_631 = arith.constant 2 : index
    %1412 = vector.load %arg1[%c0_628, %c0_629, %c9_630, %c2_631] : memref<1x3x18x18xf32, #tpu.memory_space<vmem>>, vector<1x1x8x16xf32>
    %1413 = vector.shape_cast %1412 : vector<1x1x8x16xf32> to vector<8x16xf32>
    %1414 = vector.broadcast %15 : f32 to vector<8x16xf32>
    %1415 = arith.mulf %1414, %1413 : vector<8x16xf32>
    %1416 = arith.addf %1390, %1415 : vector<8x16xf32>
    %1417 = vector.broadcast %42 : f32 to vector<8x16xf32>
    %1418 = arith.mulf %1417, %1413 : vector<8x16xf32>
    %1419 = arith.addf %1393, %1418 : vector<8x16xf32>
    %1420 = vector.broadcast %69 : f32 to vector<8x16xf32>
    %1421 = arith.mulf %1420, %1413 : vector<8x16xf32>
    %1422 = arith.addf %1396, %1421 : vector<8x16xf32>
    %1423 = vector.broadcast %96 : f32 to vector<8x16xf32>
    %1424 = arith.mulf %1423, %1413 : vector<8x16xf32>
    %1425 = arith.addf %1399, %1424 : vector<8x16xf32>
    %1426 = vector.broadcast %123 : f32 to vector<8x16xf32>
    %1427 = arith.mulf %1426, %1413 : vector<8x16xf32>
    %1428 = arith.addf %1402, %1427 : vector<8x16xf32>
    %1429 = vector.broadcast %150 : f32 to vector<8x16xf32>
    %1430 = arith.mulf %1429, %1413 : vector<8x16xf32>
    %1431 = arith.addf %1405, %1430 : vector<8x16xf32>
    %1432 = vector.broadcast %177 : f32 to vector<8x16xf32>
    %1433 = arith.mulf %1432, %1413 : vector<8x16xf32>
    %1434 = arith.addf %1408, %1433 : vector<8x16xf32>
    %1435 = vector.broadcast %204 : f32 to vector<8x16xf32>
    %1436 = arith.mulf %1435, %1413 : vector<8x16xf32>
    %1437 = arith.addf %1411, %1436 : vector<8x16xf32>
    %c0_632 = arith.constant 0 : index
    %c1_633 = arith.constant 1 : index
    %c9_634 = arith.constant 9 : index
    %c2_635 = arith.constant 2 : index
    %1438 = vector.load %arg1[%c0_632, %c1_633, %c9_634, %c2_635] : memref<1x3x18x18xf32, #tpu.memory_space<vmem>>, vector<1x1x8x16xf32>
    %1439 = vector.shape_cast %1438 : vector<1x1x8x16xf32> to vector<8x16xf32>
    %1440 = vector.broadcast %16 : f32 to vector<8x16xf32>
    %1441 = arith.mulf %1440, %1439 : vector<8x16xf32>
    %1442 = arith.addf %1416, %1441 : vector<8x16xf32>
    %1443 = vector.broadcast %43 : f32 to vector<8x16xf32>
    %1444 = arith.mulf %1443, %1439 : vector<8x16xf32>
    %1445 = arith.addf %1419, %1444 : vector<8x16xf32>
    %1446 = vector.broadcast %70 : f32 to vector<8x16xf32>
    %1447 = arith.mulf %1446, %1439 : vector<8x16xf32>
    %1448 = arith.addf %1422, %1447 : vector<8x16xf32>
    %1449 = vector.broadcast %97 : f32 to vector<8x16xf32>
    %1450 = arith.mulf %1449, %1439 : vector<8x16xf32>
    %1451 = arith.addf %1425, %1450 : vector<8x16xf32>
    %1452 = vector.broadcast %124 : f32 to vector<8x16xf32>
    %1453 = arith.mulf %1452, %1439 : vector<8x16xf32>
    %1454 = arith.addf %1428, %1453 : vector<8x16xf32>
    %1455 = vector.broadcast %151 : f32 to vector<8x16xf32>
    %1456 = arith.mulf %1455, %1439 : vector<8x16xf32>
    %1457 = arith.addf %1431, %1456 : vector<8x16xf32>
    %1458 = vector.broadcast %178 : f32 to vector<8x16xf32>
    %1459 = arith.mulf %1458, %1439 : vector<8x16xf32>
    %1460 = arith.addf %1434, %1459 : vector<8x16xf32>
    %1461 = vector.broadcast %205 : f32 to vector<8x16xf32>
    %1462 = arith.mulf %1461, %1439 : vector<8x16xf32>
    %1463 = arith.addf %1437, %1462 : vector<8x16xf32>
    %c0_636 = arith.constant 0 : index
    %c2_637 = arith.constant 2 : index
    %c9_638 = arith.constant 9 : index
    %c2_639 = arith.constant 2 : index
    %1464 = vector.load %arg1[%c0_636, %c2_637, %c9_638, %c2_639] : memref<1x3x18x18xf32, #tpu.memory_space<vmem>>, vector<1x1x8x16xf32>
    %1465 = vector.shape_cast %1464 : vector<1x1x8x16xf32> to vector<8x16xf32>
    %1466 = vector.broadcast %17 : f32 to vector<8x16xf32>
    %1467 = arith.mulf %1466, %1465 : vector<8x16xf32>
    %1468 = arith.addf %1442, %1467 : vector<8x16xf32>
    %1469 = vector.broadcast %44 : f32 to vector<8x16xf32>
    %1470 = arith.mulf %1469, %1465 : vector<8x16xf32>
    %1471 = arith.addf %1445, %1470 : vector<8x16xf32>
    %1472 = vector.broadcast %71 : f32 to vector<8x16xf32>
    %1473 = arith.mulf %1472, %1465 : vector<8x16xf32>
    %1474 = arith.addf %1448, %1473 : vector<8x16xf32>
    %1475 = vector.broadcast %98 : f32 to vector<8x16xf32>
    %1476 = arith.mulf %1475, %1465 : vector<8x16xf32>
    %1477 = arith.addf %1451, %1476 : vector<8x16xf32>
    %1478 = vector.broadcast %125 : f32 to vector<8x16xf32>
    %1479 = arith.mulf %1478, %1465 : vector<8x16xf32>
    %1480 = arith.addf %1454, %1479 : vector<8x16xf32>
    %1481 = vector.broadcast %152 : f32 to vector<8x16xf32>
    %1482 = arith.mulf %1481, %1465 : vector<8x16xf32>
    %1483 = arith.addf %1457, %1482 : vector<8x16xf32>
    %1484 = vector.broadcast %179 : f32 to vector<8x16xf32>
    %1485 = arith.mulf %1484, %1465 : vector<8x16xf32>
    %1486 = arith.addf %1460, %1485 : vector<8x16xf32>
    %1487 = vector.broadcast %206 : f32 to vector<8x16xf32>
    %1488 = arith.mulf %1487, %1465 : vector<8x16xf32>
    %1489 = arith.addf %1463, %1488 : vector<8x16xf32>
    %c0_640 = arith.constant 0 : index
    %c0_641 = arith.constant 0 : index
    %c10_642 = arith.constant 10 : index
    %c0_643 = arith.constant 0 : index
    %1490 = vector.load %arg1[%c0_640, %c0_641, %c10_642, %c0_643] : memref<1x3x18x18xf32, #tpu.memory_space<vmem>>, vector<1x1x8x16xf32>
    %1491 = vector.shape_cast %1490 : vector<1x1x8x16xf32> to vector<8x16xf32>
    %1492 = vector.broadcast %18 : f32 to vector<8x16xf32>
    %1493 = arith.mulf %1492, %1491 : vector<8x16xf32>
    %1494 = arith.addf %1468, %1493 : vector<8x16xf32>
    %1495 = vector.broadcast %45 : f32 to vector<8x16xf32>
    %1496 = arith.mulf %1495, %1491 : vector<8x16xf32>
    %1497 = arith.addf %1471, %1496 : vector<8x16xf32>
    %1498 = vector.broadcast %72 : f32 to vector<8x16xf32>
    %1499 = arith.mulf %1498, %1491 : vector<8x16xf32>
    %1500 = arith.addf %1474, %1499 : vector<8x16xf32>
    %1501 = vector.broadcast %99 : f32 to vector<8x16xf32>
    %1502 = arith.mulf %1501, %1491 : vector<8x16xf32>
    %1503 = arith.addf %1477, %1502 : vector<8x16xf32>
    %1504 = vector.broadcast %126 : f32 to vector<8x16xf32>
    %1505 = arith.mulf %1504, %1491 : vector<8x16xf32>
    %1506 = arith.addf %1480, %1505 : vector<8x16xf32>
    %1507 = vector.broadcast %153 : f32 to vector<8x16xf32>
    %1508 = arith.mulf %1507, %1491 : vector<8x16xf32>
    %1509 = arith.addf %1483, %1508 : vector<8x16xf32>
    %1510 = vector.broadcast %180 : f32 to vector<8x16xf32>
    %1511 = arith.mulf %1510, %1491 : vector<8x16xf32>
    %1512 = arith.addf %1486, %1511 : vector<8x16xf32>
    %1513 = vector.broadcast %207 : f32 to vector<8x16xf32>
    %1514 = arith.mulf %1513, %1491 : vector<8x16xf32>
    %1515 = arith.addf %1489, %1514 : vector<8x16xf32>
    %c0_644 = arith.constant 0 : index
    %c1_645 = arith.constant 1 : index
    %c10_646 = arith.constant 10 : index
    %c0_647 = arith.constant 0 : index
    %1516 = vector.load %arg1[%c0_644, %c1_645, %c10_646, %c0_647] : memref<1x3x18x18xf32, #tpu.memory_space<vmem>>, vector<1x1x8x16xf32>
    %1517 = vector.shape_cast %1516 : vector<1x1x8x16xf32> to vector<8x16xf32>
    %1518 = vector.broadcast %19 : f32 to vector<8x16xf32>
    %1519 = arith.mulf %1518, %1517 : vector<8x16xf32>
    %1520 = arith.addf %1494, %1519 : vector<8x16xf32>
    %1521 = vector.broadcast %46 : f32 to vector<8x16xf32>
    %1522 = arith.mulf %1521, %1517 : vector<8x16xf32>
    %1523 = arith.addf %1497, %1522 : vector<8x16xf32>
    %1524 = vector.broadcast %73 : f32 to vector<8x16xf32>
    %1525 = arith.mulf %1524, %1517 : vector<8x16xf32>
    %1526 = arith.addf %1500, %1525 : vector<8x16xf32>
    %1527 = vector.broadcast %100 : f32 to vector<8x16xf32>
    %1528 = arith.mulf %1527, %1517 : vector<8x16xf32>
    %1529 = arith.addf %1503, %1528 : vector<8x16xf32>
    %1530 = vector.broadcast %127 : f32 to vector<8x16xf32>
    %1531 = arith.mulf %1530, %1517 : vector<8x16xf32>
    %1532 = arith.addf %1506, %1531 : vector<8x16xf32>
    %1533 = vector.broadcast %154 : f32 to vector<8x16xf32>
    %1534 = arith.mulf %1533, %1517 : vector<8x16xf32>
    %1535 = arith.addf %1509, %1534 : vector<8x16xf32>
    %1536 = vector.broadcast %181 : f32 to vector<8x16xf32>
    %1537 = arith.mulf %1536, %1517 : vector<8x16xf32>
    %1538 = arith.addf %1512, %1537 : vector<8x16xf32>
    %1539 = vector.broadcast %208 : f32 to vector<8x16xf32>
    %1540 = arith.mulf %1539, %1517 : vector<8x16xf32>
    %1541 = arith.addf %1515, %1540 : vector<8x16xf32>
    %c0_648 = arith.constant 0 : index
    %c2_649 = arith.constant 2 : index
    %c10_650 = arith.constant 10 : index
    %c0_651 = arith.constant 0 : index
    %1542 = vector.load %arg1[%c0_648, %c2_649, %c10_650, %c0_651] : memref<1x3x18x18xf32, #tpu.memory_space<vmem>>, vector<1x1x8x16xf32>
    %1543 = vector.shape_cast %1542 : vector<1x1x8x16xf32> to vector<8x16xf32>
    %1544 = vector.broadcast %20 : f32 to vector<8x16xf32>
    %1545 = arith.mulf %1544, %1543 : vector<8x16xf32>
    %1546 = arith.addf %1520, %1545 : vector<8x16xf32>
    %1547 = vector.broadcast %47 : f32 to vector<8x16xf32>
    %1548 = arith.mulf %1547, %1543 : vector<8x16xf32>
    %1549 = arith.addf %1523, %1548 : vector<8x16xf32>
    %1550 = vector.broadcast %74 : f32 to vector<8x16xf32>
    %1551 = arith.mulf %1550, %1543 : vector<8x16xf32>
    %1552 = arith.addf %1526, %1551 : vector<8x16xf32>
    %1553 = vector.broadcast %101 : f32 to vector<8x16xf32>
    %1554 = arith.mulf %1553, %1543 : vector<8x16xf32>
    %1555 = arith.addf %1529, %1554 : vector<8x16xf32>
    %1556 = vector.broadcast %128 : f32 to vector<8x16xf32>
    %1557 = arith.mulf %1556, %1543 : vector<8x16xf32>
    %1558 = arith.addf %1532, %1557 : vector<8x16xf32>
    %1559 = vector.broadcast %155 : f32 to vector<8x16xf32>
    %1560 = arith.mulf %1559, %1543 : vector<8x16xf32>
    %1561 = arith.addf %1535, %1560 : vector<8x16xf32>
    %1562 = vector.broadcast %182 : f32 to vector<8x16xf32>
    %1563 = arith.mulf %1562, %1543 : vector<8x16xf32>
    %1564 = arith.addf %1538, %1563 : vector<8x16xf32>
    %1565 = vector.broadcast %209 : f32 to vector<8x16xf32>
    %1566 = arith.mulf %1565, %1543 : vector<8x16xf32>
    %1567 = arith.addf %1541, %1566 : vector<8x16xf32>
    %c0_652 = arith.constant 0 : index
    %c0_653 = arith.constant 0 : index
    %c10_654 = arith.constant 10 : index
    %c1_655 = arith.constant 1 : index
    %1568 = vector.load %arg1[%c0_652, %c0_653, %c10_654, %c1_655] : memref<1x3x18x18xf32, #tpu.memory_space<vmem>>, vector<1x1x8x16xf32>
    %1569 = vector.shape_cast %1568 : vector<1x1x8x16xf32> to vector<8x16xf32>
    %1570 = vector.broadcast %21 : f32 to vector<8x16xf32>
    %1571 = arith.mulf %1570, %1569 : vector<8x16xf32>
    %1572 = arith.addf %1546, %1571 : vector<8x16xf32>
    %1573 = vector.broadcast %48 : f32 to vector<8x16xf32>
    %1574 = arith.mulf %1573, %1569 : vector<8x16xf32>
    %1575 = arith.addf %1549, %1574 : vector<8x16xf32>
    %1576 = vector.broadcast %75 : f32 to vector<8x16xf32>
    %1577 = arith.mulf %1576, %1569 : vector<8x16xf32>
    %1578 = arith.addf %1552, %1577 : vector<8x16xf32>
    %1579 = vector.broadcast %102 : f32 to vector<8x16xf32>
    %1580 = arith.mulf %1579, %1569 : vector<8x16xf32>
    %1581 = arith.addf %1555, %1580 : vector<8x16xf32>
    %1582 = vector.broadcast %129 : f32 to vector<8x16xf32>
    %1583 = arith.mulf %1582, %1569 : vector<8x16xf32>
    %1584 = arith.addf %1558, %1583 : vector<8x16xf32>
    %1585 = vector.broadcast %156 : f32 to vector<8x16xf32>
    %1586 = arith.mulf %1585, %1569 : vector<8x16xf32>
    %1587 = arith.addf %1561, %1586 : vector<8x16xf32>
    %1588 = vector.broadcast %183 : f32 to vector<8x16xf32>
    %1589 = arith.mulf %1588, %1569 : vector<8x16xf32>
    %1590 = arith.addf %1564, %1589 : vector<8x16xf32>
    %1591 = vector.broadcast %210 : f32 to vector<8x16xf32>
    %1592 = arith.mulf %1591, %1569 : vector<8x16xf32>
    %1593 = arith.addf %1567, %1592 : vector<8x16xf32>
    %c0_656 = arith.constant 0 : index
    %c1_657 = arith.constant 1 : index
    %c10_658 = arith.constant 10 : index
    %c1_659 = arith.constant 1 : index
    %1594 = vector.load %arg1[%c0_656, %c1_657, %c10_658, %c1_659] : memref<1x3x18x18xf32, #tpu.memory_space<vmem>>, vector<1x1x8x16xf32>
    %1595 = vector.shape_cast %1594 : vector<1x1x8x16xf32> to vector<8x16xf32>
    %1596 = vector.broadcast %22 : f32 to vector<8x16xf32>
    %1597 = arith.mulf %1596, %1595 : vector<8x16xf32>
    %1598 = arith.addf %1572, %1597 : vector<8x16xf32>
    %1599 = vector.broadcast %49 : f32 to vector<8x16xf32>
    %1600 = arith.mulf %1599, %1595 : vector<8x16xf32>
    %1601 = arith.addf %1575, %1600 : vector<8x16xf32>
    %1602 = vector.broadcast %76 : f32 to vector<8x16xf32>
    %1603 = arith.mulf %1602, %1595 : vector<8x16xf32>
    %1604 = arith.addf %1578, %1603 : vector<8x16xf32>
    %1605 = vector.broadcast %103 : f32 to vector<8x16xf32>
    %1606 = arith.mulf %1605, %1595 : vector<8x16xf32>
    %1607 = arith.addf %1581, %1606 : vector<8x16xf32>
    %1608 = vector.broadcast %130 : f32 to vector<8x16xf32>
    %1609 = arith.mulf %1608, %1595 : vector<8x16xf32>
    %1610 = arith.addf %1584, %1609 : vector<8x16xf32>
    %1611 = vector.broadcast %157 : f32 to vector<8x16xf32>
    %1612 = arith.mulf %1611, %1595 : vector<8x16xf32>
    %1613 = arith.addf %1587, %1612 : vector<8x16xf32>
    %1614 = vector.broadcast %184 : f32 to vector<8x16xf32>
    %1615 = arith.mulf %1614, %1595 : vector<8x16xf32>
    %1616 = arith.addf %1590, %1615 : vector<8x16xf32>
    %1617 = vector.broadcast %211 : f32 to vector<8x16xf32>
    %1618 = arith.mulf %1617, %1595 : vector<8x16xf32>
    %1619 = arith.addf %1593, %1618 : vector<8x16xf32>
    %c0_660 = arith.constant 0 : index
    %c2_661 = arith.constant 2 : index
    %c10_662 = arith.constant 10 : index
    %c1_663 = arith.constant 1 : index
    %1620 = vector.load %arg1[%c0_660, %c2_661, %c10_662, %c1_663] : memref<1x3x18x18xf32, #tpu.memory_space<vmem>>, vector<1x1x8x16xf32>
    %1621 = vector.shape_cast %1620 : vector<1x1x8x16xf32> to vector<8x16xf32>
    %1622 = vector.broadcast %23 : f32 to vector<8x16xf32>
    %1623 = arith.mulf %1622, %1621 : vector<8x16xf32>
    %1624 = arith.addf %1598, %1623 : vector<8x16xf32>
    %1625 = vector.broadcast %50 : f32 to vector<8x16xf32>
    %1626 = arith.mulf %1625, %1621 : vector<8x16xf32>
    %1627 = arith.addf %1601, %1626 : vector<8x16xf32>
    %1628 = vector.broadcast %77 : f32 to vector<8x16xf32>
    %1629 = arith.mulf %1628, %1621 : vector<8x16xf32>
    %1630 = arith.addf %1604, %1629 : vector<8x16xf32>
    %1631 = vector.broadcast %104 : f32 to vector<8x16xf32>
    %1632 = arith.mulf %1631, %1621 : vector<8x16xf32>
    %1633 = arith.addf %1607, %1632 : vector<8x16xf32>
    %1634 = vector.broadcast %131 : f32 to vector<8x16xf32>
    %1635 = arith.mulf %1634, %1621 : vector<8x16xf32>
    %1636 = arith.addf %1610, %1635 : vector<8x16xf32>
    %1637 = vector.broadcast %158 : f32 to vector<8x16xf32>
    %1638 = arith.mulf %1637, %1621 : vector<8x16xf32>
    %1639 = arith.addf %1613, %1638 : vector<8x16xf32>
    %1640 = vector.broadcast %185 : f32 to vector<8x16xf32>
    %1641 = arith.mulf %1640, %1621 : vector<8x16xf32>
    %1642 = arith.addf %1616, %1641 : vector<8x16xf32>
    %1643 = vector.broadcast %212 : f32 to vector<8x16xf32>
    %1644 = arith.mulf %1643, %1621 : vector<8x16xf32>
    %1645 = arith.addf %1619, %1644 : vector<8x16xf32>
    %c0_664 = arith.constant 0 : index
    %c0_665 = arith.constant 0 : index
    %c10_666 = arith.constant 10 : index
    %c2_667 = arith.constant 2 : index
    %1646 = vector.load %arg1[%c0_664, %c0_665, %c10_666, %c2_667] : memref<1x3x18x18xf32, #tpu.memory_space<vmem>>, vector<1x1x8x16xf32>
    %1647 = vector.shape_cast %1646 : vector<1x1x8x16xf32> to vector<8x16xf32>
    %1648 = vector.broadcast %24 : f32 to vector<8x16xf32>
    %1649 = arith.mulf %1648, %1647 : vector<8x16xf32>
    %1650 = arith.addf %1624, %1649 : vector<8x16xf32>
    %1651 = vector.broadcast %51 : f32 to vector<8x16xf32>
    %1652 = arith.mulf %1651, %1647 : vector<8x16xf32>
    %1653 = arith.addf %1627, %1652 : vector<8x16xf32>
    %1654 = vector.broadcast %78 : f32 to vector<8x16xf32>
    %1655 = arith.mulf %1654, %1647 : vector<8x16xf32>
    %1656 = arith.addf %1630, %1655 : vector<8x16xf32>
    %1657 = vector.broadcast %105 : f32 to vector<8x16xf32>
    %1658 = arith.mulf %1657, %1647 : vector<8x16xf32>
    %1659 = arith.addf %1633, %1658 : vector<8x16xf32>
    %1660 = vector.broadcast %132 : f32 to vector<8x16xf32>
    %1661 = arith.mulf %1660, %1647 : vector<8x16xf32>
    %1662 = arith.addf %1636, %1661 : vector<8x16xf32>
    %1663 = vector.broadcast %159 : f32 to vector<8x16xf32>
    %1664 = arith.mulf %1663, %1647 : vector<8x16xf32>
    %1665 = arith.addf %1639, %1664 : vector<8x16xf32>
    %1666 = vector.broadcast %186 : f32 to vector<8x16xf32>
    %1667 = arith.mulf %1666, %1647 : vector<8x16xf32>
    %1668 = arith.addf %1642, %1667 : vector<8x16xf32>
    %1669 = vector.broadcast %213 : f32 to vector<8x16xf32>
    %1670 = arith.mulf %1669, %1647 : vector<8x16xf32>
    %1671 = arith.addf %1645, %1670 : vector<8x16xf32>
    %c0_668 = arith.constant 0 : index
    %c1_669 = arith.constant 1 : index
    %c10_670 = arith.constant 10 : index
    %c2_671 = arith.constant 2 : index
    %1672 = vector.load %arg1[%c0_668, %c1_669, %c10_670, %c2_671] : memref<1x3x18x18xf32, #tpu.memory_space<vmem>>, vector<1x1x8x16xf32>
    %1673 = vector.shape_cast %1672 : vector<1x1x8x16xf32> to vector<8x16xf32>
    %1674 = vector.broadcast %25 : f32 to vector<8x16xf32>
    %1675 = arith.mulf %1674, %1673 : vector<8x16xf32>
    %1676 = arith.addf %1650, %1675 : vector<8x16xf32>
    %1677 = vector.broadcast %52 : f32 to vector<8x16xf32>
    %1678 = arith.mulf %1677, %1673 : vector<8x16xf32>
    %1679 = arith.addf %1653, %1678 : vector<8x16xf32>
    %1680 = vector.broadcast %79 : f32 to vector<8x16xf32>
    %1681 = arith.mulf %1680, %1673 : vector<8x16xf32>
    %1682 = arith.addf %1656, %1681 : vector<8x16xf32>
    %1683 = vector.broadcast %106 : f32 to vector<8x16xf32>
    %1684 = arith.mulf %1683, %1673 : vector<8x16xf32>
    %1685 = arith.addf %1659, %1684 : vector<8x16xf32>
    %1686 = vector.broadcast %133 : f32 to vector<8x16xf32>
    %1687 = arith.mulf %1686, %1673 : vector<8x16xf32>
    %1688 = arith.addf %1662, %1687 : vector<8x16xf32>
    %1689 = vector.broadcast %160 : f32 to vector<8x16xf32>
    %1690 = arith.mulf %1689, %1673 : vector<8x16xf32>
    %1691 = arith.addf %1665, %1690 : vector<8x16xf32>
    %1692 = vector.broadcast %187 : f32 to vector<8x16xf32>
    %1693 = arith.mulf %1692, %1673 : vector<8x16xf32>
    %1694 = arith.addf %1668, %1693 : vector<8x16xf32>
    %1695 = vector.broadcast %214 : f32 to vector<8x16xf32>
    %1696 = arith.mulf %1695, %1673 : vector<8x16xf32>
    %1697 = arith.addf %1671, %1696 : vector<8x16xf32>
    %c0_672 = arith.constant 0 : index
    %c2_673 = arith.constant 2 : index
    %c10_674 = arith.constant 10 : index
    %c2_675 = arith.constant 2 : index
    %1698 = vector.load %arg1[%c0_672, %c2_673, %c10_674, %c2_675] : memref<1x3x18x18xf32, #tpu.memory_space<vmem>>, vector<1x1x8x16xf32>
    %1699 = vector.shape_cast %1698 : vector<1x1x8x16xf32> to vector<8x16xf32>
    %1700 = vector.broadcast %26 : f32 to vector<8x16xf32>
    %1701 = arith.mulf %1700, %1699 : vector<8x16xf32>
    %1702 = arith.addf %1676, %1701 : vector<8x16xf32>
    %1703 = vector.broadcast %53 : f32 to vector<8x16xf32>
    %1704 = arith.mulf %1703, %1699 : vector<8x16xf32>
    %1705 = arith.addf %1679, %1704 : vector<8x16xf32>
    %1706 = vector.broadcast %80 : f32 to vector<8x16xf32>
    %1707 = arith.mulf %1706, %1699 : vector<8x16xf32>
    %1708 = arith.addf %1682, %1707 : vector<8x16xf32>
    %1709 = vector.broadcast %107 : f32 to vector<8x16xf32>
    %1710 = arith.mulf %1709, %1699 : vector<8x16xf32>
    %1711 = arith.addf %1685, %1710 : vector<8x16xf32>
    %1712 = vector.broadcast %134 : f32 to vector<8x16xf32>
    %1713 = arith.mulf %1712, %1699 : vector<8x16xf32>
    %1714 = arith.addf %1688, %1713 : vector<8x16xf32>
    %1715 = vector.broadcast %161 : f32 to vector<8x16xf32>
    %1716 = arith.mulf %1715, %1699 : vector<8x16xf32>
    %1717 = arith.addf %1691, %1716 : vector<8x16xf32>
    %1718 = vector.broadcast %188 : f32 to vector<8x16xf32>
    %1719 = arith.mulf %1718, %1699 : vector<8x16xf32>
    %1720 = arith.addf %1694, %1719 : vector<8x16xf32>
    %1721 = vector.broadcast %215 : f32 to vector<8x16xf32>
    %1722 = arith.mulf %1721, %1699 : vector<8x16xf32>
    %1723 = arith.addf %1697, %1722 : vector<8x16xf32>
    %1724 = vector.broadcast %216 : f32 to vector<8x16xf32>
    %1725 = arith.addf %1702, %1724 : vector<8x16xf32>
    %cst_676 = arith.constant 0.000000e+00 : f32
    %1726 = vector.broadcast %cst_676 : f32 to vector<8x16xf32>
    %1727 = arith.maximumf %1725, %1726 : vector<8x16xf32>
    %cst_677 = arith.constant dense<0.000000e+00> : vector<8xf32>
    %1728 = vector.multi_reduction <add>, %1727, %cst_677 [1] : vector<8x16xf32> to vector<8xf32>
    %1729 = vector.shape_cast %1728 : vector<8xf32> to vector<8x1xf32>
    %cst_678 = arith.constant dense<0.000000e+00> : vector<1xf32>
    %1730 = vector.multi_reduction <add>, %1729, %cst_678 [0] : vector<8x1xf32> to vector<1xf32>
    %1731 = vector.shape_cast %1730 : vector<1xf32> to vector<1x1xf32>
    %1732 = arith.addf %950, %1731 : vector<1x1xf32>
    %1733 = vector.broadcast %217 : f32 to vector<8x16xf32>
    %1734 = arith.addf %1705, %1733 : vector<8x16xf32>
    %cst_679 = arith.constant 0.000000e+00 : f32
    %1735 = vector.broadcast %cst_679 : f32 to vector<8x16xf32>
    %1736 = arith.maximumf %1734, %1735 : vector<8x16xf32>
    %cst_680 = arith.constant dense<0.000000e+00> : vector<8xf32>
    %1737 = vector.multi_reduction <add>, %1736, %cst_680 [1] : vector<8x16xf32> to vector<8xf32>
    %1738 = vector.shape_cast %1737 : vector<8xf32> to vector<8x1xf32>
    %cst_681 = arith.constant dense<0.000000e+00> : vector<1xf32>
    %1739 = vector.multi_reduction <add>, %1738, %cst_681 [0] : vector<8x1xf32> to vector<1xf32>
    %1740 = vector.shape_cast %1739 : vector<1xf32> to vector<1x1xf32>
    %1741 = arith.addf %959, %1740 : vector<1x1xf32>
    %1742 = vector.broadcast %218 : f32 to vector<8x16xf32>
    %1743 = arith.addf %1708, %1742 : vector<8x16xf32>
    %cst_682 = arith.constant 0.000000e+00 : f32
    %1744 = vector.broadcast %cst_682 : f32 to vector<8x16xf32>
    %1745 = arith.maximumf %1743, %1744 : vector<8x16xf32>
    %cst_683 = arith.constant dense<0.000000e+00> : vector<8xf32>
    %1746 = vector.multi_reduction <add>, %1745, %cst_683 [1] : vector<8x16xf32> to vector<8xf32>
    %1747 = vector.shape_cast %1746 : vector<8xf32> to vector<8x1xf32>
    %cst_684 = arith.constant dense<0.000000e+00> : vector<1xf32>
    %1748 = vector.multi_reduction <add>, %1747, %cst_684 [0] : vector<8x1xf32> to vector<1xf32>
    %1749 = vector.shape_cast %1748 : vector<1xf32> to vector<1x1xf32>
    %1750 = arith.addf %968, %1749 : vector<1x1xf32>
    %1751 = vector.broadcast %219 : f32 to vector<8x16xf32>
    %1752 = arith.addf %1711, %1751 : vector<8x16xf32>
    %cst_685 = arith.constant 0.000000e+00 : f32
    %1753 = vector.broadcast %cst_685 : f32 to vector<8x16xf32>
    %1754 = arith.maximumf %1752, %1753 : vector<8x16xf32>
    %cst_686 = arith.constant dense<0.000000e+00> : vector<8xf32>
    %1755 = vector.multi_reduction <add>, %1754, %cst_686 [1] : vector<8x16xf32> to vector<8xf32>
    %1756 = vector.shape_cast %1755 : vector<8xf32> to vector<8x1xf32>
    %cst_687 = arith.constant dense<0.000000e+00> : vector<1xf32>
    %1757 = vector.multi_reduction <add>, %1756, %cst_687 [0] : vector<8x1xf32> to vector<1xf32>
    %1758 = vector.shape_cast %1757 : vector<1xf32> to vector<1x1xf32>
    %1759 = arith.addf %977, %1758 : vector<1x1xf32>
    %1760 = vector.broadcast %220 : f32 to vector<8x16xf32>
    %1761 = arith.addf %1714, %1760 : vector<8x16xf32>
    %cst_688 = arith.constant 0.000000e+00 : f32
    %1762 = vector.broadcast %cst_688 : f32 to vector<8x16xf32>
    %1763 = arith.maximumf %1761, %1762 : vector<8x16xf32>
    %cst_689 = arith.constant dense<0.000000e+00> : vector<8xf32>
    %1764 = vector.multi_reduction <add>, %1763, %cst_689 [1] : vector<8x16xf32> to vector<8xf32>
    %1765 = vector.shape_cast %1764 : vector<8xf32> to vector<8x1xf32>
    %cst_690 = arith.constant dense<0.000000e+00> : vector<1xf32>
    %1766 = vector.multi_reduction <add>, %1765, %cst_690 [0] : vector<8x1xf32> to vector<1xf32>
    %1767 = vector.shape_cast %1766 : vector<1xf32> to vector<1x1xf32>
    %1768 = arith.addf %986, %1767 : vector<1x1xf32>
    %1769 = vector.broadcast %221 : f32 to vector<8x16xf32>
    %1770 = arith.addf %1717, %1769 : vector<8x16xf32>
    %cst_691 = arith.constant 0.000000e+00 : f32
    %1771 = vector.broadcast %cst_691 : f32 to vector<8x16xf32>
    %1772 = arith.maximumf %1770, %1771 : vector<8x16xf32>
    %cst_692 = arith.constant dense<0.000000e+00> : vector<8xf32>
    %1773 = vector.multi_reduction <add>, %1772, %cst_692 [1] : vector<8x16xf32> to vector<8xf32>
    %1774 = vector.shape_cast %1773 : vector<8xf32> to vector<8x1xf32>
    %cst_693 = arith.constant dense<0.000000e+00> : vector<1xf32>
    %1775 = vector.multi_reduction <add>, %1774, %cst_693 [0] : vector<8x1xf32> to vector<1xf32>
    %1776 = vector.shape_cast %1775 : vector<1xf32> to vector<1x1xf32>
    %1777 = arith.addf %995, %1776 : vector<1x1xf32>
    %1778 = vector.broadcast %222 : f32 to vector<8x16xf32>
    %1779 = arith.addf %1720, %1778 : vector<8x16xf32>
    %cst_694 = arith.constant 0.000000e+00 : f32
    %1780 = vector.broadcast %cst_694 : f32 to vector<8x16xf32>
    %1781 = arith.maximumf %1779, %1780 : vector<8x16xf32>
    %cst_695 = arith.constant dense<0.000000e+00> : vector<8xf32>
    %1782 = vector.multi_reduction <add>, %1781, %cst_695 [1] : vector<8x16xf32> to vector<8xf32>
    %1783 = vector.shape_cast %1782 : vector<8xf32> to vector<8x1xf32>
    %cst_696 = arith.constant dense<0.000000e+00> : vector<1xf32>
    %1784 = vector.multi_reduction <add>, %1783, %cst_696 [0] : vector<8x1xf32> to vector<1xf32>
    %1785 = vector.shape_cast %1784 : vector<1xf32> to vector<1x1xf32>
    %1786 = arith.addf %1004, %1785 : vector<1x1xf32>
    %1787 = vector.broadcast %223 : f32 to vector<8x16xf32>
    %1788 = arith.addf %1723, %1787 : vector<8x16xf32>
    %cst_697 = arith.constant 0.000000e+00 : f32
    %1789 = vector.broadcast %cst_697 : f32 to vector<8x16xf32>
    %1790 = arith.maximumf %1788, %1789 : vector<8x16xf32>
    %cst_698 = arith.constant dense<0.000000e+00> : vector<8xf32>
    %1791 = vector.multi_reduction <add>, %1790, %cst_698 [1] : vector<8x16xf32> to vector<8xf32>
    %1792 = vector.shape_cast %1791 : vector<8xf32> to vector<8x1xf32>
    %cst_699 = arith.constant dense<0.000000e+00> : vector<1xf32>
    %1793 = vector.multi_reduction <add>, %1792, %cst_699 [0] : vector<8x1xf32> to vector<1xf32>
    %1794 = vector.shape_cast %1793 : vector<1xf32> to vector<1x1xf32>
    %1795 = arith.addf %1013, %1794 : vector<1x1xf32>
    %c0_700 = arith.constant 0 : index
    %c0_701 = arith.constant 0 : index
    %1796 = vector.load %arg5[%c0_700, %c0_701] : memref<1x128xf32, #tpu.memory_space<vmem>>, vector<1x128xf32>
    %cst_702 = arith.constant 3.906250e-03 : f32
    %1797 = vector.broadcast %cst_702 : f32 to vector<1x1xf32>
    %1798 = arith.mulf %1732, %1797 : vector<1x1xf32>
    %c0_703 = arith.constant 0 : index
    %c0_704 = arith.constant 0 : index
    %1799 = vector.load %arg4[%c0_703, %c0_704] : memref<8x128xf32, #tpu.memory_space<vmem>>, vector<1x128xf32>
    %1800 = vector.broadcast %1798 : vector<1x1xf32> to vector<1x128xf32>
    %1801 = arith.mulf %1800, %1799 : vector<1x128xf32>
    %1802 = arith.addf %1796, %1801 : vector<1x128xf32>
    %cst_705 = arith.constant 3.906250e-03 : f32
    %1803 = vector.broadcast %cst_705 : f32 to vector<1x1xf32>
    %1804 = arith.mulf %1741, %1803 : vector<1x1xf32>
    %c1_706 = arith.constant 1 : index
    %c0_707 = arith.constant 0 : index
    %1805 = vector.load %arg4[%c1_706, %c0_707] : memref<8x128xf32, #tpu.memory_space<vmem>>, vector<1x128xf32>
    %1806 = vector.broadcast %1804 : vector<1x1xf32> to vector<1x128xf32>
    %1807 = arith.mulf %1806, %1805 : vector<1x128xf32>
    %1808 = arith.addf %1802, %1807 : vector<1x128xf32>
    %cst_708 = arith.constant 3.906250e-03 : f32
    %1809 = vector.broadcast %cst_708 : f32 to vector<1x1xf32>
    %1810 = arith.mulf %1750, %1809 : vector<1x1xf32>
    %c2_709 = arith.constant 2 : index
    %c0_710 = arith.constant 0 : index
    %1811 = vector.load %arg4[%c2_709, %c0_710] : memref<8x128xf32, #tpu.memory_space<vmem>>, vector<1x128xf32>
    %1812 = vector.broadcast %1810 : vector<1x1xf32> to vector<1x128xf32>
    %1813 = arith.mulf %1812, %1811 : vector<1x128xf32>
    %1814 = arith.addf %1808, %1813 : vector<1x128xf32>
    %cst_711 = arith.constant 3.906250e-03 : f32
    %1815 = vector.broadcast %cst_711 : f32 to vector<1x1xf32>
    %1816 = arith.mulf %1759, %1815 : vector<1x1xf32>
    %c3_712 = arith.constant 3 : index
    %c0_713 = arith.constant 0 : index
    %1817 = vector.load %arg4[%c3_712, %c0_713] : memref<8x128xf32, #tpu.memory_space<vmem>>, vector<1x128xf32>
    %1818 = vector.broadcast %1816 : vector<1x1xf32> to vector<1x128xf32>
    %1819 = arith.mulf %1818, %1817 : vector<1x128xf32>
    %1820 = arith.addf %1814, %1819 : vector<1x128xf32>
    %cst_714 = arith.constant 3.906250e-03 : f32
    %1821 = vector.broadcast %cst_714 : f32 to vector<1x1xf32>
    %1822 = arith.mulf %1768, %1821 : vector<1x1xf32>
    %c4_715 = arith.constant 4 : index
    %c0_716 = arith.constant 0 : index
    %1823 = vector.load %arg4[%c4_715, %c0_716] : memref<8x128xf32, #tpu.memory_space<vmem>>, vector<1x128xf32>
    %1824 = vector.broadcast %1822 : vector<1x1xf32> to vector<1x128xf32>
    %1825 = arith.mulf %1824, %1823 : vector<1x128xf32>
    %1826 = arith.addf %1820, %1825 : vector<1x128xf32>
    %cst_717 = arith.constant 3.906250e-03 : f32
    %1827 = vector.broadcast %cst_717 : f32 to vector<1x1xf32>
    %1828 = arith.mulf %1777, %1827 : vector<1x1xf32>
    %c5_718 = arith.constant 5 : index
    %c0_719 = arith.constant 0 : index
    %1829 = vector.load %arg4[%c5_718, %c0_719] : memref<8x128xf32, #tpu.memory_space<vmem>>, vector<1x128xf32>
    %1830 = vector.broadcast %1828 : vector<1x1xf32> to vector<1x128xf32>
    %1831 = arith.mulf %1830, %1829 : vector<1x128xf32>
    %1832 = arith.addf %1826, %1831 : vector<1x128xf32>
    %cst_720 = arith.constant 3.906250e-03 : f32
    %1833 = vector.broadcast %cst_720 : f32 to vector<1x1xf32>
    %1834 = arith.mulf %1786, %1833 : vector<1x1xf32>
    %c6_721 = arith.constant 6 : index
    %c0_722 = arith.constant 0 : index
    %1835 = vector.load %arg4[%c6_721, %c0_722] : memref<8x128xf32, #tpu.memory_space<vmem>>, vector<1x128xf32>
    %1836 = vector.broadcast %1834 : vector<1x1xf32> to vector<1x128xf32>
    %1837 = arith.mulf %1836, %1835 : vector<1x128xf32>
    %1838 = arith.addf %1832, %1837 : vector<1x128xf32>
    %cst_723 = arith.constant 3.906250e-03 : f32
    %1839 = vector.broadcast %cst_723 : f32 to vector<1x1xf32>
    %1840 = arith.mulf %1795, %1839 : vector<1x1xf32>
    %c7_724 = arith.constant 7 : index
    %c0_725 = arith.constant 0 : index
    %1841 = vector.load %arg4[%c7_724, %c0_725] : memref<8x128xf32, #tpu.memory_space<vmem>>, vector<1x128xf32>
    %1842 = vector.broadcast %1840 : vector<1x1xf32> to vector<1x128xf32>
    %1843 = arith.mulf %1842, %1841 : vector<1x128xf32>
    %1844 = arith.addf %1838, %1843 : vector<1x128xf32>
    %cst_726 = arith.constant 0.000000e+00 : f32
    %1845 = vector.broadcast %cst_726 : f32 to vector<1x128xf32>
    %1846 = arith.maximumf %1844, %1845 : vector<1x128xf32>
    %c0_727 = arith.constant 0 : index
    %c0_728 = arith.constant 0 : index
    %c0_729 = arith.constant 0 : index
    %1847 = vector.load %arg9[%c0_727, %c0_728, %c0_729] : memref<1x1x128xf32, #tpu.memory_space<vmem>>, vector<1x1x128xf32>
    %1848 = vector.shape_cast %1847 : vector<1x1x128xf32> to vector<1x128xf32>
    %1849 = vector.shape_cast %1846 : vector<1x128xf32> to vector<1x1x128xf32>
    tpu.vector_store %arg9[%c0_727, %c0_728, %c0_729], %1849 {strides = array<i32>} : memref<1x1x128xf32, #tpu.memory_space<vmem>>, vector<1x1x128xf32>,
    %cst_730 = arith.constant 0.000000e+00 : f32
    %1850 = vector.broadcast %cst_730 : f32 to vector<7x128xf32>
    %1851 = tpu.concatenate %1846, %1850 in 0 : vector<1x128xf32>, vector<7x128xf32> -> vector<8x128xf32>
    %c0_731 = arith.constant 0 : index
    %c0_732 = arith.constant 0 : index
    %1852 = vector.load %arg6[%c0_731, %c0_732] : memref<128x128xf32, #tpu.memory_space<vmem>>, vector<128x128xf32>
    %cst_733 = arith.constant dense<0.000000e+00> : vector<8x128xf32>
    %1853 = tpu.matmul %1851, %1852, %cst_733 {dimension_numbers = #tpu.dot_dimension_numbers<[1], [0], [0], [1], [0, 0, 1, 1], [], []>} : vector<8x128xf32>, vector<128x128xf32>, vector<8x128xf32> -> vector<8x128xf32>
    %1854 = vector.extract_strided_slice %1853 {offsets = [0, 0], sizes = [1, 128], strides = [1, 1]} : vector<8x128xf32> to vector<1x128xf32>
    %c0_734 = arith.constant 0 : index
    %c0_735 = arith.constant 0 : index
    %1855 = vector.load %arg7[%c0_734, %c0_735] : memref<1x128xf32, #tpu.memory_space<vmem>>, vector<1x128xf32>
    %1856 = arith.addf %1854, %1855 : vector<1x128xf32>
    %c0_736 = arith.constant 0 : index
    %c0_737 = arith.constant 0 : index
    %c0_738 = arith.constant 0 : index
    %1857 = vector.load %arg8[%c0_736, %c0_737, %c0_738] : memref<1x1x128xf32, #tpu.memory_space<vmem>>, vector<1x1x128xf32>
    %1858 = vector.shape_cast %1857 : vector<1x1x128xf32> to vector<1x128xf32>
    %1859 = vector.shape_cast %1856 : vector<1x128xf32> to vector<1x1x128xf32>
    tpu.vector_store %arg8[%c0_736, %c0_737, %c0_738], %1859 {strides = array<i32>} : memref<1x1x128xf32, #tpu.memory_space<vmem>>, vector<1x1x128xf32>,
    return
  }
  func.func @transform_0(%arg0: i32) -> (i32, i32, i32, i32) {
    %c0_i32 = arith.constant 0 : i32
    %c0_i32_0 = arith.constant 0 : i32
    %c0_i32_1 = arith.constant 0 : i32
    %c0_i32_2 = arith.constant 0 : i32
    return %arg0, %c0_i32, %c0_i32_0, %c0_i32_1 : i32, i32, i32, i32
  }
  func.func @transform_1(%arg0: i32) -> (i32, i32) {
    %c0_i32 = arith.constant 0 : i32
    %c0_i32_0 = arith.constant 0 : i32
    %c0_i32_1 = arith.constant 0 : i32
    return %c0_i32, %c0_i32_0 : i32, i32
  }
  func.func @transform_2(%arg0: i32) -> i32 {
    %c0_i32 = arith.constant 0 : i32
    %c0_i32_0 = arith.constant 0 : i32
    return %c0_i32 : i32
  }
  func.func @transform_3(%arg0: i32) -> (i32, i32) {
    %c0_i32 = arith.constant 0 : i32
    %c0_i32_0 = arith.constant 0 : i32
    %c0_i32_1 = arith.constant 0 : i32
    return %c0_i32, %c0_i32_0 : i32, i32
  }
  func.func @transform_4(%arg0: i32) -> (i32, i32) {
    %c0_i32 = arith.constant 0 : i32
    %c0_i32_0 = arith.constant 0 : i32
    %c0_i32_1 = arith.constant 0 : i32
    return %c0_i32, %c0_i32_0 : i32, i32
  }
  func.func @transform_5(%arg0: i32) -> (i32, i32) {
    %c0_i32 = arith.constant 0 : i32
    %c0_i32_0 = arith.constant 0 : i32
    %c0_i32_1 = arith.constant 0 : i32
    return %c0_i32, %c0_i32_0 : i32, i32
  }
  func.func @transform_6(%arg0: i32) -> (i32, i32) {
    %c0_i32 = arith.constant 0 : i32
    %c0_i32_0 = arith.constant 0 : i32
    %c0_i32_1 = arith.constant 0 : i32
    return %c0_i32, %c0_i32_0 : i32, i32
  }
  func.func @transform_7(%arg0: i32) -> (i32, i32, i32) {
    %c0_i32 = arith.constant 0 : i32
    %c0_i32_0 = arith.constant 0 : i32
    %c0_i32_1 = arith.constant 0 : i32
    return %arg0, %c0_i32, %c0_i32_0 : i32, i32, i32
  }
  func.func @transform_8(%arg0: i32) -> (i32, i32, i32) {
    %c0_i32 = arith.constant 0 : i32
    %c0_i32_0 = arith.constant 0 : i32
    %c0_i32_1 = arith.constant 0 : i32
    return %arg0, %c0_i32, %c0_i32_0 : i32, i32, i32
  }
}

</mosaic_0001>

<llo_original>
// kernel: easy_model_forward.1
$region0: #{easy_model_forward.1}
  #allocation0 [shape = 'u32[]', space=smem, size = 0x4, offset = 0x4, fixed_abs, tag = 'smem constant byte address 0x4 - core index']
  #allocation1 [shape = 'u32[144,128]{1,0:T(1,128)}', space=vmem, size = 0x12000, scoped, tag = 'internal scratch']
  %s0 = inlined_call_operand.vmem [shape: f32[2,3,18,18], index: 0, kind: input, shape index: {}]
  %s1 = inlined_call_operand.vmem [shape: f32[8,27], index: 1, kind: input, shape index: {}]
  %s2 = inlined_call_operand.vmem [shape: f32[8], index: 2, kind: input, shape index: {}]
  %s3 = inlined_call_operand.vmem [shape: f32[8,128], index: 3, kind: input, shape index: {}]
  %s4 = inlined_call_operand.vmem [shape: f32[1,128], index: 4, kind: input, shape index: {}]
  %s5 = inlined_call_operand.vmem [shape: f32[128,128], index: 5, kind: input, shape index: {}]
  %s6 = inlined_call_operand.vmem [shape: f32[1,128], index: 6, kind: input, shape index: {}]
  %s7 = inlined_call_operand.hbm [shape: f32[2,1,128], index: 7, kind: output, shape index: {0}]
  %s8 = inlined_call_operand.hbm [shape: f32[2,1,128], index: 8, kind: output, shape index: {1}]
  %9 = xla_tuple %s7, %s8
  %s10 = sld [smem:[#allocation0]]
  $region77: #{easy_model_forward.1} parent=0
    _
  %s12 = ssub.s32 1, %s10
  %s13 = scalar_select 0, %s12, %s10
  $region1: #{easy_model_forward.1} parent=0
    #allocation2 [shape = 'u8[4096]{0}', space=smem, size = 0x1000, scoped, tag = 'input window, operand 1, single buffered']
    #allocation3 [shape = 's32[2]{0}', space=sflag, size = 0x8, scoped, tag = 'scoped memory for easy_model_forward.1']
    #allocation4 [shape = 's32[2]{0}', space=sflag, size = 0x8, scoped, tag = 'scoped memory for easy_model_forward.1']
    #allocation5 [shape = 'u8[512]{0}', space=smem, size = 0x200, scoped, tag = 'input window, operand 2, single buffered']
    #allocation6 [shape = 's32[1]{0}', space=sflag, size = 0x4, scoped, tag = 'scoped memory for easy_model_forward.1']
    #allocation7 [shape = 'u8[1024]{0}', space=vmem, size = 0x400, scoped, tag = 'output window, operand 0']
    #allocation8 [shape = 'u8[1024]{0}', space=vmem, size = 0x400, scoped, tag = 'output window, operand 1']
    #allocation9 [shape = 's32[2]{0}', space=sflag, size = 0x8, scoped, tag = 'scoped memory for easy_model_forward.1']
    %14 = vsyncpa [#allocation4], 0
    %15 = vsyncpa [#allocation6], 0
    %16 = vsyncpa [#allocation3], 0
    %s17 = scalar_lea.sflag [#allocation3], 1
    %18 = vsyncpa %s17, 0
    %19 = vsyncpa [#allocation9], 0
    %s20 = scalar_lea.sflag [#allocation9], 1
    %21 = vsyncpa %s20, 0
    loop: start=0, step=1, limit=4
    $region2: #{easy_model_forward.1} parent=1 // loop_pre_header
      _
    $region3: #{easy_model_forward.1} parent=1 // loop_header
      %s23 = sphi 0, %s27
      %p24 = scmp.ge.s32.totalorder %s23, 4
      %s33 = sphi 0, %s35
      %s36 = sphi 0, %s33
      %s37 = sphi 0, %s36
      %s53 = sphi 0, %s37
      %s57 = sphi 0, %s57
      %s59 = sphi 0, %s57
      %s60 = sphi 0, %s59
      %s74 = sphi 0, %s60
      %s78 = sphi 0, %s78
      %s80 = sphi 0, %s78
      %s81 = sphi 0, %s80
      %s95 = sphi 0, %s81
      %s99 = sphi 0, %s99
      %s101 = sphi 0, %s99
      %s102 = sphi 0, %s101
      %s116 = sphi 0, %s102
      %s120 = sphi 0, %s120
      %s122 = sphi 0, %s120
      %s123 = sphi 0, %s122
      %s137 = sphi 0, %s123
      %s141 = sphi 0, %s141
      %s143 = sphi 0, %s141
      %s144 = sphi 0, %s143
      %s158 = sphi 0, %s144
      %s162 = sphi 0, %s162
      %s164 = sphi 0, %s162
      %s165 = sphi 0, %s164
      %s179 = sphi 0, %s165
      %s185 = sphi 0, %s187
      %s188 = sphi 0, %s185
      %s189 = sphi 0, %s188
      %s205 = sphi 0, %s189
      %s211 = sphi 0, %s213
      %s214 = sphi 0, %s211
      %s215 = sphi 0, %s214
      %s231 = sphi 0, %s215
    $region4: #{easy_model_forward.1} parent=1 // loop_header_branch
      %26 = sbr.rel (%p24) target = $region8
    $region5: #{easy_model_forward.1} parent=1 // loop_body
      %s28 = ssub.s32 %s23, 1
      %s29 = ssub.s32 %s23, 2
      %s30 = sadd.s32 %s23, 1
      %s31 = ssub.s32 %s23, %s30
      %p32 = scmp.eq.s32.totalorder %s31, 0
      %s34 = sadd.s32 %s33, 1
      %s35 = scalar_select %p32, %s33, %s34
      %p38 = pneg %p32
      %p39 = scmp.eq.s32.totalorder %s23, 1
      %p40 = por %p38, %p39
      %p41 = scmp.ne.s32.totalorder %s33, %s36
      %p42 = scmp.eq.s32.totalorder %s23, 0
      %p43 = por %p41, %p42
      %p44 = scmp.ne.s32.totalorder %s33, %s36
      %p45 = scmp.eq.s32.totalorder %s28, 1
      %p46 = por %p44, %p45
      %p47 = scmp.ne.s32.totalorder %s36, %s37
      %p48 = scmp.eq.s32.totalorder %s28, 0
      %p49 = por %p47, %p48
      %p50 = scmp.ne.s32.totalorder %s36, %s37
      %p51 = scmp.eq.s32.totalorder %s29, 1
      %p52 = por %p50, %p51
      %p54 = scmp.ne.s32.totalorder %s37, %s53
      %p55 = scmp.eq.s32.totalorder %s29, 0
      %p56 = por %p54, %p55
      %s58 = sadd.s32 %s57, 1
      %p61 = scmp.eq.s32.totalorder %s23, 1
      %p62 = scmp.ne.s32.totalorder %s57, %s59
      %p63 = scmp.eq.s32.totalorder %s23, 0
      %p64 = por %p62, %p63
      %p65 = scmp.ne.s32.totalorder %s57, %s59
      %p66 = scmp.eq.s32.totalorder %s28, 1
      %p67 = por %p65, %p66
      %p68 = scmp.ne.s32.totalorder %s59, %s60
      %p69 = scmp.eq.s32.totalorder %s28, 0
      %p70 = por %p68, %p69
      %p71 = scmp.ne.s32.totalorder %s59, %s60
      %p72 = scmp.eq.s32.totalorder %s29, 1
      %p73 = por %p71, %p72
      %p75 = scmp.ne.s32.totalorder %s60, %s74
      %p76 = scmp.eq.s32.totalorder %s29, 0
      %p77 = por %p75, %p76
      %s79 = sadd.s32 %s78, 1
      %p82 = scmp.eq.s32.totalorder %s23, 1
      %p83 = scmp.ne.s32.totalorder %s78, %s80
      %p84 = scmp.eq.s32.totalorder %s23, 0
      %p85 = por %p83, %p84
      %p86 = scmp.ne.s32.totalorder %s78, %s80
      %p87 = scmp.eq.s32.totalorder %s28, 1
      %p88 = por %p86, %p87
      %p89 = scmp.ne.s32.totalorder %s80, %s81
      %p90 = scmp.eq.s32.totalorder %s28, 0
      %p91 = por %p89, %p90
      %p92 = scmp.ne.s32.totalorder %s80, %s81
      %p93 = scmp.eq.s32.totalorder %s29, 1
      %p94 = por %p92, %p93
      %p96 = scmp.ne.s32.totalorder %s81, %s95
      %p97 = scmp.eq.s32.totalorder %s29, 0
      %p98 = por %p96, %p97
      %s100 = sadd.s32 %s99, 1
      %p103 = scmp.eq.s32.totalorder %s23, 1
      %p104 = scmp.ne.s32.totalorder %s99, %s101
      %p105 = scmp.eq.s32.totalorder %s23, 0
      %p106 = por %p104, %p105
      %p107 = scmp.ne.s32.totalorder %s99, %s101
      %p108 = scmp.eq.s32.totalorder %s28, 1
      %p109 = por %p107, %p108
      %p110 = scmp.ne.s32.totalorder %s101, %s102
      %p111 = scmp.eq.s32.totalorder %s28, 0
      %p112 = por %p110, %p111
      %p113 = scmp.ne.s32.totalorder %s101, %s102
      %p114 = scmp.eq.s32.totalorder %s29, 1
      %p115 = por %p113, %p114
      %p117 = scmp.ne.s32.totalorder %s102, %s116
      %p118 = scmp.eq.s32.totalorder %s29, 0
      %p119 = por %p117, %p118
      %s121 = sadd.s32 %s120, 1
      %p124 = scmp.eq.s32.totalorder %s23, 1
      %p125 = scmp.ne.s32.totalorder %s120, %s122
      %p126 = scmp.eq.s32.totalorder %s23, 0
      %p127 = por %p125, %p126
      %p128 = scmp.ne.s32.totalorder %s120, %s122
      %p129 = scmp.eq.s32.totalorder %s28, 1
      %p130 = por %p128, %p129
      %p131 = scmp.ne.s32.totalorder %s122, %s123
      %p132 = scmp.eq.s32.totalorder %s28, 0
      %p133 = por %p131, %p132
      %p134 = scmp.ne.s32.totalorder %s122, %s123
      %p135 = scmp.eq.s32.totalorder %s29, 1
      %p136 = por %p134, %p135
      %p138 = scmp.ne.s32.totalorder %s123, %s137
      %p139 = scmp.eq.s32.totalorder %s29, 0
      %p140 = por %p138, %p139
      %s142 = sadd.s32 %s141, 1
      %p145 = scmp.eq.s32.totalorder %s23, 1
      %p146 = scmp.ne.s32.totalorder %s141, %s143
      %p147 = scmp.eq.s32.totalorder %s23, 0
      %p148 = por %p146, %p147
      %p149 = scmp.ne.s32.totalorder %s141, %s143
      %p150 = scmp.eq.s32.totalorder %s28, 1
      %p151 = por %p149, %p150
      %p152 = scmp.ne.s32.totalorder %s143, %s144
      %p153 = scmp.eq.s32.totalorder %s28, 0
      %p154 = por %p152, %p153
      %p155 = scmp.ne.s32.totalorder %s143, %s144
      %p156 = scmp.eq.s32.totalorder %s29, 1
      %p157 = por %p155, %p156
      %p159 = scmp.ne.s32.totalorder %s144, %s158
      %p160 = scmp.eq.s32.totalorder %s29, 0
      %p161 = por %p159, %p160
      %s163 = sadd.s32 %s162, 1
      %p166 = scmp.eq.s32.totalorder %s23, 1
      %p167 = scmp.ne.s32.totalorder %s162, %s164
      %p168 = scmp.eq.s32.totalorder %s23, 0
      %p169 = por %p167, %p168
      %p170 = scmp.ne.s32.totalorder %s162, %s164
      %p171 = scmp.eq.s32.totalorder %s28, 1
      %p172 = por %p170, %p171
      %p173 = scmp.ne.s32.totalorder %s164, %s165
      %p174 = scmp.eq.s32.totalorder %s28, 0
      %p175 = por %p173, %p174
      %p176 = scmp.ne.s32.totalorder %s164, %s165
      %p177 = scmp.eq.s32.totalorder %s29, 1
      %p178 = por %p176, %p177
      %p180 = scmp.ne.s32.totalorder %s165, %s179
      %p181 = scmp.eq.s32.totalorder %s29, 0
      %p182 = por %p180, %p181
      %s183 = ssub.s32 %s23, %s30
      %p184 = scmp.eq.s32.totalorder %s183, 0
      %s186 = sadd.s32 %s185, 1
      %s187 = scalar_select %p184, %s185, %s186
      %p190 = pneg %p184
      %p191 = scmp.eq.s32.totalorder %s23, 1
      %p192 = por %p190, %p191
      %p193 = scmp.ne.s32.totalorder %s185, %s188
      %p194 = scmp.eq.s32.totalorder %s23, 0
      %p195 = por %p193, %p194
      %p196 = scmp.ne.s32.totalorder %s185, %s188
      %p197 = scmp.eq.s32.totalorder %s28, 1
      %p198 = por %p196, %p197
      %p199 = scmp.ne.s32.totalorder %s188, %s189
      %p200 = scmp.eq.s32.totalorder %s28, 0
      %p201 = por %p199, %p200
      %p202 = scmp.ne.s32.totalorder %s188, %s189
      %p203 = scmp.eq.s32.totalorder %s29, 1
      %p204 = por %p202, %p203
      %p206 = scmp.ne.s32.totalorder %s189, %s205
      %p207 = scmp.eq.s32.totalorder %s29, 0
      %p208 = por %p206, %p207
      %s209 = ssub.s32 %s23, %s30
      %p210 = scmp.eq.s32.totalorder %s209, 0
      %s212 = sadd.s32 %s211, 1
      %s213 = scalar_select %p210, %s211, %s212
      %p216 = pneg %p210
      %p217 = scmp.eq.s32.totalorder %s23, 1
      %p218 = por %p216, %p217
      %p219 = scmp.ne.s32.totalorder %s211, %s214
      %p220 = scmp.eq.s32.totalorder %s23, 0
      %p221 = por %p219, %p220
      %p222 = scmp.ne.s32.totalorder %s211, %s214
      %p223 = scmp.eq.s32.totalorder %s28, 1
      %p224 = por %p222, %p223
      %p225 = scmp.ne.s32.totalorder %s214, %s215
      %p226 = scmp.eq.s32.totalorder %s28, 0
      %p227 = por %p225, %p226
      %p228 = scmp.ne.s32.totalorder %s214, %s215
      %p229 = scmp.eq.s32.totalorder %s29, 1
      %p230 = por %p228, %p229
      %p232 = scmp.ne.s32.totalorder %s215, %s231
      %p233 = scmp.eq.s32.totalorder %s29, 0
      %p234 = por %p232, %p233
      %p235 = scmp.le.s32.totalorder 1, %s23
      %p236 = scmp.lt.s32.totalorder %s23, 3
      %p237 = pnand %p235, %p236
      %p238 = pneg %p237
      // Predicated region
      $region9: #{easy_model_forward.1} parent=5 // pred_check
        _
      $region10: #{easy_model_forward.1} parent=5 // pred_check_branch
        %240 = sbr.rel (%p237) target = $region12
      $region11: #{easy_model_forward.1} parent=5 // pred_region
        %s241 = ssub.s32 %s23, 1
        // Predicated region
        $region13: #{easy_model_forward.1} parent=11 // pred_check
          %p242 = pneg %p70
        $region14: #{easy_model_forward.1} parent=11 // pred_check_branch
          %244 = sbr.rel (%p242) target = $region16
        $region15: #{easy_model_forward.1} parent=11 // pred_region
          %s246 = ssub.s32 128, 128
          %247 = vsyncadd [#allocation4], %s246
          %s249 = sshll.u32 %s1, 4
          %s250 = int_to_ptr.vmem [resolvable:$true] %s249
          %252 = dma.vmem_to_smem %s250, 128, [#allocation2], [#allocation4]
        $region16: #{easy_model_forward.1} parent=11 // pred_fallthru
          _
        // Predicated region
        $region17: #{easy_model_forward.1} parent=11 // pred_check
          %p253 = pneg %p91
        $region18: #{easy_model_forward.1} parent=11 // pred_check_branch
          %255 = sbr.rel (%p253) target = $region20
        $region19: #{easy_model_forward.1} parent=11 // pred_region
          %s257 = ssub.s32 16, 16
          %258 = vsyncadd [#allocation6], %s257
          %s260 = sshll.u32 %s2, 4
          %s261 = int_to_ptr.vmem [resolvable:$true] %s260
          %263 = dma.vmem_to_smem %s261, 16, [#allocation5], [#allocation6]
        $region20: #{easy_model_forward.1} parent=11 // pred_fallthru
          _
        // Predicated region
        $region21: #{easy_model_forward.1} parent=11 // pred_check
          %p264 = pneg %p112
        $region22: #{easy_model_forward.1} parent=11 // pred_check_branch
          %266 = sbr.rel (%p264) target = $region24
        $region23: #{easy_model_forward.1} parent=11 // pred_region
          _
        $region24: #{easy_model_forward.1} parent=11 // pred_fallthru
          _
        // Predicated region
        $region25: #{easy_model_forward.1} parent=11 // pred_check
          %p267 = pneg %p133
        $region26: #{easy_model_forward.1} parent=11 // pred_check_branch
          %269 = sbr.rel (%p267) target = $region28
        $region27: #{easy_model_forward.1} parent=11 // pred_region
          _
        $region28: #{easy_model_forward.1} parent=11 // pred_fallthru
          _
        // Predicated region
        $region29: #{easy_model_forward.1} parent=11 // pred_check
          %p270 = pneg %p154
        $region30: #{easy_model_forward.1} parent=11 // pred_check_branch
          %272 = sbr.rel (%p270) target = $region32
        $region31: #{easy_model_forward.1} parent=11 // pred_region
          _
        $region32: #{easy_model_forward.1} parent=11 // pred_fallthru
          _
        // Predicated region
        $region33: #{easy_model_forward.1} parent=11 // pred_check
          %p273 = pneg %p175
        $region34: #{easy_model_forward.1} parent=11 // pred_check_branch
          %275 = sbr.rel (%p273) target = $region36
        $region35: #{easy_model_forward.1} parent=11 // pred_region
          _
        $region36: #{easy_model_forward.1} parent=11 // pred_fallthru
          _
      $region12: #{easy_model_forward.1} parent=5 // pred_fallthru
        _
      %p276 = scmp.lt.s32.totalorder %s23, 2
      // Predicated region
      $region37: #{easy_model_forward.1} parent=5 // pred_check
        %p277 = pneg %p276
      $region38: #{easy_model_forward.1} parent=5 // pred_check_branch
        %279 = sbr.rel (%p277) target = $region40
      $region39: #{easy_model_forward.1} parent=5 // pred_region
        // Predicated region
        $region41: #{easy_model_forward.1} parent=39 // pred_check
          %p280 = pneg %p43
        $region42: #{easy_model_forward.1} parent=39 // pred_check_branch
          %282 = sbr.rel (%p280) target = $region44
        $region43: #{easy_model_forward.1} parent=39 // pred_region
          %p283 = scmp.lt.s32.totalorder %s23, 1
          %s284 = scalar_select %p283, %s23, 1
          %s285 = smul.addr %s284, 9
          %s286 = smul.addr %s285, 8
          %s287 = scalar_lea.vmem %s0, %s286
        $region44: #{easy_model_forward.1} parent=39 // pred_fallthru
          _
      $region40: #{easy_model_forward.1} parent=5 // pred_fallthru
        _
      %p288 = scmp.le.s32.totalorder 1, %s23
      %p289 = scmp.lt.s32.totalorder %s23, 3
      %p290 = pnand %p288, %p289
      %p291 = pneg %p290
      // Predicated region
      $region45: #{easy_model_forward.1} parent=5 // pred_check
        _
      $region46: #{easy_model_forward.1} parent=5 // pred_check_branch
        %293 = sbr.rel (%p290) target = $region48
      $region47: #{easy_model_forward.1} parent=5 // pred_region
        %s294 = ssub.s32 %s23, 1
        // Predicated region
        $region49: #{easy_model_forward.1} parent=47 // pred_check
          %p295 = pneg %p70
        $region50: #{easy_model_forward.1} parent=47 // pred_check_branch
          %297 = sbr.rel (%p295) target = $region52
        $region51: #{easy_model_forward.1} parent=47 // pred_region
          %298 = dma.done [#allocation4], 128
        $region52: #{easy_model_forward.1} parent=47 // pred_fallthru
          _
        // Predicated region
        $region53: #{easy_model_forward.1} parent=47 // pred_check
          %p299 = pneg %p91
        $region54: #{easy_model_forward.1} parent=47 // pred_check_branch
          %301 = sbr.rel (%p299) target = $region56
        $region55: #{easy_model_forward.1} parent=47 // pred_region
          %302 = dma.done [#allocation6], 16
        $region56: #{easy_model_forward.1} parent=47 // pred_fallthru
          _
        %303 = sfence
        %p304 = scmp.lt.s32.totalorder %s28, 1
        %s305 = scalar_select %p304, %s28, 1
        %s306 = smul.addr %s305, 9
        %s307 = smul.addr %s306, 8
        %s308 = scalar_lea.vmem %s0, %s307
        %p309 = pneg %p49
        %p310 = pneg %p46
        %p311 = pneg %p70
        %p312 = pneg %p67
        %p313 = pneg %p91
        %p314 = pneg %p88
        %p315 = pneg %p112
        %p316 = pneg %p109
        %p317 = pneg %p133
        %p318 = pneg %p130
        %p319 = pneg %p154
        %p320 = pneg %p151
        %p321 = pneg %p175
        %p322 = pneg %p172
        %p323 = pneg %p201
        %p324 = pneg %p198
        %s325 = sand.u32 %s188, 1
        %s326 = scalar_lea.sflag [#allocation3], %s325
        %s327 = sand.u32 %s188, 1
        %s328 = scalar_lea.vmem [#allocation7], %s327
        %p329 = pneg %p227
        %p330 = pneg %p224
        %s331 = sand.u32 %s214, 1
        %s332 = scalar_lea.sflag [#allocation9], %s331
        %s333 = sand.u32 %s214, 1
        %s334 = scalar_lea.vmem [#allocation8], %s333
        %p335 = scmp.lt.s32.totalorder %s28, 1
        %s336 = scalar_select %p335, %s28, 1
        %s337 = smul.addr %s336, 9
        %s338 = smul.addr %s337, 8
        %s339 = scalar_lea.vmem %s0, %s338
        %s340 = sld [smem:[#allocation2]]
        %s341 = sld [smem:[#allocation2 + $0x1]]
        %s342 = sld [smem:[#allocation2 + $0x2]]
        %s343 = sld [smem:[#allocation2 + $0x3]]
        %s344 = sld [smem:[#allocation2 + $0x4]]
        %s345 = sld [smem:[#allocation2 + $0x5]]
        %s346 = sld [smem:[#allocation2 + $0x6]]
        %s347 = sld [smem:[#allocation2 + $0x7]]
        %s348 = sld [smem:[#allocation2 + $0x8]]
        %s349 = sld [smem:[#allocation2 + $0x9]]
        %s350 = sld [smem:[#allocation2 + $0xa]]
        %s351 = sld [smem:[#allocation2 + $0xb]]
        %s352 = sld [smem:[#allocation2 + $0xc]]
        %s353 = sld [smem:[#allocation2 + $0xd]]
        %s354 = sld [smem:[#allocation2 + $0xe]]
        %s355 = sld [smem:[#allocation2 + $0xf]]
        %s356 = sld [smem:[#allocation2 + $0x10]]
        %s357 = sld [smem:[#allocation2 + $0x11]]
        %s358 = sld [smem:[#allocation2 + $0x12]]
        %s359 = sld [smem:[#allocation2 + $0x13]]
        %s360 = sld [smem:[#allocation2 + $0x14]]
        %s361 = sld [smem:[#allocation2 + $0x15]]
        %s362 = sld [smem:[#allocation2 + $0x16]]
        %s363 = sld [smem:[#allocation2 + $0x17]]
        %s364 = sld [smem:[#allocation2 + $0x18]]
        %s365 = sld [smem:[#allocation2 + $0x19]]
        %s366 = sld [smem:[#allocation2 + $0x1a]]
        %s367 = sld [smem:[#allocation2 + $0x80]]
        %s368 = sld [smem:[#allocation2 + $0x81]]
        %s369 = sld [smem:[#allocation2 + $0x82]]
        %s370 = sld [smem:[#allocation2 + $0x83]]
        %s371 = sld [smem:[#allocation2 + $0x84]]
        %s372 = sld [smem:[#allocation2 + $0x85]]
        %s373 = sld [smem:[#allocation2 + $0x86]]
        %s374 = sld [smem:[#allocation2 + $0x87]]
        %s375 = sld [smem:[#allocation2 + $0x88]]
        %s376 = sld [smem:[#allocation2 + $0x89]]
        %s377 = sld [smem:[#allocation2 + $0x8a]]
        %s378 = sld [smem:[#allocation2 + $0x8b]]
        %s379 = sld [smem:[#allocation2 + $0x8c]]
        %s380 = sld [smem:[#allocation2 + $0x8d]]
        %s381 = sld [smem:[#allocation2 + $0x8e]]
        %s382 = sld [smem:[#allocation2 + $0x8f]]
        %s383 = sld [smem:[#allocation2 + $0x90]]
        %s384 = sld [smem:[#allocation2 + $0x91]]
        %s385 = sld [smem:[#allocation2 + $0x92]]
        %s386 = sld [smem:[#allocation2 + $0x93]]
        %s387 = sld [smem:[#allocation2 + $0x94]]
        %s388 = sld [smem:[#allocation2 + $0x95]]
        %s389 = sld [smem:[#allocation2 + $0x96]]
        %s390 = sld [smem:[#allocation2 + $0x97]]
        %s391 = sld [smem:[#allocation2 + $0x98]]
        %s392 = sld [smem:[#allocation2 + $0x99]]
        %s393 = sld [smem:[#allocation2 + $0x9a]]
        %s394 = sld [smem:[#allocation2 + $0x100]]
        %s395 = sld [smem:[#allocation2 + $0x101]]
        %s396 = sld [smem:[#allocation2 + $0x102]]
        %s397 = sld [smem:[#allocation2 + $0x103]]
        %s398 = sld [smem:[#allocation2 + $0x104]]
        %s399 = sld [smem:[#allocation2 + $0x105]]
        %s400 = sld [smem:[#allocation2 + $0x106]]
        %s401 = sld [smem:[#allocation2 + $0x107]]
        %s402 = sld [smem:[#allocation2 + $0x108]]
        %s403 = sld [smem:[#allocation2 + $0x109]]
        %s404 = sld [smem:[#allocation2 + $0x10a]]
        %s405 = sld [smem:[#allocation2 + $0x10b]]
        %s406 = sld [smem:[#allocation2 + $0x10c]]
        %s407 = sld [smem:[#allocation2 + $0x10d]]
        %s408 = sld [smem:[#allocation2 + $0x10e]]
        %s409 = sld [smem:[#allocation2 + $0x10f]]
        %s410 = sld [smem:[#allocation2 + $0x110]]
        %s411 = sld [smem:[#allocation2 + $0x111]]
        %s412 = sld [smem:[#allocation2 + $0x112]]
        %s413 = sld [smem:[#allocation2 + $0x113]]
        %s414 = sld [smem:[#allocation2 + $0x114]]
        %s415 = sld [smem:[#allocation2 + $0x115]]
        %s416 = sld [smem:[#allocation2 + $0x116]]
        %s417 = sld [smem:[#allocation2 + $0x117]]
        %s418 = sld [smem:[#allocation2 + $0x118]]
        %s419 = sld [smem:[#allocation2 + $0x119]]
        %s420 = sld [smem:[#allocation2 + $0x11a]]
        %s421 = sld [smem:[#allocation2 + $0x180]]
        %s422 = sld [smem:[#allocation2 + $0x181]]
        %s423 = sld [smem:[#allocation2 + $0x182]]
        %s424 = sld [smem:[#allocation2 + $0x183]]
        %s425 = sld [smem:[#allocation2 + $0x184]]
        %s426 = sld [smem:[#allocation2 + $0x185]]
        %s427 = sld [smem:[#allocation2 + $0x186]]
        %s428 = sld [smem:[#allocation2 + $0x187]]
        %s429 = sld [smem:[#allocation2 + $0x188]]
        %s430 = sld [smem:[#allocation2 + $0x189]]
        %s431 = sld [smem:[#allocation2 + $0x18a]]
        %s432 = sld [smem:[#allocation2 + $0x18b]]
        %s433 = sld [smem:[#allocation2 + $0x18c]]
        %s434 = sld [smem:[#allocation2 + $0x18d]]
        %s435 = sld [smem:[#allocation2 + $0x18e]]
        %s436 = sld [smem:[#allocation2 + $0x18f]]
        %s437 = sld [smem:[#allocation2 + $0x190]]
        %s438 = sld [smem:[#allocation2 + $0x191]]
        %s439 = sld [smem:[#allocation2 + $0x192]]
        %s440 = sld [smem:[#allocation2 + $0x193]]
        %s441 = sld [smem:[#allocation2 + $0x194]]
        %s442 = sld [smem:[#allocation2 + $0x195]]
        %s443 = sld [smem:[#allocation2 + $0x196]]
        %s444 = sld [smem:[#allocation2 + $0x197]]
        %s445 = sld [smem:[#allocation2 + $0x198]]
        %s446 = sld [smem:[#allocation2 + $0x199]]
        %s447 = sld [smem:[#allocation2 + $0x19a]]
        %s448 = sld [smem:[#allocation2 + $0x200]]
        %s449 = sld [smem:[#allocation2 + $0x201]]
        %s450 = sld [smem:[#allocation2 + $0x202]]
        %s451 = sld [smem:[#allocation2 + $0x203]]
        %s452 = sld [smem:[#allocation2 + $0x204]]
        %s453 = sld [smem:[#allocation2 + $0x205]]
        %s454 = sld [smem:[#allocation2 + $0x206]]
        %s455 = sld [smem:[#allocation2 + $0x207]]
        %s456 = sld [smem:[#allocation2 + $0x208]]
        %s457 = sld [smem:[#allocation2 + $0x209]]
        %s458 = sld [smem:[#allocation2 + $0x20a]]
        %s459 = sld [smem:[#allocation2 + $0x20b]]
        %s460 = sld [smem:[#allocation2 + $0x20c]]
        %s461 = sld [smem:[#allocation2 + $0x20d]]
        %s462 = sld [smem:[#allocation2 + $0x20e]]
        %s463 = sld [smem:[#allocation2 + $0x20f]]
        %s464 = sld [smem:[#allocation2 + $0x210]]
        %s465 = sld [smem:[#allocation2 + $0x211]]
        %s466 = sld [smem:[#allocation2 + $0x212]]
        %s467 = sld [smem:[#allocation2 + $0x213]]
        %s468 = sld [smem:[#allocation2 + $0x214]]
        %s469 = sld [smem:[#allocation2 + $0x215]]
        %s470 = sld [smem:[#allocation2 + $0x216]]
        %s471 = sld [smem:[#allocation2 + $0x217]]
        %s472 = sld [smem:[#allocation2 + $0x218]]
        %s473 = sld [smem:[#allocation2 + $0x219]]
        %s474 = sld [smem:[#allocation2 + $0x21a]]
        %s475 = sld [smem:[#allocation2 + $0x280]]
        %s476 = sld [smem:[#allocation2 + $0x281]]
        %s477 = sld [smem:[#allocation2 + $0x282]]
        %s478 = sld [smem:[#allocation2 + $0x283]]
        %s479 = sld [smem:[#allocation2 + $0x284]]
        %s480 = sld [smem:[#allocation2 + $0x285]]
        %s481 = sld [smem:[#allocation2 + $0x286]]
        %s482 = sld [smem:[#allocation2 + $0x287]]
        %s483 = sld [smem:[#allocation2 + $0x288]]
        %s484 = sld [smem:[#allocation2 + $0x289]]
        %s485 = sld [smem:[#allocation2 + $0x28a]]
        %s486 = sld [smem:[#allocation2 + $0x28b]]
        %s487 = sld [smem:[#allocation2 + $0x28c]]
        %s488 = sld [smem:[#allocation2 + $0x28d]]
        %s489 = sld [smem:[#allocation2 + $0x28e]]
        %s490 = sld [smem:[#allocation2 + $0x28f]]
        %s491 = sld [smem:[#allocation2 + $0x290]]
        %s492 = sld [smem:[#allocation2 + $0x291]]
        %s493 = sld [smem:[#allocation2 + $0x292]]
        %s494 = sld [smem:[#allocation2 + $0x293]]
        %s495 = sld [smem:[#allocation2 + $0x294]]
        %s496 = sld [smem:[#allocation2 + $0x295]]
        %s497 = sld [smem:[#allocation2 + $0x296]]
        %s498 = sld [smem:[#allocation2 + $0x297]]
        %s499 = sld [smem:[#allocation2 + $0x298]]
        %s500 = sld [smem:[#allocation2 + $0x299]]
        %s501 = sld [smem:[#allocation2 + $0x29a]]
        %s502 = sld [smem:[#allocation2 + $0x300]]
        %s503 = sld [smem:[#allocation2 + $0x301]]
        %s504 = sld [smem:[#allocation2 + $0x302]]
        %s505 = sld [smem:[#allocation2 + $0x303]]
        %s506 = sld [smem:[#allocation2 + $0x304]]
        %s507 = sld [smem:[#allocation2 + $0x305]]
        %s508 = sld [smem:[#allocation2 + $0x306]]
        %s509 = sld [smem:[#allocation2 + $0x307]]
        %s510 = sld [smem:[#allocation2 + $0x308]]
        %s511 = sld [smem:[#allocation2 + $0x309]]
        %s512 = sld [smem:[#allocation2 + $0x30a]]
        %s513 = sld [smem:[#allocation2 + $0x30b]]
        %s514 = sld [smem:[#allocation2 + $0x30c]]
        %s515 = sld [smem:[#allocation2 + $0x30d]]
        %s516 = sld [smem:[#allocation2 + $0x30e]]
        %s517 = sld [smem:[#allocation2 + $0x30f]]
        %s518 = sld [smem:[#allocation2 + $0x310]]
        %s519 = sld [smem:[#allocation2 + $0x311]]
        %s520 = sld [smem:[#allocation2 + $0x312]]
        %s521 = sld [smem:[#allocation2 + $0x313]]
        %s522 = sld [smem:[#allocation2 + $0x314]]
        %s523 = sld [smem:[#allocation2 + $0x315]]
        %s524 = sld [smem:[#allocation2 + $0x316]]
        %s525 = sld [smem:[#allocation2 + $0x317]]
        %s526 = sld [smem:[#allocation2 + $0x318]]
        %s527 = sld [smem:[#allocation2 + $0x319]]
        %s528 = sld [smem:[#allocation2 + $0x31a]]
        %s529 = sld [smem:[#allocation2 + $0x380]]
        %s530 = sld [smem:[#allocation2 + $0x381]]
        %s531 = sld [smem:[#allocation2 + $0x382]]
        %s532 = sld [smem:[#allocation2 + $0x383]]
        %s533 = sld [smem:[#allocation2 + $0x384]]
        %s534 = sld [smem:[#allocation2 + $0x385]]
        %s535 = sld [smem:[#allocation2 + $0x386]]
        %s536 = sld [smem:[#allocation2 + $0x387]]
        %s537 = sld [smem:[#allocation2 + $0x388]]
        %s538 = sld [smem:[#allocation2 + $0x389]]
        %s539 = sld [smem:[#allocation2 + $0x38a]]
        %s540 = sld [smem:[#allocation2 + $0x38b]]
        %s541 = sld [smem:[#allocation2 + $0x38c]]
        %s542 = sld [smem:[#allocation2 + $0x38d]]
        %s543 = sld [smem:[#allocation2 + $0x38e]]
        %s544 = sld [smem:[#allocation2 + $0x38f]]
        %s545 = sld [smem:[#allocation2 + $0x390]]
        %s546 = sld [smem:[#allocation2 + $0x391]]
        %s547 = sld [smem:[#allocation2 + $0x392]]
        %s548 = sld [smem:[#allocation2 + $0x393]]
        %s549 = sld [smem:[#allocation2 + $0x394]]
        %s550 = sld [smem:[#allocation2 + $0x395]]
        %s551 = sld [smem:[#allocation2 + $0x396]]
        %s552 = sld [smem:[#allocation2 + $0x397]]
        %s553 = sld [smem:[#allocation2 + $0x398]]
        %s554 = sld [smem:[#allocation2 + $0x399]]
        %s555 = sld [smem:[#allocation2 + $0x39a]]
        %s556 = sld [smem:[#allocation5]]
        %s557 = sld [smem:[#allocation5 + $0x1]]
        %s558 = sld [smem:[#allocation5 + $0x2]]
        %s559 = sld [smem:[#allocation5 + $0x3]]
        %s560 = sld [smem:[#allocation5 + $0x4]]
        %s561 = sld [smem:[#allocation5 + $0x5]]
        %s562 = sld [smem:[#allocation5 + $0x6]]
        %s563 = sld [smem:[#allocation5 + $0x7]]
        %v564 = vld [vmem:[%s339] sm:$0xff]
        %v565 = vstv %s340
        %v566 = vmul.f32 %v565, %v564
        %v567 = vadd.f32 %v566, 0.0
        %v568 = vstv %s367
        %v569 = vmul.f32 %v568, %v564
        %v570 = vadd.f32 %v569, 0.0
        %v571 = vstv %s394
        %v572 = vmul.f32 %v571, %v564
        %v573 = vadd.f32 %v572, 0.0
        %v574 = vstv %s421
        %v575 = vmul.f32 %v574, %v564
        %v576 = vadd.f32 %v575, 0.0
        %v577 = vstv %s448
        %v578 = vmul.f32 %v577, %v564
        %v579 = vadd.f32 %v578, 0.0
        %v580 = vstv %s475
        %v581 = vmul.f32 %v580, %v564
        %v582 = vadd.f32 %v581, 0.0
        %v583 = vstv %s502
        %v584 = vmul.f32 %v583, %v564
        %v585 = vadd.f32 %v584, 0.0
        %v586 = vstv %s529
        %v587 = vmul.f32 %v586, %v564
        %v588 = vadd.f32 %v587, 0.0
        %s589 = scalar_lea.vmem %s339, 24
        %v590 = vld [vmem:[%s589] sm:$0xff]
        %v591 = vstv %s341
        %v592 = vmul.f32 %v591, %v590
        %v593 = vadd.f32 %v567, %v592
        %v594 = vstv %s368
        %v595 = vmul.f32 %v594, %v590
        %v596 = vadd.f32 %v570, %v595
        %v597 = vstv %s395
        %v598 = vmul.f32 %v597, %v590
        %v599 = vadd.f32 %v573, %v598
        %v600 = vstv %s422
        %v601 = vmul.f32 %v600, %v590
        %v602 = vadd.f32 %v576, %v601
        %v603 = vstv %s449
        %v604 = vmul.f32 %v603, %v590
        %v605 = vadd.f32 %v579, %v604
        %v606 = vstv %s476
        %v607 = vmul.f32 %v606, %v590
        %v608 = vadd.f32 %v582, %v607
        %v609 = vstv %s503
        %v610 = vmul.f32 %v609, %v590
        %v611 = vadd.f32 %v585, %v610
        %v612 = vstv %s530
        %v613 = vmul.f32 %v612, %v590
        %v614 = vadd.f32 %v588, %v613
        %s615 = scalar_lea.vmem %s339, 48
        %v616 = vld [vmem:[%s615] sm:$0xff]
        %v617 = vstv %s342
        %v618 = vmul.f32 %v617, %v616
        %v619 = vadd.f32 %v593, %v618
        %v620 = vstv %s369
        %v621 = vmul.f32 %v620, %v616
        %v622 = vadd.f32 %v596, %v621
        %v623 = vstv %s396
        %v624 = vmul.f32 %v623, %v616
        %v625 = vadd.f32 %v599, %v624
        %v626 = vstv %s423
        %v627 = vmul.f32 %v626, %v616
        %v628 = vadd.f32 %v602, %v627
        %v629 = vstv %s450
        %v630 = vmul.f32 %v629, %v616
        %v631 = vadd.f32 %v605, %v630
        %v632 = vstv %s477
        %v633 = vmul.f32 %v632, %v616
        %v634 = vadd.f32 %v608, %v633
        %v635 = vstv %s504
        %v636 = vmul.f32 %v635, %v616
        %v637 = vadd.f32 %v611, %v636
        %v638 = vstv %s531
        %v639 = vmul.f32 %v638, %v616
        %v640 = vadd.f32 %v614, %v639
        %v641 = vstv %s343
        %v642 = vmul.f32 %v641, %v564
        %644 = vrot.lane.b32.xlu0 %v642, 127
        %v645 = vpop.permute.xlu0 %644
        %v647 = vadd.f32 %v619, %v645
        %v648 = vstv %s370
        %v649 = vmul.f32 %v648, %v564
        %651 = vrot.lane.b32.xlu0 %v649, 127
        %v652 = vpop.permute.xlu0 %651
        %v654 = vadd.f32 %v622, %v652
        %v655 = vstv %s397
        %v656 = vmul.f32 %v655, %v564
        %658 = vrot.lane.b32.xlu0 %v656, 127
        %v659 = vpop.permute.xlu0 %658
        %v661 = vadd.f32 %v625, %v659
        %v662 = vstv %s424
        %v663 = vmul.f32 %v662, %v564
        %665 = vrot.lane.b32.xlu0 %v663, 127
        %v666 = vpop.permute.xlu0 %665
        %v668 = vadd.f32 %v628, %v666
        %v669 = vstv %s451
        %v670 = vmul.f32 %v669, %v564
        %672 = vrot.lane.b32.xlu0 %v670, 127
        %v673 = vpop.permute.xlu0 %672
        %v675 = vadd.f32 %v631, %v673
        %v676 = vstv %s478
        %v677 = vmul.f32 %v676, %v564
        %679 = vrot.lane.b32.xlu0 %v677, 127
        %v680 = vpop.permute.xlu0 %679
        %v682 = vadd.f32 %v634, %v680
        %v683 = vstv %s505
        %v684 = vmul.f32 %v683, %v564
        %686 = vrot.lane.b32.xlu0 %v684, 127
        %v687 = vpop.permute.xlu0 %686
        %v689 = vadd.f32 %v637, %v687
        %v690 = vstv %s532
        %v691 = vmul.f32 %v690, %v564
        %693 = vrot.lane.b32.xlu0 %v691, 127
        %v694 = vpop.permute.xlu0 %693
        %v696 = vadd.f32 %v640, %v694
        %v697 = vstv %s344
        %v698 = vmul.f32 %v697, %v590
        %700 = vrot.lane.b32.xlu0 %v698, 127
        %v701 = vpop.permute.xlu0 %700
        %v703 = vadd.f32 %v647, %v701
        %v704 = vstv %s371
        %v705 = vmul.f32 %v704, %v590
        %707 = vrot.lane.b32.xlu0 %v705, 127
        %v708 = vpop.permute.xlu0 %707
        %v710 = vadd.f32 %v654, %v708
        %v711 = vstv %s398
        %v712 = vmul.f32 %v711, %v590
        %714 = vrot.lane.b32.xlu0 %v712, 127
        %v715 = vpop.permute.xlu0 %714
        %v717 = vadd.f32 %v661, %v715
        %v718 = vstv %s425
        %v719 = vmul.f32 %v718, %v590
        %721 = vrot.lane.b32.xlu0 %v719, 127
        %v722 = vpop.permute.xlu0 %721
        %v724 = vadd.f32 %v668, %v722
        %v725 = vstv %s452
        %v726 = vmul.f32 %v725, %v590
        %728 = vrot.lane.b32.xlu0 %v726, 127
        %v729 = vpop.permute.xlu0 %728
        %v731 = vadd.f32 %v675, %v729
        %v732 = vstv %s479
        %v733 = vmul.f32 %v732, %v590
        %735 = vrot.lane.b32.xlu0 %v733, 127
        %v736 = vpop.permute.xlu0 %735
        %v738 = vadd.f32 %v682, %v736
        %v739 = vstv %s506
        %v740 = vmul.f32 %v739, %v590
        %742 = vrot.lane.b32.xlu0 %v740, 127
        %v743 = vpop.permute.xlu0 %742
        %v745 = vadd.f32 %v689, %v743
        %v746 = vstv %s533
        %v747 = vmul.f32 %v746, %v590
        %749 = vrot.lane.b32.xlu0 %v747, 127
        %v750 = vpop.permute.xlu0 %749
        %v752 = vadd.f32 %v696, %v750
        %v753 = vstv %s345
        %v754 = vmul.f32 %v753, %v616
        %756 = vrot.lane.b32.xlu0 %v754, 127
        %v757 = vpop.permute.xlu0 %756
        %v759 = vadd.f32 %v703, %v757
        %v760 = vstv %s372
        %v761 = vmul.f32 %v760, %v616
        %763 = vrot.lane.b32.xlu0 %v761, 127
        %v764 = vpop.permute.xlu0 %763
        %v766 = vadd.f32 %v710, %v764
        %v767 = vstv %s399
        %v768 = vmul.f32 %v767, %v616
        %770 = vrot.lane.b32.xlu0 %v768, 127
        %v771 = vpop.permute.xlu0 %770
        %v773 = vadd.f32 %v717, %v771
        %v774 = vstv %s426
        %v775 = vmul.f32 %v774, %v616
        %777 = vrot.lane.b32.xlu0 %v775, 127
        %v778 = vpop.permute.xlu0 %777
        %v780 = vadd.f32 %v724, %v778
        %v781 = vstv %s453
        %v782 = vmul.f32 %v781, %v616
        %784 = vrot.lane.b32.xlu0 %v782, 127
        %v785 = vpop.permute.xlu0 %784
        %v787 = vadd.f32 %v731, %v785
        %v788 = vstv %s480
        %v789 = vmul.f32 %v788, %v616
        %791 = vrot.lane.b32.xlu0 %v789, 127
        %v792 = vpop.permute.xlu0 %791
        %v794 = vadd.f32 %v738, %v792
        %v795 = vstv %s507
        %v796 = vmul.f32 %v795, %v616
        %798 = vrot.lane.b32.xlu0 %v796, 127
        %v799 = vpop.permute.xlu0 %798
        %v801 = vadd.f32 %v745, %v799
        %v802 = vstv %s534
        %v803 = vmul.f32 %v802, %v616
        %805 = vrot.lane.b32.xlu0 %v803, 127
        %v806 = vpop.permute.xlu0 %805
        %v808 = vadd.f32 %v752, %v806
        %v809 = vstv %s346
        %v810 = vmul.f32 %v809, %v564
        %812 = vrot.lane.b32.xlu0 %v810, 126
        %v813 = vpop.permute.xlu0 %812
        %v815 = vadd.f32 %v759, %v813
        %v816 = vstv %s373
        %v817 = vmul.f32 %v816, %v564
        %819 = vrot.lane.b32.xlu0 %v817, 126
        %v820 = vpop.permute.xlu0 %819
        %v822 = vadd.f32 %v766, %v820
        %v823 = vstv %s400
        %v824 = vmul.f32 %v823, %v564
        %826 = vrot.lane.b32.xlu0 %v824, 126
        %v827 = vpop.permute.xlu0 %826
        %v829 = vadd.f32 %v773, %v827
        %v830 = vstv %s427
        %v831 = vmul.f32 %v830, %v564
        %833 = vrot.lane.b32.xlu0 %v831, 126
        %v834 = vpop.permute.xlu0 %833
        %v836 = vadd.f32 %v780, %v834
        %v837 = vstv %s454
        %v838 = vmul.f32 %v837, %v564
        %840 = vrot.lane.b32.xlu0 %v838, 126
        %v841 = vpop.permute.xlu0 %840
        %v843 = vadd.f32 %v787, %v841
        %v844 = vstv %s481
        %v845 = vmul.f32 %v844, %v564
        %847 = vrot.lane.b32.xlu0 %v845, 126
        %v848 = vpop.permute.xlu0 %847
        %v850 = vadd.f32 %v794, %v848
        %v851 = vstv %s508
        %v852 = vmul.f32 %v851, %v564
        %854 = vrot.lane.b32.xlu0 %v852, 126
        %v855 = vpop.permute.xlu0 %854
        %v857 = vadd.f32 %v801, %v855
        %v858 = vstv %s535
        %v859 = vmul.f32 %v858, %v564
        %861 = vrot.lane.b32.xlu0 %v859, 126
        %v862 = vpop.permute.xlu0 %861
        %v864 = vadd.f32 %v808, %v862
        %v865 = vstv %s347
        %v866 = vmul.f32 %v865, %v590
        %868 = vrot.lane.b32.xlu0 %v866, 126
        %v869 = vpop.permute.xlu0 %868
        %v871 = vadd.f32 %v815, %v869
        %v872 = vstv %s374
        %v873 = vmul.f32 %v872, %v590
        %875 = vrot.lane.b32.xlu0 %v873, 126
        %v876 = vpop.permute.xlu0 %875
        %v878 = vadd.f32 %v822, %v876
        %v879 = vstv %s401
        %v880 = vmul.f32 %v879, %v590
        %882 = vrot.lane.b32.xlu0 %v880, 126
        %v883 = vpop.permute.xlu0 %882
        %v885 = vadd.f32 %v829, %v883
        %v886 = vstv %s428
        %v887 = vmul.f32 %v886, %v590
        %889 = vrot.lane.b32.xlu0 %v887, 126
        %v890 = vpop.permute.xlu0 %889
        %v892 = vadd.f32 %v836, %v890
        %v893 = vstv %s455
        %v894 = vmul.f32 %v893, %v590
        %896 = vrot.lane.b32.xlu0 %v894, 126
        %v897 = vpop.permute.xlu0 %896
        %v899 = vadd.f32 %v843, %v897
        %v900 = vstv %s482
        %v901 = vmul.f32 %v900, %v590
        %903 = vrot.lane.b32.xlu0 %v901, 126
        %v904 = vpop.permute.xlu0 %903
        %v906 = vadd.f32 %v850, %v904
        %v907 = vstv %s509
        %v908 = vmul.f32 %v907, %v590
        %910 = vrot.lane.b32.xlu0 %v908, 126
        %v911 = vpop.permute.xlu0 %910
        %v913 = vadd.f32 %v857, %v911
        %v914 = vstv %s536
        %v915 = vmul.f32 %v914, %v590
        %917 = vrot.lane.b32.xlu0 %v915, 126
        %v918 = vpop.permute.xlu0 %917
        %v920 = vadd.f32 %v864, %v918
        %v921 = vstv %s348
        %v922 = vmul.f32 %v921, %v616
        %924 = vrot.lane.b32.xlu0 %v922, 126
        %v925 = vpop.permute.xlu0 %924
        %v927 = vadd.f32 %v871, %v925
        %v928 = vstv %s375
        %v929 = vmul.f32 %v928, %v616
        %931 = vrot.lane.b32.xlu0 %v929, 126
        %v932 = vpop.permute.xlu0 %931
        %v934 = vadd.f32 %v878, %v932
        %v935 = vstv %s402
        %v936 = vmul.f32 %v935, %v616
        %938 = vrot.lane.b32.xlu0 %v936, 126
        %v939 = vpop.permute.xlu0 %938
        %v941 = vadd.f32 %v885, %v939
        %v942 = vstv %s429
        %v943 = vmul.f32 %v942, %v616
        %945 = vrot.lane.b32.xlu0 %v943, 126
        %v946 = vpop.permute.xlu0 %945
        %v948 = vadd.f32 %v892, %v946
        %v949 = vstv %s456
        %v950 = vmul.f32 %v949, %v616
        %952 = vrot.lane.b32.xlu0 %v950, 126
        %v953 = vpop.permute.xlu0 %952
        %v955 = vadd.f32 %v899, %v953
        %v956 = vstv %s483
        %v957 = vmul.f32 %v956, %v616
        %959 = vrot.lane.b32.xlu0 %v957, 126
        %v960 = vpop.permute.xlu0 %959
        %v962 = vadd.f32 %v906, %v960
        %v963 = vstv %s510
        %v964 = vmul.f32 %v963, %v616
        %966 = vrot.lane.b32.xlu0 %v964, 126
        %v967 = vpop.permute.xlu0 %966
        %v969 = vadd.f32 %v913, %v967
        %v970 = vstv %s537
        %v971 = vmul.f32 %v970, %v616
        %973 = vrot.lane.b32.xlu0 %v971, 126
        %v974 = vpop.permute.xlu0 %973
        %v976 = vadd.f32 %v920, %v974
        %v977 = vld [vmem:[%s339 + $0x1] sm:$0xff]
        %v978 = vstv %s349
        %v979 = vmul.f32 %v978, %v977
        %v980 = vadd.f32 %v927, %v979
        %v981 = vstv %s376
        %v982 = vmul.f32 %v981, %v977
        %v983 = vadd.f32 %v934, %v982
        %v984 = vstv %s403
        %v985 = vmul.f32 %v984, %v977
        %v986 = vadd.f32 %v941, %v985
        %v987 = vstv %s430
        %v988 = vmul.f32 %v987, %v977
        %v989 = vadd.f32 %v948, %v988
        %v990 = vstv %s457
        %v991 = vmul.f32 %v990, %v977
        %v992 = vadd.f32 %v955, %v991
        %v993 = vstv %s484
        %v994 = vmul.f32 %v993, %v977
        %v995 = vadd.f32 %v962, %v994
        %v996 = vstv %s511
        %v997 = vmul.f32 %v996, %v977
        %v998 = vadd.f32 %v969, %v997
        %v999 = vstv %s538
        %v1000 = vmul.f32 %v999, %v977
        %v1001 = vadd.f32 %v976, %v1000
        %v1002 = vld [vmem:[%s589 + $0x1] sm:$0xff]
        %v1003 = vstv %s350
        %v1004 = vmul.f32 %v1003, %v1002
        %v1005 = vadd.f32 %v980, %v1004
        %v1006 = vstv %s377
        %v1007 = vmul.f32 %v1006, %v1002
        %v1008 = vadd.f32 %v983, %v1007
        %v1009 = vstv %s404
        %v1010 = vmul.f32 %v1009, %v1002
        %v1011 = vadd.f32 %v986, %v1010
        %v1012 = vstv %s431
        %v1013 = vmul.f32 %v1012, %v1002
        %v1014 = vadd.f32 %v989, %v1013
        %v1015 = vstv %s458
        %v1016 = vmul.f32 %v1015, %v1002
        %v1017 = vadd.f32 %v992, %v1016
        %v1018 = vstv %s485
        %v1019 = vmul.f32 %v1018, %v1002
        %v1020 = vadd.f32 %v995, %v1019
        %v1021 = vstv %s512
        %v1022 = vmul.f32 %v1021, %v1002
        %v1023 = vadd.f32 %v998, %v1022
        %v1024 = vstv %s539
        %v1025 = vmul.f32 %v1024, %v1002
        %v1026 = vadd.f32 %v1001, %v1025
        %v1027 = vld [vmem:[%s615 + $0x1] sm:$0xff]
        %v1028 = vstv %s351
        %v1029 = vmul.f32 %v1028, %v1027
        %v1030 = vadd.f32 %v1005, %v1029
        %v1031 = vstv %s378
        %v1032 = vmul.f32 %v1031, %v1027
        %v1033 = vadd.f32 %v1008, %v1032
        %v1034 = vstv %s405
        %v1035 = vmul.f32 %v1034, %v1027
        %v1036 = vadd.f32 %v1011, %v1035
        %v1037 = vstv %s432
        %v1038 = vmul.f32 %v1037, %v1027
        %v1039 = vadd.f32 %v1014, %v1038
        %v1040 = vstv %s459
        %v1041 = vmul.f32 %v1040, %v1027
        %v1042 = vadd.f32 %v1017, %v1041
        %v1043 = vstv %s486
        %v1044 = vmul.f32 %v1043, %v1027
        %v1045 = vadd.f32 %v1020, %v1044
        %v1046 = vstv %s513
        %v1047 = vmul.f32 %v1046, %v1027
        %v1048 = vadd.f32 %v1023, %v1047
        %v1049 = vstv %s540
        %v1050 = vmul.f32 %v1049, %v1027
        %v1051 = vadd.f32 %v1026, %v1050
        %v1052 = vstv %s352
        %v1053 = vmul.f32 %v1052, %v977
        %1055 = vrot.lane.b32.xlu0 %v1053, 127
        %v1056 = vpop.permute.xlu0 %1055
        %v1058 = vadd.f32 %v1030, %v1056
        %v1059 = vstv %s379
        %v1060 = vmul.f32 %v1059, %v977
        %1062 = vrot.lane.b32.xlu0 %v1060, 127
        %v1063 = vpop.permute.xlu0 %1062
        %v1065 = vadd.f32 %v1033, %v1063
        %v1066 = vstv %s406
        %v1067 = vmul.f32 %v1066, %v977
        %1069 = vrot.lane.b32.xlu0 %v1067, 127
        %v1070 = vpop.permute.xlu0 %1069
        %v1072 = vadd.f32 %v1036, %v1070
        %v1073 = vstv %s433
        %v1074 = vmul.f32 %v1073, %v977
        %1076 = vrot.lane.b32.xlu0 %v1074, 127
        %v1077 = vpop.permute.xlu0 %1076
        %v1079 = vadd.f32 %v1039, %v1077
        %v1080 = vstv %s460
        %v1081 = vmul.f32 %v1080, %v977
        %1083 = vrot.lane.b32.xlu0 %v1081, 127
        %v1084 = vpop.permute.xlu0 %1083
        %v1086 = vadd.f32 %v1042, %v1084
        %v1087 = vstv %s487
        %v1088 = vmul.f32 %v1087, %v977
        %1090 = vrot.lane.b32.xlu0 %v1088, 127
        %v1091 = vpop.permute.xlu0 %1090
        %v1093 = vadd.f32 %v1045, %v1091
        %v1094 = vstv %s514
        %v1095 = vmul.f32 %v1094, %v977
        %1097 = vrot.lane.b32.xlu0 %v1095, 127
        %v1098 = vpop.permute.xlu0 %1097
        %v1100 = vadd.f32 %v1048, %v1098
        %v1101 = vstv %s541
        %v1102 = vmul.f32 %v1101, %v977
        %1104 = vrot.lane.b32.xlu0 %v1102, 127
        %v1105 = vpop.permute.xlu0 %1104
        %v1107 = vadd.f32 %v1051, %v1105
        %v1108 = vstv %s353
        %v1109 = vmul.f32 %v1108, %v1002
        %1111 = vrot.lane.b32.xlu0 %v1109, 127
        %v1112 = vpop.permute.xlu0 %1111
        %v1114 = vadd.f32 %v1058, %v1112
        %v1115 = vstv %s380
        %v1116 = vmul.f32 %v1115, %v1002
        %1118 = vrot.lane.b32.xlu0 %v1116, 127
        %v1119 = vpop.permute.xlu0 %1118
        %v1121 = vadd.f32 %v1065, %v1119
        %v1122 = vstv %s407
        %v1123 = vmul.f32 %v1122, %v1002
        %1125 = vrot.lane.b32.xlu0 %v1123, 127
        %v1126 = vpop.permute.xlu0 %1125
        %v1128 = vadd.f32 %v1072, %v1126
        %v1129 = vstv %s434
        %v1130 = vmul.f32 %v1129, %v1002
        %1132 = vrot.lane.b32.xlu0 %v1130, 127
        %v1133 = vpop.permute.xlu0 %1132
        %v1135 = vadd.f32 %v1079, %v1133
        %v1136 = vstv %s461
        %v1137 = vmul.f32 %v1136, %v1002
        %1139 = vrot.lane.b32.xlu0 %v1137, 127
        %v1140 = vpop.permute.xlu0 %1139
        %v1142 = vadd.f32 %v1086, %v1140
        %v1143 = vstv %s488
        %v1144 = vmul.f32 %v1143, %v1002
        %1146 = vrot.lane.b32.xlu0 %v1144, 127
        %v1147 = vpop.permute.xlu0 %1146
        %v1149 = vadd.f32 %v1093, %v1147
        %v1150 = vstv %s515
        %v1151 = vmul.f32 %v1150, %v1002
        %1153 = vrot.lane.b32.xlu0 %v1151, 127
        %v1154 = vpop.permute.xlu0 %1153
        %v1156 = vadd.f32 %v1100, %v1154
        %v1157 = vstv %s542
        %v1158 = vmul.f32 %v1157, %v1002
        %1160 = vrot.lane.b32.xlu0 %v1158, 127
        %v1161 = vpop.permute.xlu0 %1160
        %v1163 = vadd.f32 %v1107, %v1161
        %v1164 = vstv %s354
        %v1165 = vmul.f32 %v1164, %v1027
        %1167 = vrot.lane.b32.xlu0 %v1165, 127
        %v1168 = vpop.permute.xlu0 %1167
        %v1170 = vadd.f32 %v1114, %v1168
        %v1171 = vstv %s381
        %v1172 = vmul.f32 %v1171, %v1027
        %1174 = vrot.lane.b32.xlu0 %v1172, 127
        %v1175 = vpop.permute.xlu0 %1174
        %v1177 = vadd.f32 %v1121, %v1175
        %v1178 = vstv %s408
        %v1179 = vmul.f32 %v1178, %v1027
        %1181 = vrot.lane.b32.xlu0 %v1179, 127
        %v1182 = vpop.permute.xlu0 %1181
        %v1184 = vadd.f32 %v1128, %v1182
        %v1185 = vstv %s435
        %v1186 = vmul.f32 %v1185, %v1027
        %1188 = vrot.lane.b32.xlu0 %v1186, 127
        %v1189 = vpop.permute.xlu0 %1188
        %v1191 = vadd.f32 %v1135, %v1189
        %v1192 = vstv %s462
        %v1193 = vmul.f32 %v1192, %v1027
        %1195 = vrot.lane.b32.xlu0 %v1193, 127
        %v1196 = vpop.permute.xlu0 %1195
        %v1198 = vadd.f32 %v1142, %v1196
        %v1199 = vstv %s489
        %v1200 = vmul.f32 %v1199, %v1027
        %1202 = vrot.lane.b32.xlu0 %v1200, 127
        %v1203 = vpop.permute.xlu0 %1202
        %v1205 = vadd.f32 %v1149, %v1203
        %v1206 = vstv %s516
        %v1207 = vmul.f32 %v1206, %v1027
        %1209 = vrot.lane.b32.xlu0 %v1207, 127
        %v1210 = vpop.permute.xlu0 %1209
        %v1212 = vadd.f32 %v1156, %v1210
        %v1213 = vstv %s543
        %v1214 = vmul.f32 %v1213, %v1027
        %1216 = vrot.lane.b32.xlu0 %v1214, 127
        %v1217 = vpop.permute.xlu0 %1216
        %v1219 = vadd.f32 %v1163, %v1217
        %v1220 = vstv %s355
        %v1221 = vmul.f32 %v1220, %v977
        %1223 = vrot.lane.b32.xlu0 %v1221, 126
        %v1224 = vpop.permute.xlu0 %1223
        %v1226 = vadd.f32 %v1170, %v1224
        %v1227 = vstv %s382
        %v1228 = vmul.f32 %v1227, %v977
        %1230 = vrot.lane.b32.xlu0 %v1228, 126
        %v1231 = vpop.permute.xlu0 %1230
        %v1233 = vadd.f32 %v1177, %v1231
        %v1234 = vstv %s409
        %v1235 = vmul.f32 %v1234, %v977
        %1237 = vrot.lane.b32.xlu0 %v1235, 126
        %v1238 = vpop.permute.xlu0 %1237
        %v1240 = vadd.f32 %v1184, %v1238
        %v1241 = vstv %s436
        %v1242 = vmul.f32 %v1241, %v977
        %1244 = vrot.lane.b32.xlu0 %v1242, 126
        %v1245 = vpop.permute.xlu0 %1244
        %v1247 = vadd.f32 %v1191, %v1245
        %v1248 = vstv %s463
        %v1249 = vmul.f32 %v1248, %v977
        %1251 = vrot.lane.b32.xlu0 %v1249, 126
        %v1252 = vpop.permute.xlu0 %1251
        %v1254 = vadd.f32 %v1198, %v1252
        %v1255 = vstv %s490
        %v1256 = vmul.f32 %v1255, %v977
        %1258 = vrot.lane.b32.xlu0 %v1256, 126
        %v1259 = vpop.permute.xlu0 %1258
        %v1261 = vadd.f32 %v1205, %v1259
        %v1262 = vstv %s517
        %v1263 = vmul.f32 %v1262, %v977
        %1265 = vrot.lane.b32.xlu0 %v1263, 126
        %v1266 = vpop.permute.xlu0 %1265
        %v1268 = vadd.f32 %v1212, %v1266
        %v1269 = vstv %s544
        %v1270 = vmul.f32 %v1269, %v977
        %1272 = vrot.lane.b32.xlu0 %v1270, 126
        %v1273 = vpop.permute.xlu0 %1272
        %v1275 = vadd.f32 %v1219, %v1273
        %v1276 = vstv %s356
        %v1277 = vmul.f32 %v1276, %v1002
        %1279 = vrot.lane.b32.xlu0 %v1277, 126
        %v1280 = vpop.permute.xlu0 %1279
        %v1282 = vadd.f32 %v1226, %v1280
        %v1283 = vstv %s383
        %v1284 = vmul.f32 %v1283, %v1002
        %1286 = vrot.lane.b32.xlu0 %v1284, 126
        %v1287 = vpop.permute.xlu0 %1286
        %v1289 = vadd.f32 %v1233, %v1287
        %v1290 = vstv %s410
        %v1291 = vmul.f32 %v1290, %v1002
        %1293 = vrot.lane.b32.xlu0 %v1291, 126
        %v1294 = vpop.permute.xlu0 %1293
        %v1296 = vadd.f32 %v1240, %v1294
        %v1297 = vstv %s437
        %v1298 = vmul.f32 %v1297, %v1002
        %1300 = vrot.lane.b32.xlu0 %v1298, 126
        %v1301 = vpop.permute.xlu0 %1300
        %v1303 = vadd.f32 %v1247, %v1301
        %v1304 = vstv %s464
        %v1305 = vmul.f32 %v1304, %v1002
        %1307 = vrot.lane.b32.xlu0 %v1305, 126
        %v1308 = vpop.permute.xlu0 %1307
        %v1310 = vadd.f32 %v1254, %v1308
        %v1311 = vstv %s491
        %v1312 = vmul.f32 %v1311, %v1002
        %1314 = vrot.lane.b32.xlu0 %v1312, 126
        %v1315 = vpop.permute.xlu0 %1314
        %v1317 = vadd.f32 %v1261, %v1315
        %v1318 = vstv %s518
        %v1319 = vmul.f32 %v1318, %v1002
        %1321 = vrot.lane.b32.xlu0 %v1319, 126
        %v1322 = vpop.permute.xlu0 %1321
        %v1324 = vadd.f32 %v1268, %v1322
        %v1325 = vstv %s545
        %v1326 = vmul.f32 %v1325, %v1002
        %1328 = vrot.lane.b32.xlu0 %v1326, 126
        %v1329 = vpop.permute.xlu0 %1328
        %v1331 = vadd.f32 %v1275, %v1329
        %v1332 = vstv %s357
        %v1333 = vmul.f32 %v1332, %v1027
        %1335 = vrot.lane.b32.xlu0 %v1333, 126
        %v1336 = vpop.permute.xlu0 %1335
        %v1338 = vadd.f32 %v1282, %v1336
        %v1339 = vstv %s384
        %v1340 = vmul.f32 %v1339, %v1027
        %1342 = vrot.lane.b32.xlu0 %v1340, 126
        %v1343 = vpop.permute.xlu0 %1342
        %v1345 = vadd.f32 %v1289, %v1343
        %v1346 = vstv %s411
        %v1347 = vmul.f32 %v1346, %v1027
        %1349 = vrot.lane.b32.xlu0 %v1347, 126
        %v1350 = vpop.permute.xlu0 %1349
        %v1352 = vadd.f32 %v1296, %v1350
        %v1353 = vstv %s438
        %v1354 = vmul.f32 %v1353, %v1027
        %1356 = vrot.lane.b32.xlu0 %v1354, 126
        %v1357 = vpop.permute.xlu0 %1356
        %v1359 = vadd.f32 %v1303, %v1357
        %v1360 = vstv %s465
        %v1361 = vmul.f32 %v1360, %v1027
        %1363 = vrot.lane.b32.xlu0 %v1361, 126
        %v1364 = vpop.permute.xlu0 %1363
        %v1366 = vadd.f32 %v1310, %v1364
        %v1367 = vstv %s492
        %v1368 = vmul.f32 %v1367, %v1027
        %1370 = vrot.lane.b32.xlu0 %v1368, 126
        %v1371 = vpop.permute.xlu0 %1370
        %v1373 = vadd.f32 %v1317, %v1371
        %v1374 = vstv %s519
        %v1375 = vmul.f32 %v1374, %v1027
        %1377 = vrot.lane.b32.xlu0 %v1375, 126
        %v1378 = vpop.permute.xlu0 %1377
        %v1380 = vadd.f32 %v1324, %v1378
        %v1381 = vstv %s546
        %v1382 = vmul.f32 %v1381, %v1027
        %1384 = vrot.lane.b32.xlu0 %v1382, 126
        %v1385 = vpop.permute.xlu0 %1384
        %v1387 = vadd.f32 %v1331, %v1385
        %v1388 = vld [vmem:[%s339 + $0x2] sm:$0xff]
        %v1389 = vstv %s358
        %v1390 = vmul.f32 %v1389, %v1388
        %v1391 = vadd.f32 %v1338, %v1390
        %v1392 = vstv %s385
        %v1393 = vmul.f32 %v1392, %v1388
        %v1394 = vadd.f32 %v1345, %v1393
        %v1395 = vstv %s412
        %v1396 = vmul.f32 %v1395, %v1388
        %v1397 = vadd.f32 %v1352, %v1396
        %v1398 = vstv %s439
        %v1399 = vmul.f32 %v1398, %v1388
        %v1400 = vadd.f32 %v1359, %v1399
        %v1401 = vstv %s466
        %v1402 = vmul.f32 %v1401, %v1388
        %v1403 = vadd.f32 %v1366, %v1402
        %v1404 = vstv %s493
        %v1405 = vmul.f32 %v1404, %v1388
        %v1406 = vadd.f32 %v1373, %v1405
        %v1407 = vstv %s520
        %v1408 = vmul.f32 %v1407, %v1388
        %v1409 = vadd.f32 %v1380, %v1408
        %v1410 = vstv %s547
        %v1411 = vmul.f32 %v1410, %v1388
        %v1412 = vadd.f32 %v1387, %v1411
        %v1413 = vld [vmem:[%s589 + $0x2] sm:$0xff]
        %v1414 = vstv %s359
        %v1415 = vmul.f32 %v1414, %v1413
        %v1416 = vadd.f32 %v1391, %v1415
        %v1417 = vstv %s386
        %v1418 = vmul.f32 %v1417, %v1413
        %v1419 = vadd.f32 %v1394, %v1418
        %v1420 = vstv %s413
        %v1421 = vmul.f32 %v1420, %v1413
        %v1422 = vadd.f32 %v1397, %v1421
        %v1423 = vstv %s440
        %v1424 = vmul.f32 %v1423, %v1413
        %v1425 = vadd.f32 %v1400, %v1424
        %v1426 = vstv %s467
        %v1427 = vmul.f32 %v1426, %v1413
        %v1428 = vadd.f32 %v1403, %v1427
        %v1429 = vstv %s494
        %v1430 = vmul.f32 %v1429, %v1413
        %v1431 = vadd.f32 %v1406, %v1430
        %v1432 = vstv %s521
        %v1433 = vmul.f32 %v1432, %v1413
        %v1434 = vadd.f32 %v1409, %v1433
        %v1435 = vstv %s548
        %v1436 = vmul.f32 %v1435, %v1413
        %v1437 = vadd.f32 %v1412, %v1436
        %v1438 = vld [vmem:[%s615 + $0x2] sm:$0xff]
        %v1439 = vstv %s360
        %v1440 = vmul.f32 %v1439, %v1438
        %v1441 = vadd.f32 %v1416, %v1440
        %v1442 = vstv %s387
        %v1443 = vmul.f32 %v1442, %v1438
        %v1444 = vadd.f32 %v1419, %v1443
        %v1445 = vstv %s414
        %v1446 = vmul.f32 %v1445, %v1438
        %v1447 = vadd.f32 %v1422, %v1446
        %v1448 = vstv %s441
        %v1449 = vmul.f32 %v1448, %v1438
        %v1450 = vadd.f32 %v1425, %v1449
        %v1451 = vstv %s468
        %v1452 = vmul.f32 %v1451, %v1438
        %v1453 = vadd.f32 %v1428, %v1452
        %v1454 = vstv %s495
        %v1455 = vmul.f32 %v1454, %v1438
        %v1456 = vadd.f32 %v1431, %v1455
        %v1457 = vstv %s522
        %v1458 = vmul.f32 %v1457, %v1438
        %v1459 = vadd.f32 %v1434, %v1458
        %v1460 = vstv %s549
        %v1461 = vmul.f32 %v1460, %v1438
        %v1462 = vadd.f32 %v1437, %v1461
        %v1463 = vstv %s361
        %v1464 = vmul.f32 %v1463, %v1388
        %1466 = vrot.lane.b32.xlu0 %v1464, 127
        %v1467 = vpop.permute.xlu0 %1466
        %v1469 = vadd.f32 %v1441, %v1467
        %v1470 = vstv %s388
        %v1471 = vmul.f32 %v1470, %v1388
        %1473 = vrot.lane.b32.xlu0 %v1471, 127
        %v1474 = vpop.permute.xlu0 %1473
        %v1476 = vadd.f32 %v1444, %v1474
        %v1477 = vstv %s415
        %v1478 = vmul.f32 %v1477, %v1388
        %1480 = vrot.lane.b32.xlu0 %v1478, 127
        %v1481 = vpop.permute.xlu0 %1480
        %v1483 = vadd.f32 %v1447, %v1481
        %v1484 = vstv %s442
        %v1485 = vmul.f32 %v1484, %v1388
        %1487 = vrot.lane.b32.xlu0 %v1485, 127
        %v1488 = vpop.permute.xlu0 %1487
        %v1490 = vadd.f32 %v1450, %v1488
        %v1491 = vstv %s469
        %v1492 = vmul.f32 %v1491, %v1388
        %1494 = vrot.lane.b32.xlu0 %v1492, 127
        %v1495 = vpop.permute.xlu0 %1494
        %v1497 = vadd.f32 %v1453, %v1495
        %v1498 = vstv %s496
        %v1499 = vmul.f32 %v1498, %v1388
        %1501 = vrot.lane.b32.xlu0 %v1499, 127
        %v1502 = vpop.permute.xlu0 %1501
        %v1504 = vadd.f32 %v1456, %v1502
        %v1505 = vstv %s523
        %v1506 = vmul.f32 %v1505, %v1388
        %1508 = vrot.lane.b32.xlu0 %v1506, 127
        %v1509 = vpop.permute.xlu0 %1508
        %v1511 = vadd.f32 %v1459, %v1509
        %v1512 = vstv %s550
        %v1513 = vmul.f32 %v1512, %v1388
        %1515 = vrot.lane.b32.xlu0 %v1513, 127
        %v1516 = vpop.permute.xlu0 %1515
        %v1518 = vadd.f32 %v1462, %v1516
        %v1519 = vstv %s362
        %v1520 = vmul.f32 %v1519, %v1413
        %1522 = vrot.lane.b32.xlu0 %v1520, 127
        %v1523 = vpop.permute.xlu0 %1522
        %v1525 = vadd.f32 %v1469, %v1523
        %v1526 = vstv %s389
        %v1527 = vmul.f32 %v1526, %v1413
        %1529 = vrot.lane.b32.xlu0 %v1527, 127
        %v1530 = vpop.permute.xlu0 %1529
        %v1532 = vadd.f32 %v1476, %v1530
        %v1533 = vstv %s416
        %v1534 = vmul.f32 %v1533, %v1413
        %1536 = vrot.lane.b32.xlu0 %v1534, 127
        %v1537 = vpop.permute.xlu0 %1536
        %v1539 = vadd.f32 %v1483, %v1537
        %v1540 = vstv %s443
        %v1541 = vmul.f32 %v1540, %v1413
        %1543 = vrot.lane.b32.xlu0 %v1541, 127
        %v1544 = vpop.permute.xlu0 %1543
        %v1546 = vadd.f32 %v1490, %v1544
        %v1547 = vstv %s470
        %v1548 = vmul.f32 %v1547, %v1413
        %1550 = vrot.lane.b32.xlu0 %v1548, 127
        %v1551 = vpop.permute.xlu0 %1550
        %v1553 = vadd.f32 %v1497, %v1551
        %v1554 = vstv %s497
        %v1555 = vmul.f32 %v1554, %v1413
        %1557 = vrot.lane.b32.xlu0 %v1555, 127
        %v1558 = vpop.permute.xlu0 %1557
        %v1560 = vadd.f32 %v1504, %v1558
        %v1561 = vstv %s524
        %v1562 = vmul.f32 %v1561, %v1413
        %1564 = vrot.lane.b32.xlu0 %v1562, 127
        %v1565 = vpop.permute.xlu0 %1564
        %v1567 = vadd.f32 %v1511, %v1565
        %v1568 = vstv %s551
        %v1569 = vmul.f32 %v1568, %v1413
        %1571 = vrot.lane.b32.xlu0 %v1569, 127
        %v1572 = vpop.permute.xlu0 %1571
        %v1574 = vadd.f32 %v1518, %v1572
        %v1575 = vstv %s363
        %v1576 = vmul.f32 %v1575, %v1438
        %1578 = vrot.lane.b32.xlu0 %v1576, 127
        %v1579 = vpop.permute.xlu0 %1578
        %v1581 = vadd.f32 %v1525, %v1579
        %v1582 = vstv %s390
        %v1583 = vmul.f32 %v1582, %v1438
        %1585 = vrot.lane.b32.xlu0 %v1583, 127
        %v1586 = vpop.permute.xlu0 %1585
        %v1588 = vadd.f32 %v1532, %v1586
        %v1589 = vstv %s417
        %v1590 = vmul.f32 %v1589, %v1438
        %1592 = vrot.lane.b32.xlu0 %v1590, 127
        %v1593 = vpop.permute.xlu0 %1592
        %v1595 = vadd.f32 %v1539, %v1593
        %v1596 = vstv %s444
        %v1597 = vmul.f32 %v1596, %v1438
        %1599 = vrot.lane.b32.xlu0 %v1597, 127
        %v1600 = vpop.permute.xlu0 %1599
        %v1602 = vadd.f32 %v1546, %v1600
        %v1603 = vstv %s471
        %v1604 = vmul.f32 %v1603, %v1438
        %1606 = vrot.lane.b32.xlu0 %v1604, 127
        %v1607 = vpop.permute.xlu0 %1606
        %v1609 = vadd.f32 %v1553, %v1607
        %v1610 = vstv %s498
        %v1611 = vmul.f32 %v1610, %v1438
        %1613 = vrot.lane.b32.xlu0 %v1611, 127
        %v1614 = vpop.permute.xlu0 %1613
        %v1616 = vadd.f32 %v1560, %v1614
        %v1617 = vstv %s525
        %v1618 = vmul.f32 %v1617, %v1438
        %1620 = vrot.lane.b32.xlu0 %v1618, 127
        %v1621 = vpop.permute.xlu0 %1620
        %v1623 = vadd.f32 %v1567, %v1621
        %v1624 = vstv %s552
        %v1625 = vmul.f32 %v1624, %v1438
        %1627 = vrot.lane.b32.xlu0 %v1625, 127
        %v1628 = vpop.permute.xlu0 %1627
        %v1630 = vadd.f32 %v1574, %v1628
        %v1631 = vstv %s364
        %v1632 = vmul.f32 %v1631, %v1388
        %1634 = vrot.lane.b32.xlu0 %v1632, 126
        %v1635 = vpop.permute.xlu0 %1634
        %v1637 = vadd.f32 %v1581, %v1635
        %v1638 = vstv %s391
        %v1639 = vmul.f32 %v1638, %v1388
        %1641 = vrot.lane.b32.xlu0 %v1639, 126
        %v1642 = vpop.permute.xlu0 %1641
        %v1644 = vadd.f32 %v1588, %v1642
        %v1645 = vstv %s418
        %v1646 = vmul.f32 %v1645, %v1388
        %1648 = vrot.lane.b32.xlu0 %v1646, 126
        %v1649 = vpop.permute.xlu0 %1648
        %v1651 = vadd.f32 %v1595, %v1649
        %v1652 = vstv %s445
        %v1653 = vmul.f32 %v1652, %v1388
        %1655 = vrot.lane.b32.xlu0 %v1653, 126
        %v1656 = vpop.permute.xlu0 %1655
        %v1658 = vadd.f32 %v1602, %v1656
        %v1659 = vstv %s472
        %v1660 = vmul.f32 %v1659, %v1388
        %1662 = vrot.lane.b32.xlu0 %v1660, 126
        %v1663 = vpop.permute.xlu0 %1662
        %v1665 = vadd.f32 %v1609, %v1663
        %v1666 = vstv %s499
        %v1667 = vmul.f32 %v1666, %v1388
        %1669 = vrot.lane.b32.xlu0 %v1667, 126
        %v1670 = vpop.permute.xlu0 %1669
        %v1672 = vadd.f32 %v1616, %v1670
        %v1673 = vstv %s526
        %v1674 = vmul.f32 %v1673, %v1388
        %1676 = vrot.lane.b32.xlu0 %v1674, 126
        %v1677 = vpop.permute.xlu0 %1676
        %v1679 = vadd.f32 %v1623, %v1677
        %v1680 = vstv %s553
        %v1681 = vmul.f32 %v1680, %v1388
        %1683 = vrot.lane.b32.xlu0 %v1681, 126
        %v1684 = vpop.permute.xlu0 %1683
        %v1686 = vadd.f32 %v1630, %v1684
        %v1687 = vstv %s365
        %v1688 = vmul.f32 %v1687, %v1413
        %1690 = vrot.lane.b32.xlu0 %v1688, 126
        %v1691 = vpop.permute.xlu0 %1690
        %v1693 = vadd.f32 %v1637, %v1691
        %v1694 = vstv %s392
        %v1695 = vmul.f32 %v1694, %v1413
        %1697 = vrot.lane.b32.xlu0 %v1695, 126
        %v1698 = vpop.permute.xlu0 %1697
        %v1700 = vadd.f32 %v1644, %v1698
        %v1701 = vstv %s419
        %v1702 = vmul.f32 %v1701, %v1413
        %1704 = vrot.lane.b32.xlu0 %v1702, 126
        %v1705 = vpop.permute.xlu0 %1704
        %v1707 = vadd.f32 %v1651, %v1705
        %v1708 = vstv %s446
        %v1709 = vmul.f32 %v1708, %v1413
        %1711 = vrot.lane.b32.xlu0 %v1709, 126
        %v1712 = vpop.permute.xlu0 %1711
        %v1714 = vadd.f32 %v1658, %v1712
        %v1715 = vstv %s473
        %v1716 = vmul.f32 %v1715, %v1413
        %1718 = vrot.lane.b32.xlu0 %v1716, 126
        %v1719 = vpop.permute.xlu0 %1718
        %v1721 = vadd.f32 %v1665, %v1719
        %v1722 = vstv %s500
        %v1723 = vmul.f32 %v1722, %v1413
        %1725 = vrot.lane.b32.xlu0 %v1723, 126
        %v1726 = vpop.permute.xlu0 %1725
        %v1728 = vadd.f32 %v1672, %v1726
        %v1729 = vstv %s527
        %v1730 = vmul.f32 %v1729, %v1413
        %1732 = vrot.lane.b32.xlu0 %v1730, 126
        %v1733 = vpop.permute.xlu0 %1732
        %v1735 = vadd.f32 %v1679, %v1733
        %v1736 = vstv %s554
        %v1737 = vmul.f32 %v1736, %v1413
        %1739 = vrot.lane.b32.xlu0 %v1737, 126
        %v1740 = vpop.permute.xlu0 %1739
        %v1742 = vadd.f32 %v1686, %v1740
        %v1743 = vstv %s366
        %v1744 = vmul.f32 %v1743, %v1438
        %1746 = vrot.lane.b32.xlu0 %v1744, 126
        %v1747 = vpop.permute.xlu0 %1746
        %v1749 = vadd.f32 %v1693, %v1747
        %v1750 = vstv %s393
        %v1751 = vmul.f32 %v1750, %v1438
        %1753 = vrot.lane.b32.xlu0 %v1751, 126
        %v1754 = vpop.permute.xlu0 %1753
        %v1756 = vadd.f32 %v1700, %v1754
        %v1757 = vstv %s420
        %v1758 = vmul.f32 %v1757, %v1438
        %1760 = vrot.lane.b32.xlu0 %v1758, 126
        %v1761 = vpop.permute.xlu0 %1760
        %v1763 = vadd.f32 %v1707, %v1761
        %v1764 = vstv %s447
        %v1765 = vmul.f32 %v1764, %v1438
        %1767 = vrot.lane.b32.xlu0 %v1765, 126
        %v1768 = vpop.permute.xlu0 %1767
        %v1770 = vadd.f32 %v1714, %v1768
        %v1771 = vstv %s474
        %v1772 = vmul.f32 %v1771, %v1438
        %1774 = vrot.lane.b32.xlu0 %v1772, 126
        %v1775 = vpop.permute.xlu0 %1774
        %v1777 = vadd.f32 %v1721, %v1775
        %v1778 = vstv %s501
        %v1779 = vmul.f32 %v1778, %v1438
        %1781 = vrot.lane.b32.xlu0 %v1779, 126
        %v1782 = vpop.permute.xlu0 %1781
        %v1784 = vadd.f32 %v1728, %v1782
        %v1785 = vstv %s528
        %v1786 = vmul.f32 %v1785, %v1438
        %1788 = vrot.lane.b32.xlu0 %v1786, 126
        %v1789 = vpop.permute.xlu0 %1788
        %v1791 = vadd.f32 %v1735, %v1789
        %v1792 = vstv %s555
        %v1793 = vmul.f32 %v1792, %v1438
        %1795 = vrot.lane.b32.xlu0 %v1793, 126
        %v1796 = vpop.permute.xlu0 %1795
        %v1798 = vadd.f32 %v1742, %v1796
        %v1799 = vstv %s556
        %v1800 = vadd.f32 %v1749, %v1799
        %v1801 = vmax.f32 %v1800, 0.0
        %vm1802 = vcmask 130048
        %v1803 = vsel %vm1802, %v1801, 0.0
        %1804 = vadd.xlane.f32.xlu0 %v1803
        %v1805 = vpop.xlane.xlu0 %1804
        %v1806 = vrot.slane %v1805, 4
        %v1807 = vadd.f32 %v1805, %v1806
        %v1808 = vrot.slane %v1807, 2
        %v1809 = vadd.f32 %v1807, %v1808
        %v1810 = vrot.slane %v1809, 1
        %v1811 = vadd.f32 %v1809, %v1810
        %v1812 = vadd.f32 %v1811, 0.0
        %v1813 = vstv %s557
        %v1814 = vadd.f32 %v1756, %v1813
        %v1815 = vmax.f32 %v1814, 0.0
        %v1816 = vsel %vm1802, %v1815, 0.0
        %1817 = vadd.xlane.f32.xlu0 %v1816
        %v1818 = vpop.xlane.xlu0 %1817
        %v1819 = vrot.slane %v1818, 4
        %v1820 = vadd.f32 %v1818, %v1819
        %v1821 = vrot.slane %v1820, 2
        %v1822 = vadd.f32 %v1820, %v1821
        %v1823 = vrot.slane %v1822, 1
        %v1824 = vadd.f32 %v1822, %v1823
        %v1825 = vadd.f32 %v1824, 0.0
        %v1826 = vstv %s558
        %v1827 = vadd.f32 %v1763, %v1826
        %v1828 = vmax.f32 %v1827, 0.0
        %v1829 = vsel %vm1802, %v1828, 0.0
        %1830 = vadd.xlane.f32.xlu0 %v1829
        %v1831 = vpop.xlane.xlu0 %1830
        %v1832 = vrot.slane %v1831, 4
        %v1833 = vadd.f32 %v1831, %v1832
        %v1834 = vrot.slane %v1833, 2
        %v1835 = vadd.f32 %v1833, %v1834
        %v1836 = vrot.slane %v1835, 1
        %v1837 = vadd.f32 %v1835, %v1836
        %v1838 = vadd.f32 %v1837, 0.0
        %v1839 = vstv %s559
        %v1840 = vadd.f32 %v1770, %v1839
        %v1841 = vmax.f32 %v1840, 0.0
        %v1842 = vsel %vm1802, %v1841, 0.0
        %1843 = vadd.xlane.f32.xlu0 %v1842
        %v1844 = vpop.xlane.xlu0 %1843
        %v1845 = vrot.slane %v1844, 4
        %v1846 = vadd.f32 %v1844, %v1845
        %v1847 = vrot.slane %v1846, 2
        %v1848 = vadd.f32 %v1846, %v1847
        %v1849 = vrot.slane %v1848, 1
        %v1850 = vadd.f32 %v1848, %v1849
        %v1851 = vadd.f32 %v1850, 0.0
        %v1852 = vstv %s560
        %v1853 = vadd.f32 %v1777, %v1852
        %v1854 = vmax.f32 %v1853, 0.0
        %v1855 = vsel %vm1802, %v1854, 0.0
        %1856 = vadd.xlane.f32.xlu0 %v1855
        %v1857 = vpop.xlane.xlu0 %1856
        %v1858 = vrot.slane %v1857, 4
        %v1859 = vadd.f32 %v1857, %v1858
        %v1860 = vrot.slane %v1859, 2
        %v1861 = vadd.f32 %v1859, %v1860
        %v1862 = vrot.slane %v1861, 1
        %v1863 = vadd.f32 %v1861, %v1862
        %v1864 = vadd.f32 %v1863, 0.0
        %v1865 = vstv %s561
        %v1866 = vadd.f32 %v1784, %v1865
        %v1867 = vmax.f32 %v1866, 0.0
        %v1868 = vsel %vm1802, %v1867, 0.0
        %1869 = vadd.xlane.f32.xlu0 %v1868
        %v1870 = vpop.xlane.xlu0 %1869
        %v1871 = vrot.slane %v1870, 4
        %v1872 = vadd.f32 %v1870, %v1871
        %v1873 = vrot.slane %v1872, 2
        %v1874 = vadd.f32 %v1872, %v1873
        %v1875 = vrot.slane %v1874, 1
        %v1876 = vadd.f32 %v1874, %v1875
        %v1877 = vadd.f32 %v1876, 0.0
        %v1878 = vstv %s562
        %v1879 = vadd.f32 %v1791, %v1878
        %v1880 = vmax.f32 %v1879, 0.0
        %v1881 = vsel %vm1802, %v1880, 0.0
        %1882 = vadd.xlane.f32.xlu0 %v1881
        %v1883 = vpop.xlane.xlu0 %1882
        %v1884 = vrot.slane %v1883, 4
        %v1885 = vadd.f32 %v1883, %v1884
        %v1886 = vrot.slane %v1885, 2
        %v1887 = vadd.f32 %v1885, %v1886
        %v1888 = vrot.slane %v1887, 1
        %v1889 = vadd.f32 %v1887, %v1888
        %v1890 = vadd.f32 %v1889, 0.0
        %v1891 = vstv %s563
        %v1892 = vadd.f32 %v1798, %v1891
        %v1893 = vmax.f32 %v1892, 0.0
        %v1894 = vsel %vm1802, %v1893, 0.0
        %1895 = vadd.xlane.f32.xlu0 %v1894
        %v1896 = vpop.xlane.xlu0 %1895
        %v1897 = vrot.slane %v1896, 4
        %v1898 = vadd.f32 %v1896, %v1897
        %v1899 = vrot.slane %v1898, 2
        %v1900 = vadd.f32 %v1898, %v1899
        %v1901 = vrot.slane %v1900, 1
        %v1902 = vadd.f32 %v1900, %v1901
        %v1903 = vadd.f32 %v1902, 0.0
        %v1904 = vld [vmem:[%s339 + $0x8] sm:$0xff]
        %v1905 = vmul.f32 %v565, %v1904
        %v1906 = vadd.f32 %v1905, 0.0
        %v1907 = vmul.f32 %v568, %v1904
        %v1908 = vadd.f32 %v1907, 0.0
        %v1909 = vmul.f32 %v571, %v1904
        %v1910 = vadd.f32 %v1909, 0.0
        %v1911 = vmul.f32 %v574, %v1904
        %v1912 = vadd.f32 %v1911, 0.0
        %v1913 = vmul.f32 %v577, %v1904
        %v1914 = vadd.f32 %v1913, 0.0
        %v1915 = vmul.f32 %v580, %v1904
        %v1916 = vadd.f32 %v1915, 0.0
        %v1917 = vmul.f32 %v583, %v1904
        %v1918 = vadd.f32 %v1917, 0.0
        %v1919 = vmul.f32 %v586, %v1904
        %v1920 = vadd.f32 %v1919, 0.0
        %v1921 = vld [vmem:[%s589 + $0x8] sm:$0xff]
        %v1922 = vmul.f32 %v591, %v1921
        %v1923 = vadd.f32 %v1906, %v1922
        %v1924 = vmul.f32 %v594, %v1921
        %v1925 = vadd.f32 %v1908, %v1924
        %v1926 = vmul.f32 %v597, %v1921
        %v1927 = vadd.f32 %v1910, %v1926
        %v1928 = vmul.f32 %v600, %v1921
        %v1929 = vadd.f32 %v1912, %v1928
        %v1930 = vmul.f32 %v603, %v1921
        %v1931 = vadd.f32 %v1914, %v1930
        %v1932 = vmul.f32 %v606, %v1921
        %v1933 = vadd.f32 %v1916, %v1932
        %v1934 = vmul.f32 %v609, %v1921
        %v1935 = vadd.f32 %v1918, %v1934
        %v1936 = vmul.f32 %v612, %v1921
        %v1937 = vadd.f32 %v1920, %v1936
        %v1938 = vld [vmem:[%s615 + $0x8] sm:$0xff]
        %v1939 = vmul.f32 %v617, %v1938
        %v1940 = vadd.f32 %v1923, %v1939
        %v1941 = vmul.f32 %v620, %v1938
        %v1942 = vadd.f32 %v1925, %v1941
        %v1943 = vmul.f32 %v623, %v1938
        %v1944 = vadd.f32 %v1927, %v1943
        %v1945 = vmul.f32 %v626, %v1938
        %v1946 = vadd.f32 %v1929, %v1945
        %v1947 = vmul.f32 %v629, %v1938
        %v1948 = vadd.f32 %v1931, %v1947
        %v1949 = vmul.f32 %v632, %v1938
        %v1950 = vadd.f32 %v1933, %v1949
        %v1951 = vmul.f32 %v635, %v1938
        %v1952 = vadd.f32 %v1935, %v1951
        %v1953 = vmul.f32 %v638, %v1938
        %v1954 = vadd.f32 %v1937, %v1953
        %v1955 = vmul.f32 %v641, %v1904
        %1957 = vrot.lane.b32.xlu0 %v1955, 127
        %v1958 = vpop.permute.xlu0 %1957
        %v1960 = vadd.f32 %v1940, %v1958
        %v1961 = vmul.f32 %v648, %v1904
        %1963 = vrot.lane.b32.xlu0 %v1961, 127
        %v1964 = vpop.permute.xlu0 %1963
        %v1966 = vadd.f32 %v1942, %v1964
        %v1967 = vmul.f32 %v655, %v1904
        %1969 = vrot.lane.b32.xlu0 %v1967, 127
        %v1970 = vpop.permute.xlu0 %1969
        %v1972 = vadd.f32 %v1944, %v1970
        %v1973 = vmul.f32 %v662, %v1904
        %1975 = vrot.lane.b32.xlu0 %v1973, 127
        %v1976 = vpop.permute.xlu0 %1975
        %v1978 = vadd.f32 %v1946, %v1976
        %v1979 = vmul.f32 %v669, %v1904
        %1981 = vrot.lane.b32.xlu0 %v1979, 127
        %v1982 = vpop.permute.xlu0 %1981
        %v1984 = vadd.f32 %v1948, %v1982
        %v1985 = vmul.f32 %v676, %v1904
        %1987 = vrot.lane.b32.xlu0 %v1985, 127
        %v1988 = vpop.permute.xlu0 %1987
        %v1990 = vadd.f32 %v1950, %v1988
        %v1991 = vmul.f32 %v683, %v1904
        %1993 = vrot.lane.b32.xlu0 %v1991, 127
        %v1994 = vpop.permute.xlu0 %1993
        %v1996 = vadd.f32 %v1952, %v1994
        %v1997 = vmul.f32 %v690, %v1904
        %1999 = vrot.lane.b32.xlu0 %v1997, 127
        %v2000 = vpop.permute.xlu0 %1999
        %v2002 = vadd.f32 %v1954, %v2000
        %v2003 = vmul.f32 %v697, %v1921
        %2005 = vrot.lane.b32.xlu0 %v2003, 127
        %v2006 = vpop.permute.xlu0 %2005
        %v2008 = vadd.f32 %v1960, %v2006
        %v2009 = vmul.f32 %v704, %v1921
        %2011 = vrot.lane.b32.xlu0 %v2009, 127
        %v2012 = vpop.permute.xlu0 %2011
        %v2014 = vadd.f32 %v1966, %v2012
        %v2015 = vmul.f32 %v711, %v1921
        %2017 = vrot.lane.b32.xlu0 %v2015, 127
        %v2018 = vpop.permute.xlu0 %2017
        %v2020 = vadd.f32 %v1972, %v2018
        %v2021 = vmul.f32 %v718, %v1921
        %2023 = vrot.lane.b32.xlu0 %v2021, 127
        %v2024 = vpop.permute.xlu0 %2023
        %v2026 = vadd.f32 %v1978, %v2024
        %v2027 = vmul.f32 %v725, %v1921
        %2029 = vrot.lane.b32.xlu0 %v2027, 127
        %v2030 = vpop.permute.xlu0 %2029
        %v2032 = vadd.f32 %v1984, %v2030
        %v2033 = vmul.f32 %v732, %v1921
        %2035 = vrot.lane.b32.xlu0 %v2033, 127
        %v2036 = vpop.permute.xlu0 %2035
        %v2038 = vadd.f32 %v1990, %v2036
        %v2039 = vmul.f32 %v739, %v1921
        %2041 = vrot.lane.b32.xlu0 %v2039, 127
        %v2042 = vpop.permute.xlu0 %2041
        %v2044 = vadd.f32 %v1996, %v2042
        %v2045 = vmul.f32 %v746, %v1921
        %2047 = vrot.lane.b32.xlu0 %v2045, 127
        %v2048 = vpop.permute.xlu0 %2047
        %v2050 = vadd.f32 %v2002, %v2048
        %v2051 = vmul.f32 %v753, %v1938
        %2053 = vrot.lane.b32.xlu0 %v2051, 127
        %v2054 = vpop.permute.xlu0 %2053
        %v2056 = vadd.f32 %v2008, %v2054
        %v2057 = vmul.f32 %v760, %v1938
        %2059 = vrot.lane.b32.xlu0 %v2057, 127
        %v2060 = vpop.permute.xlu0 %2059
        %v2062 = vadd.f32 %v2014, %v2060
        %v2063 = vmul.f32 %v767, %v1938
        %2065 = vrot.lane.b32.xlu0 %v2063, 127
        %v2066 = vpop.permute.xlu0 %2065
        %v2068 = vadd.f32 %v2020, %v2066
        %v2069 = vmul.f32 %v774, %v1938
        %2071 = vrot.lane.b32.xlu0 %v2069, 127
        %v2072 = vpop.permute.xlu0 %2071
        %v2074 = vadd.f32 %v2026, %v2072
        %v2075 = vmul.f32 %v781, %v1938
        %2077 = vrot.lane.b32.xlu0 %v2075, 127
        %v2078 = vpop.permute.xlu0 %2077
        %v2080 = vadd.f32 %v2032, %v2078
        %v2081 = vmul.f32 %v788, %v1938
        %2083 = vrot.lane.b32.xlu0 %v2081, 127
        %v2084 = vpop.permute.xlu0 %2083
        %v2086 = vadd.f32 %v2038, %v2084
        %v2087 = vmul.f32 %v795, %v1938
        %2089 = vrot.lane.b32.xlu0 %v2087, 127
        %v2090 = vpop.permute.xlu0 %2089
        %v2092 = vadd.f32 %v2044, %v2090
        %v2093 = vmul.f32 %v802, %v1938
        %2095 = vrot.lane.b32.xlu0 %v2093, 127
        %v2096 = vpop.permute.xlu0 %2095
        %v2098 = vadd.f32 %v2050, %v2096
        %v2099 = vmul.f32 %v809, %v1904
        %2101 = vrot.lane.b32.xlu0 %v2099, 126
        %v2102 = vpop.permute.xlu0 %2101
        %v2104 = vadd.f32 %v2056, %v2102
        %v2105 = vmul.f32 %v816, %v1904
        %2107 = vrot.lane.b32.xlu0 %v2105, 126
        %v2108 = vpop.permute.xlu0 %2107
        %v2110 = vadd.f32 %v2062, %v2108
        %v2111 = vmul.f32 %v823, %v1904
        %2113 = vrot.lane.b32.xlu0 %v2111, 126
        %v2114 = vpop.permute.xlu0 %2113
        %v2116 = vadd.f32 %v2068, %v2114
        %v2117 = vmul.f32 %v830, %v1904
        %2119 = vrot.lane.b32.xlu0 %v2117, 126
        %v2120 = vpop.permute.xlu0 %2119
        %v2122 = vadd.f32 %v2074, %v2120
        %v2123 = vmul.f32 %v837, %v1904
        %2125 = vrot.lane.b32.xlu0 %v2123, 126
        %v2126 = vpop.permute.xlu0 %2125
        %v2128 = vadd.f32 %v2080, %v2126
        %v2129 = vmul.f32 %v844, %v1904
        %2131 = vrot.lane.b32.xlu0 %v2129, 126
        %v2132 = vpop.permute.xlu0 %2131
        %v2134 = vadd.f32 %v2086, %v2132
        %v2135 = vmul.f32 %v851, %v1904
        %2137 = vrot.lane.b32.xlu0 %v2135, 126
        %v2138 = vpop.permute.xlu0 %2137
        %v2140 = vadd.f32 %v2092, %v2138
        %v2141 = vmul.f32 %v858, %v1904
        %2143 = vrot.lane.b32.xlu0 %v2141, 126
        %v2144 = vpop.permute.xlu0 %2143
        %v2146 = vadd.f32 %v2098, %v2144
        %v2147 = vmul.f32 %v865, %v1921
        %2149 = vrot.lane.b32.xlu0 %v2147, 126
        %v2150 = vpop.permute.xlu0 %2149
        %v2152 = vadd.f32 %v2104, %v2150
        %v2153 = vmul.f32 %v872, %v1921
        %2155 = vrot.lane.b32.xlu0 %v2153, 126
        %v2156 = vpop.permute.xlu0 %2155
        %v2158 = vadd.f32 %v2110, %v2156
        %v2159 = vmul.f32 %v879, %v1921
        %2161 = vrot.lane.b32.xlu0 %v2159, 126
        %v2162 = vpop.permute.xlu0 %2161
        %v2164 = vadd.f32 %v2116, %v2162
        %v2165 = vmul.f32 %v886, %v1921
        %2167 = vrot.lane.b32.xlu0 %v2165, 126
        %v2168 = vpop.permute.xlu0 %2167
        %v2170 = vadd.f32 %v2122, %v2168
        %v2171 = vmul.f32 %v893, %v1921
        %2173 = vrot.lane.b32.xlu0 %v2171, 126
        %v2174 = vpop.permute.xlu0 %2173
        %v2176 = vadd.f32 %v2128, %v2174
        %v2177 = vmul.f32 %v900, %v1921
        %2179 = vrot.lane.b32.xlu0 %v2177, 126
        %v2180 = vpop.permute.xlu0 %2179
        %v2182 = vadd.f32 %v2134, %v2180
        %v2183 = vmul.f32 %v907, %v1921
        %2185 = vrot.lane.b32.xlu0 %v2183, 126
        %v2186 = vpop.permute.xlu0 %2185
        %v2188 = vadd.f32 %v2140, %v2186
        %v2189 = vmul.f32 %v914, %v1921
        %2191 = vrot.lane.b32.xlu0 %v2189, 126
        %v2192 = vpop.permute.xlu0 %2191
        %v2194 = vadd.f32 %v2146, %v2192
        %v2195 = vmul.f32 %v921, %v1938
        %2197 = vrot.lane.b32.xlu0 %v2195, 126
        %v2198 = vpop.permute.xlu0 %2197
        %v2200 = vadd.f32 %v2152, %v2198
        %v2201 = vmul.f32 %v928, %v1938
        %2203 = vrot.lane.b32.xlu0 %v2201, 126
        %v2204 = vpop.permute.xlu0 %2203
        %v2206 = vadd.f32 %v2158, %v2204
        %v2207 = vmul.f32 %v935, %v1938
        %2209 = vrot.lane.b32.xlu0 %v2207, 126
        %v2210 = vpop.permute.xlu0 %2209
        %v2212 = vadd.f32 %v2164, %v2210
        %v2213 = vmul.f32 %v942, %v1938
        %2215 = vrot.lane.b32.xlu0 %v2213, 126
        %v2216 = vpop.permute.xlu0 %2215
        %v2218 = vadd.f32 %v2170, %v2216
        %v2219 = vmul.f32 %v949, %v1938
        %2221 = vrot.lane.b32.xlu0 %v2219, 126
        %v2222 = vpop.permute.xlu0 %2221
        %v2224 = vadd.f32 %v2176, %v2222
        %v2225 = vmul.f32 %v956, %v1938
        %2227 = vrot.lane.b32.xlu0 %v2225, 126
        %v2228 = vpop.permute.xlu0 %2227
        %v2230 = vadd.f32 %v2182, %v2228
        %v2231 = vmul.f32 %v963, %v1938
        %2233 = vrot.lane.b32.xlu0 %v2231, 126
        %v2234 = vpop.permute.xlu0 %2233
        %v2236 = vadd.f32 %v2188, %v2234
        %v2237 = vmul.f32 %v970, %v1938
        %2239 = vrot.lane.b32.xlu0 %v2237, 126
        %v2240 = vpop.permute.xlu0 %2239
        %v2242 = vadd.f32 %v2194, %v2240
        %v2243 = vld [vmem:[%s339 + $0x9] sm:$0xff]
        %v2244 = vmul.f32 %v978, %v2243
        %v2245 = vadd.f32 %v2200, %v2244
        %v2246 = vmul.f32 %v981, %v2243
        %v2247 = vadd.f32 %v2206, %v2246
        %v2248 = vmul.f32 %v984, %v2243
        %v2249 = vadd.f32 %v2212, %v2248
        %v2250 = vmul.f32 %v987, %v2243
        %v2251 = vadd.f32 %v2218, %v2250
        %v2252 = vmul.f32 %v990, %v2243
        %v2253 = vadd.f32 %v2224, %v2252
        %v2254 = vmul.f32 %v993, %v2243
        %v2255 = vadd.f32 %v2230, %v2254
        %v2256 = vmul.f32 %v996, %v2243
        %v2257 = vadd.f32 %v2236, %v2256
        %v2258 = vmul.f32 %v999, %v2243
        %v2259 = vadd.f32 %v2242, %v2258
        %v2260 = vld [vmem:[%s589 + $0x9] sm:$0xff]
        %v2261 = vmul.f32 %v1003, %v2260
        %v2262 = vadd.f32 %v2245, %v2261
        %v2263 = vmul.f32 %v1006, %v2260
        %v2264 = vadd.f32 %v2247, %v2263
        %v2265 = vmul.f32 %v1009, %v2260
        %v2266 = vadd.f32 %v2249, %v2265
        %v2267 = vmul.f32 %v1012, %v2260
        %v2268 = vadd.f32 %v2251, %v2267
        %v2269 = vmul.f32 %v1015, %v2260
        %v2270 = vadd.f32 %v2253, %v2269
        %v2271 = vmul.f32 %v1018, %v2260
        %v2272 = vadd.f32 %v2255, %v2271
        %v2273 = vmul.f32 %v1021, %v2260
        %v2274 = vadd.f32 %v2257, %v2273
        %v2275 = vmul.f32 %v1024, %v2260
        %v2276 = vadd.f32 %v2259, %v2275
        %v2277 = vld [vmem:[%s615 + $0x9] sm:$0xff]
        %v2278 = vmul.f32 %v1028, %v2277
        %v2279 = vadd.f32 %v2262, %v2278
        %v2280 = vmul.f32 %v1031, %v2277
        %v2281 = vadd.f32 %v2264, %v2280
        %v2282 = vmul.f32 %v1034, %v2277
        %v2283 = vadd.f32 %v2266, %v2282
        %v2284 = vmul.f32 %v1037, %v2277
        %v2285 = vadd.f32 %v2268, %v2284
        %v2286 = vmul.f32 %v1040, %v2277
        %v2287 = vadd.f32 %v2270, %v2286
        %v2288 = vmul.f32 %v1043, %v2277
        %v2289 = vadd.f32 %v2272, %v2288
        %v2290 = vmul.f32 %v1046, %v2277
        %v2291 = vadd.f32 %v2274, %v2290
        %v2292 = vmul.f32 %v1049, %v2277
        %v2293 = vadd.f32 %v2276, %v2292
        %v2294 = vmul.f32 %v1052, %v2243
        %2296 = vrot.lane.b32.xlu0 %v2294, 127
        %v2297 = vpop.permute.xlu0 %2296
        %v2299 = vadd.f32 %v2279, %v2297
        %v2300 = vmul.f32 %v1059, %v2243
        %2302 = vrot.lane.b32.xlu0 %v2300, 127
        %v2303 = vpop.permute.xlu0 %2302
        %v2305 = vadd.f32 %v2281, %v2303
        %v2306 = vmul.f32 %v1066, %v2243
        %2308 = vrot.lane.b32.xlu0 %v2306, 127
        %v2309 = vpop.permute.xlu0 %2308
        %v2311 = vadd.f32 %v2283, %v2309
        %v2312 = vmul.f32 %v1073, %v2243
        %2314 = vrot.lane.b32.xlu0 %v2312, 127
        %v2315 = vpop.permute.xlu0 %2314
        %v2317 = vadd.f32 %v2285, %v2315
        %v2318 = vmul.f32 %v1080, %v2243
        %2320 = vrot.lane.b32.xlu0 %v2318, 127
        %v2321 = vpop.permute.xlu0 %2320
        %v2323 = vadd.f32 %v2287, %v2321
        %v2324 = vmul.f32 %v1087, %v2243
        %2326 = vrot.lane.b32.xlu0 %v2324, 127
        %v2327 = vpop.permute.xlu0 %2326
        %v2329 = vadd.f32 %v2289, %v2327
        %v2330 = vmul.f32 %v1094, %v2243
        %2332 = vrot.lane.b32.xlu0 %v2330, 127
        %v2333 = vpop.permute.xlu0 %2332
        %v2335 = vadd.f32 %v2291, %v2333
        %v2336 = vmul.f32 %v1101, %v2243
        %2338 = vrot.lane.b32.xlu0 %v2336, 127
        %v2339 = vpop.permute.xlu0 %2338
        %v2341 = vadd.f32 %v2293, %v2339
        %v2342 = vmul.f32 %v1108, %v2260
        %2344 = vrot.lane.b32.xlu0 %v2342, 127
        %v2345 = vpop.permute.xlu0 %2344
        %v2347 = vadd.f32 %v2299, %v2345
        %v2348 = vmul.f32 %v1115, %v2260
        %2350 = vrot.lane.b32.xlu0 %v2348, 127
        %v2351 = vpop.permute.xlu0 %2350
        %v2353 = vadd.f32 %v2305, %v2351
        %v2354 = vmul.f32 %v1122, %v2260
        %2356 = vrot.lane.b32.xlu0 %v2354, 127
        %v2357 = vpop.permute.xlu0 %2356
        %v2359 = vadd.f32 %v2311, %v2357
        %v2360 = vmul.f32 %v1129, %v2260
        %2362 = vrot.lane.b32.xlu0 %v2360, 127
        %v2363 = vpop.permute.xlu0 %2362
        %v2365 = vadd.f32 %v2317, %v2363
        %v2366 = vmul.f32 %v1136, %v2260
        %2368 = vrot.lane.b32.xlu0 %v2366, 127
        %v2369 = vpop.permute.xlu0 %2368
        %v2371 = vadd.f32 %v2323, %v2369
        %v2372 = vmul.f32 %v1143, %v2260
        %2374 = vrot.lane.b32.xlu0 %v2372, 127
        %v2375 = vpop.permute.xlu0 %2374
        %v2377 = vadd.f32 %v2329, %v2375
        %v2378 = vmul.f32 %v1150, %v2260
        %2380 = vrot.lane.b32.xlu0 %v2378, 127
        %v2381 = vpop.permute.xlu0 %2380
        %v2383 = vadd.f32 %v2335, %v2381
        %v2384 = vmul.f32 %v1157, %v2260
        %2386 = vrot.lane.b32.xlu0 %v2384, 127
        %v2387 = vpop.permute.xlu0 %2386
        %v2389 = vadd.f32 %v2341, %v2387
        %v2390 = vmul.f32 %v1164, %v2277
        %2392 = vrot.lane.b32.xlu0 %v2390, 127
        %v2393 = vpop.permute.xlu0 %2392
        %v2395 = vadd.f32 %v2347, %v2393
        %v2396 = vmul.f32 %v1171, %v2277
        %2398 = vrot.lane.b32.xlu0 %v2396, 127
        %v2399 = vpop.permute.xlu0 %2398
        %v2401 = vadd.f32 %v2353, %v2399
        %v2402 = vmul.f32 %v1178, %v2277
        %2404 = vrot.lane.b32.xlu0 %v2402, 127
        %v2405 = vpop.permute.xlu0 %2404
        %v2407 = vadd.f32 %v2359, %v2405
        %v2408 = vmul.f32 %v1185, %v2277
        %2410 = vrot.lane.b32.xlu0 %v2408, 127
        %v2411 = vpop.permute.xlu0 %2410
        %v2413 = vadd.f32 %v2365, %v2411
        %v2414 = vmul.f32 %v1192, %v2277
        %2416 = vrot.lane.b32.xlu0 %v2414, 127
        %v2417 = vpop.permute.xlu0 %2416
        %v2419 = vadd.f32 %v2371, %v2417
        %v2420 = vmul.f32 %v1199, %v2277
        %2422 = vrot.lane.b32.xlu0 %v2420, 127
        %v2423 = vpop.permute.xlu0 %2422
        %v2425 = vadd.f32 %v2377, %v2423
        %v2426 = vmul.f32 %v1206, %v2277
        %2428 = vrot.lane.b32.xlu0 %v2426, 127
        %v2429 = vpop.permute.xlu0 %2428
        %v2431 = vadd.f32 %v2383, %v2429
        %v2432 = vmul.f32 %v1213, %v2277
        %2434 = vrot.lane.b32.xlu0 %v2432, 127
        %v2435 = vpop.permute.xlu0 %2434
        %v2437 = vadd.f32 %v2389, %v2435
        %v2438 = vmul.f32 %v1220, %v2243
        %2440 = vrot.lane.b32.xlu0 %v2438, 126
        %v2441 = vpop.permute.xlu0 %2440
        %v2443 = vadd.f32 %v2395, %v2441
        %v2444 = vmul.f32 %v1227, %v2243
        %2446 = vrot.lane.b32.xlu0 %v2444, 126
        %v2447 = vpop.permute.xlu0 %2446
        %v2449 = vadd.f32 %v2401, %v2447
        %v2450 = vmul.f32 %v1234, %v2243
        %2452 = vrot.lane.b32.xlu0 %v2450, 126
        %v2453 = vpop.permute.xlu0 %2452
        %v2455 = vadd.f32 %v2407, %v2453
        %v2456 = vmul.f32 %v1241, %v2243
        %2458 = vrot.lane.b32.xlu0 %v2456, 126
        %v2459 = vpop.permute.xlu0 %2458
        %v2461 = vadd.f32 %v2413, %v2459
        %v2462 = vmul.f32 %v1248, %v2243
        %2464 = vrot.lane.b32.xlu0 %v2462, 126
        %v2465 = vpop.permute.xlu0 %2464
        %v2467 = vadd.f32 %v2419, %v2465
        %v2468 = vmul.f32 %v1255, %v2243
        %2470 = vrot.lane.b32.xlu0 %v2468, 126
        %v2471 = vpop.permute.xlu0 %2470
        %v2473 = vadd.f32 %v2425, %v2471
        %v2474 = vmul.f32 %v1262, %v2243
        %2476 = vrot.lane.b32.xlu0 %v2474, 126
        %v2477 = vpop.permute.xlu0 %2476
        %v2479 = vadd.f32 %v2431, %v2477
        %v2480 = vmul.f32 %v1269, %v2243
        %2482 = vrot.lane.b32.xlu0 %v2480, 126
        %v2483 = vpop.permute.xlu0 %2482
        %v2485 = vadd.f32 %v2437, %v2483
        %v2486 = vmul.f32 %v1276, %v2260
        %2488 = vrot.lane.b32.xlu0 %v2486, 126
        %v2489 = vpop.permute.xlu0 %2488
        %v2491 = vadd.f32 %v2443, %v2489
        %v2492 = vmul.f32 %v1283, %v2260
        %2494 = vrot.lane.b32.xlu0 %v2492, 126
        %v2495 = vpop.permute.xlu0 %2494
        %v2497 = vadd.f32 %v2449, %v2495
        %v2498 = vmul.f32 %v1290, %v2260
        %2500 = vrot.lane.b32.xlu0 %v2498, 126
        %v2501 = vpop.permute.xlu0 %2500
        %v2503 = vadd.f32 %v2455, %v2501
        %v2504 = vmul.f32 %v1297, %v2260
        %2506 = vrot.lane.b32.xlu0 %v2504, 126
        %v2507 = vpop.permute.xlu0 %2506
        %v2509 = vadd.f32 %v2461, %v2507
        %v2510 = vmul.f32 %v1304, %v2260
        %2512 = vrot.lane.b32.xlu0 %v2510, 126
        %v2513 = vpop.permute.xlu0 %2512
        %v2515 = vadd.f32 %v2467, %v2513
        %v2516 = vmul.f32 %v1311, %v2260
        %2518 = vrot.lane.b32.xlu0 %v2516, 126
        %v2519 = vpop.permute.xlu0 %2518
        %v2521 = vadd.f32 %v2473, %v2519
        %v2522 = vmul.f32 %v1318, %v2260
        %2524 = vrot.lane.b32.xlu0 %v2522, 126
        %v2525 = vpop.permute.xlu0 %2524
        %v2527 = vadd.f32 %v2479, %v2525
        %v2528 = vmul.f32 %v1325, %v2260
        %2530 = vrot.lane.b32.xlu0 %v2528, 126
        %v2531 = vpop.permute.xlu0 %2530
        %v2533 = vadd.f32 %v2485, %v2531
        %v2534 = vmul.f32 %v1332, %v2277
        %2536 = vrot.lane.b32.xlu0 %v2534, 126
        %v2537 = vpop.permute.xlu0 %2536
        %v2539 = vadd.f32 %v2491, %v2537
        %v2540 = vmul.f32 %v1339, %v2277
        %2542 = vrot.lane.b32.xlu0 %v2540, 126
        %v2543 = vpop.permute.xlu0 %2542
        %v2545 = vadd.f32 %v2497, %v2543
        %v2546 = vmul.f32 %v1346, %v2277
        %2548 = vrot.lane.b32.xlu0 %v2546, 126
        %v2549 = vpop.permute.xlu0 %2548
        %v2551 = vadd.f32 %v2503, %v2549
        %v2552 = vmul.f32 %v1353, %v2277
        %2554 = vrot.lane.b32.xlu0 %v2552, 126
        %v2555 = vpop.permute.xlu0 %2554
        %v2557 = vadd.f32 %v2509, %v2555
        %v2558 = vmul.f32 %v1360, %v2277
        %2560 = vrot.lane.b32.xlu0 %v2558, 126
        %v2561 = vpop.permute.xlu0 %2560
        %v2563 = vadd.f32 %v2515, %v2561
        %v2564 = vmul.f32 %v1367, %v2277
        %2566 = vrot.lane.b32.xlu0 %v2564, 126
        %v2567 = vpop.permute.xlu0 %2566
        %v2569 = vadd.f32 %v2521, %v2567
        %v2570 = vmul.f32 %v1374, %v2277
        %2572 = vrot.lane.b32.xlu0 %v2570, 126
        %v2573 = vpop.permute.xlu0 %2572
        %v2575 = vadd.f32 %v2527, %v2573
        %v2576 = vmul.f32 %v1381, %v2277
        %2578 = vrot.lane.b32.xlu0 %v2576, 126
        %v2579 = vpop.permute.xlu0 %2578
        %v2581 = vadd.f32 %v2533, %v2579
        %v2582 = vld [vmem:[%s339 + $0xa] sm:$0xff]
        %v2583 = vmul.f32 %v1389, %v2582
        %v2584 = vadd.f32 %v2539, %v2583
        %v2585 = vmul.f32 %v1392, %v2582
        %v2586 = vadd.f32 %v2545, %v2585
        %v2587 = vmul.f32 %v1395, %v2582
        %v2588 = vadd.f32 %v2551, %v2587
        %v2589 = vmul.f32 %v1398, %v2582
        %v2590 = vadd.f32 %v2557, %v2589
        %v2591 = vmul.f32 %v1401, %v2582
        %v2592 = vadd.f32 %v2563, %v2591
        %v2593 = vmul.f32 %v1404, %v2582
        %v2594 = vadd.f32 %v2569, %v2593
        %v2595 = vmul.f32 %v1407, %v2582
        %v2596 = vadd.f32 %v2575, %v2595
        %v2597 = vmul.f32 %v1410, %v2582
        %v2598 = vadd.f32 %v2581, %v2597
        %v2599 = vld [vmem:[%s589 + $0xa] sm:$0xff]
        %v2600 = vmul.f32 %v1414, %v2599
        %v2601 = vadd.f32 %v2584, %v2600
        %v2602 = vmul.f32 %v1417, %v2599
        %v2603 = vadd.f32 %v2586, %v2602
        %v2604 = vmul.f32 %v1420, %v2599
        %v2605 = vadd.f32 %v2588, %v2604
        %v2606 = vmul.f32 %v1423, %v2599
        %v2607 = vadd.f32 %v2590, %v2606
        %v2608 = vmul.f32 %v1426, %v2599
        %v2609 = vadd.f32 %v2592, %v2608
        %v2610 = vmul.f32 %v1429, %v2599
        %v2611 = vadd.f32 %v2594, %v2610
        %v2612 = vmul.f32 %v1432, %v2599
        %v2613 = vadd.f32 %v2596, %v2612
        %v2614 = vmul.f32 %v1435, %v2599
        %v2615 = vadd.f32 %v2598, %v2614
        %v2616 = vld [vmem:[%s615 + $0xa] sm:$0xff]
        %v2617 = vmul.f32 %v1439, %v2616
        %v2618 = vadd.f32 %v2601, %v2617
        %v2619 = vmul.f32 %v1442, %v2616
        %v2620 = vadd.f32 %v2603, %v2619
        %v2621 = vmul.f32 %v1445, %v2616
        %v2622 = vadd.f32 %v2605, %v2621
        %v2623 = vmul.f32 %v1448, %v2616
        %v2624 = vadd.f32 %v2607, %v2623
        %v2625 = vmul.f32 %v1451, %v2616
        %v2626 = vadd.f32 %v2609, %v2625
        %v2627 = vmul.f32 %v1454, %v2616
        %v2628 = vadd.f32 %v2611, %v2627
        %v2629 = vmul.f32 %v1457, %v2616
        %v2630 = vadd.f32 %v2613, %v2629
        %v2631 = vmul.f32 %v1460, %v2616
        %v2632 = vadd.f32 %v2615, %v2631
        %v2633 = vmul.f32 %v1463, %v2582
        %2635 = vrot.lane.b32.xlu0 %v2633, 127
        %v2636 = vpop.permute.xlu0 %2635
        %v2638 = vadd.f32 %v2618, %v2636
        %v2639 = vmul.f32 %v1470, %v2582
        %2641 = vrot.lane.b32.xlu0 %v2639, 127
        %v2642 = vpop.permute.xlu0 %2641
        %v2644 = vadd.f32 %v2620, %v2642
        %v2645 = vmul.f32 %v1477, %v2582
        %2647 = vrot.lane.b32.xlu0 %v2645, 127
        %v2648 = vpop.permute.xlu0 %2647
        %v2650 = vadd.f32 %v2622, %v2648
        %v2651 = vmul.f32 %v1484, %v2582
        %2653 = vrot.lane.b32.xlu0 %v2651, 127
        %v2654 = vpop.permute.xlu0 %2653
        %v2656 = vadd.f32 %v2624, %v2654
        %v2657 = vmul.f32 %v1491, %v2582
        %2659 = vrot.lane.b32.xlu0 %v2657, 127
        %v2660 = vpop.permute.xlu0 %2659
        %v2662 = vadd.f32 %v2626, %v2660
        %v2663 = vmul.f32 %v1498, %v2582
        %2665 = vrot.lane.b32.xlu0 %v2663, 127
        %v2666 = vpop.permute.xlu0 %2665
        %v2668 = vadd.f32 %v2628, %v2666
        %v2669 = vmul.f32 %v1505, %v2582
        %2671 = vrot.lane.b32.xlu0 %v2669, 127
        %v2672 = vpop.permute.xlu0 %2671
        %v2674 = vadd.f32 %v2630, %v2672
        %v2675 = vmul.f32 %v1512, %v2582
        %2677 = vrot.lane.b32.xlu0 %v2675, 127
        %v2678 = vpop.permute.xlu0 %2677
        %v2680 = vadd.f32 %v2632, %v2678
        %v2681 = vmul.f32 %v1519, %v2599
        %2683 = vrot.lane.b32.xlu0 %v2681, 127
        %v2684 = vpop.permute.xlu0 %2683
        %v2686 = vadd.f32 %v2638, %v2684
        %v2687 = vmul.f32 %v1526, %v2599
        %2689 = vrot.lane.b32.xlu0 %v2687, 127
        %v2690 = vpop.permute.xlu0 %2689
        %v2692 = vadd.f32 %v2644, %v2690
        %v2693 = vmul.f32 %v1533, %v2599
        %2695 = vrot.lane.b32.xlu0 %v2693, 127
        %v2696 = vpop.permute.xlu0 %2695
        %v2698 = vadd.f32 %v2650, %v2696
        %v2699 = vmul.f32 %v1540, %v2599
        %2701 = vrot.lane.b32.xlu0 %v2699, 127
        %v2702 = vpop.permute.xlu0 %2701
        %v2704 = vadd.f32 %v2656, %v2702
        %v2705 = vmul.f32 %v1547, %v2599
        %2707 = vrot.lane.b32.xlu0 %v2705, 127
        %v2708 = vpop.permute.xlu0 %2707
        %v2710 = vadd.f32 %v2662, %v2708
        %v2711 = vmul.f32 %v1554, %v2599
        %2713 = vrot.lane.b32.xlu0 %v2711, 127
        %v2714 = vpop.permute.xlu0 %2713
        %v2716 = vadd.f32 %v2668, %v2714
        %v2717 = vmul.f32 %v1561, %v2599
        %2719 = vrot.lane.b32.xlu0 %v2717, 127
        %v2720 = vpop.permute.xlu0 %2719
        %v2722 = vadd.f32 %v2674, %v2720
        %v2723 = vmul.f32 %v1568, %v2599
        %2725 = vrot.lane.b32.xlu0 %v2723, 127
        %v2726 = vpop.permute.xlu0 %2725
        %v2728 = vadd.f32 %v2680, %v2726
        %v2729 = vmul.f32 %v1575, %v2616
        %2731 = vrot.lane.b32.xlu0 %v2729, 127
        %v2732 = vpop.permute.xlu0 %2731
        %v2734 = vadd.f32 %v2686, %v2732
        %v2735 = vmul.f32 %v1582, %v2616
        %2737 = vrot.lane.b32.xlu0 %v2735, 127
        %v2738 = vpop.permute.xlu0 %2737
        %v2740 = vadd.f32 %v2692, %v2738
        %v2741 = vmul.f32 %v1589, %v2616
        %2743 = vrot.lane.b32.xlu0 %v2741, 127
        %v2744 = vpop.permute.xlu0 %2743
        %v2746 = vadd.f32 %v2698, %v2744
        %v2747 = vmul.f32 %v1596, %v2616
        %2749 = vrot.lane.b32.xlu0 %v2747, 127
        %v2750 = vpop.permute.xlu0 %2749
        %v2752 = vadd.f32 %v2704, %v2750
        %v2753 = vmul.f32 %v1603, %v2616
        %2755 = vrot.lane.b32.xlu0 %v2753, 127
        %v2756 = vpop.permute.xlu0 %2755
        %v2758 = vadd.f32 %v2710, %v2756
        %v2759 = vmul.f32 %v1610, %v2616
        %2761 = vrot.lane.b32.xlu0 %v2759, 127
        %v2762 = vpop.permute.xlu0 %2761
        %v2764 = vadd.f32 %v2716, %v2762
        %v2765 = vmul.f32 %v1617, %v2616
        %2767 = vrot.lane.b32.xlu0 %v2765, 127
        %v2768 = vpop.permute.xlu0 %2767
        %v2770 = vadd.f32 %v2722, %v2768
        %v2771 = vmul.f32 %v1624, %v2616
        %2773 = vrot.lane.b32.xlu0 %v2771, 127
        %v2774 = vpop.permute.xlu0 %2773
        %v2776 = vadd.f32 %v2728, %v2774
        %v2777 = vmul.f32 %v1631, %v2582
        %2779 = vrot.lane.b32.xlu0 %v2777, 126
        %v2780 = vpop.permute.xlu0 %2779
        %v2782 = vadd.f32 %v2734, %v2780
        %v2783 = vmul.f32 %v1638, %v2582
        %2785 = vrot.lane.b32.xlu0 %v2783, 126
        %v2786 = vpop.permute.xlu0 %2785
        %v2788 = vadd.f32 %v2740, %v2786
        %v2789 = vmul.f32 %v1645, %v2582
        %2791 = vrot.lane.b32.xlu0 %v2789, 126
        %v2792 = vpop.permute.xlu0 %2791
        %v2794 = vadd.f32 %v2746, %v2792
        %v2795 = vmul.f32 %v1652, %v2582
        %2797 = vrot.lane.b32.xlu0 %v2795, 126
        %v2798 = vpop.permute.xlu0 %2797
        %v2800 = vadd.f32 %v2752, %v2798
        %v2801 = vmul.f32 %v1659, %v2582
        %2803 = vrot.lane.b32.xlu0 %v2801, 126
        %v2804 = vpop.permute.xlu0 %2803
        %v2806 = vadd.f32 %v2758, %v2804
        %v2807 = vmul.f32 %v1666, %v2582
        %2809 = vrot.lane.b32.xlu0 %v2807, 126
        %v2810 = vpop.permute.xlu0 %2809
        %v2812 = vadd.f32 %v2764, %v2810
        %v2813 = vmul.f32 %v1673, %v2582
        %2815 = vrot.lane.b32.xlu0 %v2813, 126
        %v2816 = vpop.permute.xlu0 %2815
        %v2818 = vadd.f32 %v2770, %v2816
        %v2819 = vmul.f32 %v1680, %v2582
        %2821 = vrot.lane.b32.xlu0 %v2819, 126
        %v2822 = vpop.permute.xlu0 %2821
        %v2824 = vadd.f32 %v2776, %v2822
        %v2825 = vmul.f32 %v1687, %v2599
        %2827 = vrot.lane.b32.xlu0 %v2825, 126
        %v2828 = vpop.permute.xlu0 %2827
        %v2830 = vadd.f32 %v2782, %v2828
        %v2831 = vmul.f32 %v1694, %v2599
        %2833 = vrot.lane.b32.xlu0 %v2831, 126
        %v2834 = vpop.permute.xlu0 %2833
        %v2836 = vadd.f32 %v2788, %v2834
        %v2837 = vmul.f32 %v1701, %v2599
        %2839 = vrot.lane.b32.xlu0 %v2837, 126
        %v2840 = vpop.permute.xlu0 %2839
        %v2842 = vadd.f32 %v2794, %v2840
        %v2843 = vmul.f32 %v1708, %v2599
        %2845 = vrot.lane.b32.xlu0 %v2843, 126
        %v2846 = vpop.permute.xlu0 %2845
        %v2848 = vadd.f32 %v2800, %v2846
        %v2849 = vmul.f32 %v1715, %v2599
        %2851 = vrot.lane.b32.xlu0 %v2849, 126
        %v2852 = vpop.permute.xlu0 %2851
        %v2854 = vadd.f32 %v2806, %v2852
        %v2855 = vmul.f32 %v1722, %v2599
        %2857 = vrot.lane.b32.xlu0 %v2855, 126
        %v2858 = vpop.permute.xlu0 %2857
        %v2860 = vadd.f32 %v2812, %v2858
        %v2861 = vmul.f32 %v1729, %v2599
        %2863 = vrot.lane.b32.xlu0 %v2861, 126
        %v2864 = vpop.permute.xlu0 %2863
        %v2866 = vadd.f32 %v2818, %v2864
        %v2867 = vmul.f32 %v1736, %v2599
        %2869 = vrot.lane.b32.xlu0 %v2867, 126
        %v2870 = vpop.permute.xlu0 %2869
        %v2872 = vadd.f32 %v2824, %v2870
        %v2873 = vmul.f32 %v1743, %v2616
        %2875 = vrot.lane.b32.xlu0 %v2873, 126
        %v2876 = vpop.permute.xlu0 %2875
        %v2878 = vadd.f32 %v2830, %v2876
        %v2879 = vmul.f32 %v1750, %v2616
        %2881 = vrot.lane.b32.xlu0 %v2879, 126
        %v2882 = vpop.permute.xlu0 %2881
        %v2884 = vadd.f32 %v2836, %v2882
        %v2885 = vmul.f32 %v1757, %v2616
        %2887 = vrot.lane.b32.xlu0 %v2885, 126
        %v2888 = vpop.permute.xlu0 %2887
        %v2890 = vadd.f32 %v2842, %v2888
        %v2891 = vmul.f32 %v1764, %v2616
        %2893 = vrot.lane.b32.xlu0 %v2891, 126
        %v2894 = vpop.permute.xlu0 %2893
        %v2896 = vadd.f32 %v2848, %v2894
        %v2897 = vmul.f32 %v1771, %v2616
        %2899 = vrot.lane.b32.xlu0 %v2897, 126
        %v2900 = vpop.permute.xlu0 %2899
        %v2902 = vadd.f32 %v2854, %v2900
        %v2903 = vmul.f32 %v1778, %v2616
        %2905 = vrot.lane.b32.xlu0 %v2903, 126
        %v2906 = vpop.permute.xlu0 %2905
        %v2908 = vadd.f32 %v2860, %v2906
        %v2909 = vmul.f32 %v1785, %v2616
        %2911 = vrot.lane.b32.xlu0 %v2909, 126
        %v2912 = vpop.permute.xlu0 %2911
        %v2914 = vadd.f32 %v2866, %v2912
        %v2915 = vmul.f32 %v1792, %v2616
        %2917 = vrot.lane.b32.xlu0 %v2915, 126
        %v2918 = vpop.permute.xlu0 %2917
        %v2920 = vadd.f32 %v2872, %v2918
        %v2921 = vadd.f32 %v2878, %v1799
        %v2922 = vmax.f32 %v2921, 0.0
        %v2923 = vsel %vm1802, %v2922, 0.0
        %2924 = vadd.xlane.f32.xlu0 %v2923
        %v2925 = vpop.xlane.xlu0 %2924
        %v2926 = vrot.slane %v2925, 4
        %v2927 = vadd.f32 %v2925, %v2926
        %v2928 = vrot.slane %v2927, 2
        %v2929 = vadd.f32 %v2927, %v2928
        %v2930 = vrot.slane %v2929, 1
        %v2931 = vadd.f32 %v2929, %v2930
        %v2932 = vadd.f32 %v1812, %v2931
        %v2933 = vadd.f32 %v2884, %v1813
        %v2934 = vmax.f32 %v2933, 0.0
        %v2935 = vsel %vm1802, %v2934, 0.0
        %2936 = vadd.xlane.f32.xlu0 %v2935
        %v2937 = vpop.xlane.xlu0 %2936
        %v2938 = vrot.slane %v2937, 4
        %v2939 = vadd.f32 %v2937, %v2938
        %v2940 = vrot.slane %v2939, 2
        %v2941 = vadd.f32 %v2939, %v2940
        %v2942 = vrot.slane %v2941, 1
        %v2943 = vadd.f32 %v2941, %v2942
        %v2944 = vadd.f32 %v1825, %v2943
        %v2945 = vadd.f32 %v2890, %v1826
        %v2946 = vmax.f32 %v2945, 0.0
        %v2947 = vsel %vm1802, %v2946, 0.0
        %2948 = vadd.xlane.f32.xlu0 %v2947
        %v2949 = vpop.xlane.xlu0 %2948
        %v2950 = vrot.slane %v2949, 4
        %v2951 = vadd.f32 %v2949, %v2950
        %v2952 = vrot.slane %v2951, 2
        %v2953 = vadd.f32 %v2951, %v2952
        %v2954 = vrot.slane %v2953, 1
        %v2955 = vadd.f32 %v2953, %v2954
        %v2956 = vadd.f32 %v1838, %v2955
        %v2957 = vadd.f32 %v2896, %v1839
        %v2958 = vmax.f32 %v2957, 0.0
        %v2959 = vsel %vm1802, %v2958, 0.0
        %2960 = vadd.xlane.f32.xlu0 %v2959
        %v2961 = vpop.xlane.xlu0 %2960
        %v2962 = vrot.slane %v2961, 4
        %v2963 = vadd.f32 %v2961, %v2962
        %v2964 = vrot.slane %v2963, 2
        %v2965 = vadd.f32 %v2963, %v2964
        %v2966 = vrot.slane %v2965, 1
        %v2967 = vadd.f32 %v2965, %v2966
        %v2968 = vadd.f32 %v1851, %v2967
        %v2969 = vadd.f32 %v2902, %v1852
        %v2970 = vmax.f32 %v2969, 0.0
        %v2971 = vsel %vm1802, %v2970, 0.0
        %2972 = vadd.xlane.f32.xlu0 %v2971
        %v2973 = vpop.xlane.xlu0 %2972
        %v2974 = vrot.slane %v2973, 4
        %v2975 = vadd.f32 %v2973, %v2974
        %v2976 = vrot.slane %v2975, 2
        %v2977 = vadd.f32 %v2975, %v2976
        %v2978 = vrot.slane %v2977, 1
        %v2979 = vadd.f32 %v2977, %v2978
        %v2980 = vadd.f32 %v1864, %v2979
        %v2981 = vadd.f32 %v2908, %v1865
        %v2982 = vmax.f32 %v2981, 0.0
        %v2983 = vsel %vm1802, %v2982, 0.0
        %2984 = vadd.xlane.f32.xlu0 %v2983
        %v2985 = vpop.xlane.xlu0 %2984
        %v2986 = vrot.slane %v2985, 4
        %v2987 = vadd.f32 %v2985, %v2986
        %v2988 = vrot.slane %v2987, 2
        %v2989 = vadd.f32 %v2987, %v2988
        %v2990 = vrot.slane %v2989, 1
        %v2991 = vadd.f32 %v2989, %v2990
        %v2992 = vadd.f32 %v1877, %v2991
        %v2993 = vadd.f32 %v2914, %v1878
        %v2994 = vmax.f32 %v2993, 0.0
        %v2995 = vsel %vm1802, %v2994, 0.0
        %2996 = vadd.xlane.f32.xlu0 %v2995
        %v2997 = vpop.xlane.xlu0 %2996
        %v2998 = vrot.slane %v2997, 4
        %v2999 = vadd.f32 %v2997, %v2998
        %v3000 = vrot.slane %v2999, 2
        %v3001 = vadd.f32 %v2999, %v3000
        %v3002 = vrot.slane %v3001, 1
        %v3003 = vadd.f32 %v3001, %v3002
        %v3004 = vadd.f32 %v1890, %v3003
        %v3005 = vadd.f32 %v2920, %v1891
        %v3006 = vmax.f32 %v3005, 0.0
        %v3007 = vsel %vm1802, %v3006, 0.0
        %3008 = vadd.xlane.f32.xlu0 %v3007
        %v3009 = vpop.xlane.xlu0 %3008
        %v3010 = vrot.slane %v3009, 4
        %v3011 = vadd.f32 %v3009, %v3010
        %v3012 = vrot.slane %v3011, 2
        %v3013 = vadd.f32 %v3011, %v3012
        %v3014 = vrot.slane %v3013, 1
        %v3015 = vadd.f32 %v3013, %v3014
        %v3016 = vadd.f32 %v1903, %v3015
        %v3017 = vld [vmem:[%s4] sm:$0x1]
        %v3018 = vmul.f32 %v2932, 0.00390625
        %v3019 = vld [vmem:[%s3] sm:$0x1]
        %v3020 = vmul.f32 %v3018, %v3019
        %v3021 = vadd.f32 %v3017, %v3020
        %v3022 = vmul.f32 %v2944, 0.00390625
        %v3023 = vld [vmem:[%s3 + $0x1] sm:$0x1]
        %v3024 = vmul.f32 %v3022, %v3023
        %v3025 = vadd.f32 %v3021, %v3024
        %v3026 = vmul.f32 %v2956, 0.00390625
        %v3027 = vld [vmem:[%s3 + $0x2] sm:$0x1]
        %v3028 = vmul.f32 %v3026, %v3027
        %v3029 = vadd.f32 %v3025, %v3028
        %v3030 = vmul.f32 %v2968, 0.00390625
        %v3031 = vld [vmem:[%s3 + $0x3] sm:$0x1]
        %v3032 = vmul.f32 %v3030, %v3031
        %v3033 = vadd.f32 %v3029, %v3032
        %v3034 = vmul.f32 %v2980, 0.00390625
        %v3035 = vld [vmem:[%s3 + $0x4] sm:$0x1]
        %v3036 = vmul.f32 %v3034, %v3035
        %v3037 = vadd.f32 %v3033, %v3036
        %v3038 = vmul.f32 %v2992, 0.00390625
        %v3039 = vld [vmem:[%s3 + $0x5] sm:$0x1]
        %v3040 = vmul.f32 %v3038, %v3039
        %v3041 = vadd.f32 %v3037, %v3040
        %v3042 = vmul.f32 %v3004, 0.00390625
        %v3043 = vld [vmem:[%s3 + $0x6] sm:$0x1]
        %v3044 = vmul.f32 %v3042, %v3043
        %v3045 = vadd.f32 %v3041, %v3044
        %v3046 = vmul.f32 %v3016, 0.00390625
        %v3047 = vld [vmem:[%s3 + $0x7] sm:$0x1]
        %v3048 = vmul.f32 %v3046, %v3047
        %v3049 = vadd.f32 %v3045, %v3048
        %v3050 = vmax.f32 %v3049, 0.0
        %3051 = vst [vmem:[%s334] sm:$0x1] %v3050
        %vm3052 = vcmask 1040384
        %v3053 = vsel %vm3052, %v3050, 0.0
        %v3054 = vld [vmem:[%s5] sm:$0xff]
        %v3055 = vld [vmem:[%s5 + $0x8] sm:$0xff]
        %v3056 = vld [vmem:[%s5 + $0x10] sm:$0xff]
        %v3057 = vld [vmem:[%s5 + $0x18] sm:$0xff]
        %v3058 = vld [vmem:[%s5 + $0x20] sm:$0xff]
        %v3059 = vld [vmem:[%s5 + $0x28] sm:$0xff]
        %v3060 = vld [vmem:[%s5 + $0x30] sm:$0xff]
        %v3061 = vld [vmem:[%s5 + $0x38] sm:$0xff]
        %v3062 = vld [vmem:[%s5 + $0x40] sm:$0xff]
        %v3063 = vld [vmem:[%s5 + $0x48] sm:$0xff]
        %v3064 = vld [vmem:[%s5 + $0x50] sm:$0xff]
        %v3065 = vld [vmem:[%s5 + $0x58] sm:$0xff]
        %v3066 = vld [vmem:[%s5 + $0x60] sm:$0xff]
        %v3067 = vld [vmem:[%s5 + $0x68] sm:$0xff]
        %v3068 = vld [vmem:[%s5 + $0x70] sm:$0xff]
        %v3069 = vld [vmem:[%s5 + $0x78] sm:$0xff]
        %3070 = vmatprep.subr.mxu0 0.0
        %3071 = vmatpush1.msra.mxu0 %v3054
        %3072 = vmatprep.subr.mxu0 0.0
        %3073 = vmatpush1.msra.mxu0 %v3055
        %3074 = vmatprep.subr.mxu0 0.0
        %3075 = vmatpush1.msra.mxu0 %v3056
        %3076 = vmatprep.subr.mxu0 0.0
        %3077 = vmatpush1.msra.mxu0 %v3057
        %3078 = vmatprep.subr.mxu0 0.0
        %3079 = vmatpush1.msra.mxu0 %v3058
        %3080 = vmatprep.subr.mxu0 0.0
        %3081 = vmatpush1.msra.mxu0 %v3059
        %3082 = vmatprep.subr.mxu0 0.0
        %3083 = vmatpush1.msra.mxu0 %v3060
        %3084 = vmatprep.subr.mxu0 0.0
        %3085 = vmatpush1.msra.mxu0 %v3061
        %3086 = vmatprep.subr.mxu0 0.0
        %3087 = vmatpush1.msra.mxu0 %v3062
        %3088 = vmatprep.subr.mxu0 0.0
        %3089 = vmatpush1.msra.mxu0 %v3063
        %3090 = vmatprep.subr.mxu0 0.0
        %3091 = vmatpush1.msra.mxu0 %v3064
        %3092 = vmatprep.subr.mxu0 0.0
        %3093 = vmatpush1.msra.mxu0 %v3065
        %3094 = vmatprep.subr.mxu0 0.0
        %3095 = vmatpush1.msra.mxu0 %v3066
        %3096 = vmatprep.subr.mxu0 0.0
        %3097 = vmatpush1.msra.mxu0 %v3067
        %3098 = vmatprep.subr.mxu0 0.0
        %3099 = vmatpush1.msra.mxu0 %v3068
        %3100 = vmatprep.subr.mxu0 0.0
        %3101 = vmatpush1.msra.mxu0 %v3069
        %3102 = vmatprep.subr.mxu0 0.0
        %3103 = vmatpush1.msra.mxu0 0.0
        %3104 = vmatprep.subr.mxu0 0.0
        %3105 = vmatpush1.msra.mxu0 0.0
        %3106 = vmatprep.subr.mxu0 0.0
        %3107 = vmatpush1.msra.mxu0 0.0
        %3108 = vmatprep.subr.mxu0 0.0
        %3109 = vmatpush1.msra.mxu0 0.0
        %3110 = vmatprep.subr.mxu0 0.0
        %3111 = vmatpush1.msra.mxu0 0.0
        %3112 = vmatprep.subr.mxu0 0.0
        %3113 = vmatpush1.msra.mxu0 0.0
        %3114 = vmatprep.subr.mxu0 0.0
        %3115 = vmatpush1.msra.mxu0 0.0
        %3116 = vmatprep.subr.mxu0 0.0
        %3117 = vmatpush1.msra.mxu0 0.0
        %3118 = vmatprep.subr.mxu0 0.0
        %3119 = vmatpush1.msra.mxu0 0.0
        %3120 = vmatprep.subr.mxu0 0.0
        %3121 = vmatpush1.msra.mxu0 0.0
        %3122 = vmatprep.subr.mxu0 0.0
        %3123 = vmatpush1.msra.mxu0 0.0
        %3124 = vmatprep.subr.mxu0 0.0
        %3125 = vmatpush1.msra.mxu0 0.0
        %3126 = vmatprep.subr.mxu0 0.0
        %3127 = vmatpush1.msra.mxu0 0.0
        %3128 = vmatprep.subr.mxu0 0.0
        %3129 = vmatpush1.msra.mxu0 0.0
        %3130 = vmatprep.subr.mxu0 0.0
        %3131 = vmatpush1.msra.mxu0 0.0
        %3132 = vmatprep.subr.mxu0 0.0
        %3133 = vmatpush1.msra.mxu0 0.0
        %3134 = vmatprep.mubr.f32.mxu0 0.0
        %3135 = vmatmul.mubr.f32.gmra.mrb[0].mxu0 %v3053
        %v3136 = vpop.f32.mrb[0].mxu0
        %v3137 = vadd.f32 0.0, %v3136
        %v3138 = vpop.f32.mrb[0].mxu0
        %3139 = vdwg.mxu0
        %v3140 = vld [vmem:[%s6] sm:$0x1]
        %v3141 = vadd.f32 %v3137, %v3140
        %3142 = vst [vmem:[%s328] sm:$0x1] %v3141
        %s3143 = sand.u32 %s188, 1
        %s3144 = scalar_lea.sflag [#allocation3], %s3143
        %s3145 = sand.u32 %s188, 1
        %s3146 = scalar_lea.vmem [#allocation7], %s3145
        %s3147 = sand.u32 %s214, 1
        %s3148 = scalar_lea.sflag [#allocation9], %s3147
        %s3149 = sand.u32 %s214, 1
        %s3150 = scalar_lea.vmem [#allocation8], %s3149
        // Predicated region
        $region57: #{easy_model_forward.1} parent=47 // pred_check
          %p3151 = pneg %p198
        $region58: #{easy_model_forward.1} parent=47 // pred_check_branch
          %3153 = sbr.rel (%p3151) target = $region60
        $region59: #{easy_model_forward.1} parent=47 // pred_region
          %s3155 = ssub.s32 16, 16
          %3156 = vsyncadd %s3144, %s3155
          %s3157 = smul.addr %s28, 16
          %s3158 = scalar_lea.hbm %s7, %s3157
          %s3160 = sshll.u32 %s3146, 4
          %s3161 = int_to_ptr.vmem [resolvable:$true] %s3160
          %3163 = dma.vmem_to_hbm [thread:$0]  %s3161, 16, %s3158, %s3144
        $region60: #{easy_model_forward.1} parent=47 // pred_fallthru
          _
        // Predicated region
        $region61: #{easy_model_forward.1} parent=47 // pred_check
          %p3164 = pneg %p224
        $region62: #{easy_model_forward.1} parent=47 // pred_check_branch
          %3166 = sbr.rel (%p3164) target = $region64
        $region63: #{easy_model_forward.1} parent=47 // pred_region
          %s3168 = ssub.s32 16, 16
          %3169 = vsyncadd %s3148, %s3168
          %s3170 = smul.addr %s28, 16
          %s3171 = scalar_lea.hbm %s8, %s3170
          %s3173 = sshll.u32 %s3150, 4
          %s3174 = int_to_ptr.vmem [resolvable:$true] %s3173
          %3176 = dma.vmem_to_hbm [thread:$0]  %s3174, 16, %s3171, %s3148
        $region64: #{easy_model_forward.1} parent=47 // pred_fallthru
          _
      $region48: #{easy_model_forward.1} parent=5 // pred_fallthru
        _
      %p3177 = scmp.le.s32.totalorder 2, %s23
      // Predicated region
      $region65: #{easy_model_forward.1} parent=5 // pred_check
        %p3178 = pneg %p3177
      $region66: #{easy_model_forward.1} parent=5 // pred_check_branch
        %3180 = sbr.rel (%p3178) target = $region68
      $region67: #{easy_model_forward.1} parent=5 // pred_region
        %s3181 = ssub.s32 %s23, 2
        // Predicated region
        $region69: #{easy_model_forward.1} parent=67 // pred_check
          %p3182 = pneg %p204
        $region70: #{easy_model_forward.1} parent=67 // pred_check_branch
          %3184 = sbr.rel (%p3182) target = $region72
        $region71: #{easy_model_forward.1} parent=67 // pred_region
          %s3185 = sand.u32 %s189, 1
          %s3186 = scalar_lea.sflag [#allocation3], %s3185
          %s3187 = sand.u32 %s189, 1
          %s3188 = scalar_lea.vmem [#allocation7], %s3187
          %3189 = dma.done %s3186, 16
        $region72: #{easy_model_forward.1} parent=67 // pred_fallthru
          _
        // Predicated region
        $region73: #{easy_model_forward.1} parent=67 // pred_check
          %p3190 = pneg %p230
        $region74: #{easy_model_forward.1} parent=67 // pred_check_branch
          %3192 = sbr.rel (%p3190) target = $region76
        $region75: #{easy_model_forward.1} parent=67 // pred_region
          %s3193 = sand.u32 %s215, 1
          %s3194 = scalar_lea.sflag [#allocation9], %s3193
          %s3195 = sand.u32 %s215, 1
          %s3196 = scalar_lea.vmem [#allocation8], %s3195
          %3197 = dma.done %s3194, 16
        $region76: #{easy_model_forward.1} parent=67 // pred_fallthru
          _
      $region68: #{easy_model_forward.1} parent=5 // pred_fallthru
        _
    $region6: #{easy_model_forward.1} parent=1 // loop_footer
      %s27 = sadd.s32 1, %s23
    $region7: #{easy_model_forward.1} parent=1 // loop_footer_branch
      %22 = sbr.rel target = $region3
    $region8: #{easy_model_forward.1} parent=1 // loop_exit
      _
    %3198 = vsyncpa [#allocation3], 1
    %s3199 = scalar_lea.sflag [#allocation3], 1
    %3200 = vsyncpa %s3199, 1
    %3201 = vsyncpa [#allocation9], 1
    %s3202 = scalar_lea.sflag [#allocation9], 1
    %3203 = vsyncpa %s3202, 1
    %3204 = vsyncpa [#allocation4], 1
    %s3205 = scalar_lea.sflag [#allocation4], 1
    %3206 = vsyncpa %s3205, 1
    %3207 = vsyncpa [#allocation6], 1

</llo_original>
